<compile_context>
chip_gen: v7x
topology: tpu7x:2x2x1
jax: 0.10.0
libtpu: 0.0.40
codegen_flags: <defaults>
</compile_context>

<pallas_src>
import jax
import jax.numpy as jnp
from jax import lax
from jax.experimental import pallas as pl
from jax.experimental.pallas import tpu as pltpu


_VMEM_SPEC = pl.BlockSpec(memory_space=pltpu.MemorySpace.VMEM)


# ---------------------------------------------------------------------------
# Fused kernel: 3 LSTM layers + LayerNorm + Linear head.
# ---------------------------------------------------------------------------
def _make_fused_lstm_kernel(num_layers):
    def kernel(*args):
        # Argument layout:
        #   args[0]                       : x        (T, B, Din)      VMEM
        #   args[1 : 1+3L]                : per layer (w_ih, w_hh, b) VMEM
        #   args[1+3L : 5+3L]             : ln_gamma, ln_beta, fc_w_t, fc_b
        #   args[5+3L]                    : out      (B, Dout)        VMEM
        #   args[6+3L : ]                 : scratch  seq, xw, h, c
        x_ref = args[0]
        layer_refs = args[1:1 + 3 * num_layers]
        gamma_ref, beta_ref, fcwt_ref, fcb_ref = args[1 + 3 * num_layers:
                                                      5 + 3 * num_layers]
        out_ref = args[5 + 3 * num_layers]
        seq_sc, xw_sc, h_sc, c_sc = args[6 + 3 * num_layers:]

        T, B, _ = x_ref.shape
        H = h_sc.shape[1]
        Dout = out_ref.shape[1]

        def run_layer(layer):
            w_ih_ref = layer_refs[3 * layer + 0]
            w_hh_ref = layer_refs[3 * layer + 1]
            b_ref = layer_refs[3 * layer + 2]
            last = (layer == num_layers - 1)

            # ---- Hoisted input projection (no recurrent dependency): one
            # (T*B, Din) x (Din, 4H) MXU matmul, bias folded in once.
            if layer == 0:
                din = x_ref.shape[2]
                x_flat = x_ref[...].reshape(T * B, din)
            else:
                x_flat = seq_sc[...].reshape(T * B, H)
            xw = jnp.dot(x_flat, w_ih_ref[...],
                         preferred_element_type=jnp.float32) + b_ref[...]
            xw_sc[...] = xw.reshape(T, B, 4 * H)

            # ---- Recurrence: only h @ w_hh per step.
            h_sc[...] = jnp.zeros_like(h_sc)
            c_sc[...] = jnp.zeros_like(c_sc)

            def step(t, carry):
                gates = xw_sc[t] + jnp.dot(
                    h_sc[...], w_hh_ref[...],
                    preferred_element_type=jnp.float32)          # (B, 4H)
                # Lane-dense nonlinearities on the full (B, 4H) tile.
                sig = jax.nn.sigmoid(gates)
                tnh = jnp.tanh(gates)
                i_g = sig[:, 0 * H:1 * H]
                f_g = sig[:, 1 * H:2 * H]
                g_g = tnh[:, 2 * H:3 * H]
                o_g = sig[:, 3 * H:4 * H]

                c_new = f_g * c_sc[...] + i_g * g_g
                h_new = o_g * jnp.tanh(c_new)
                c_sc[...] = c_new
                h_sc[...] = h_new
                if not last:
                    # Inter-layer activations stay in VMEM scratch only.
                    seq_sc[t] = h_new
                return carry

            lax.fori_loop(0, T, step, 0, unroll=True)

        for layer in range(num_layers):
            run_layer(layer)

        # ---- Head: LayerNorm(h_T) + Linear.
        y = h_sc[...]                                             # (B, H)
        mean = jnp.mean(y, axis=-1, keepdims=True)
        var = jnp.mean((y - mean) ** 2, axis=-1, keepdims=True)
        yn = (y - mean) * lax.rsqrt(var + 1e-5)                   # LN eps=1e-5
        yn = yn * gamma_ref[...] + beta_ref[...]
        if Dout == 1:
            # VPU multiply + XLU lane-reduce; avoids a 1-lane MXU matmul.
            out = jnp.sum(yn * fcwt_ref[...], axis=-1, keepdims=True) \
                + fcb_ref[...]
        else:
            out = lax.dot_general(yn, fcwt_ref[...],
                                  (((1,), (1,)), ((), ())),
                                  preferred_element_type=jnp.float32) \
                + fcb_ref[...]
        out_ref[...] = out

    return kernel


# ---------------------------------------------------------------------------
# Wrapper
# ---------------------------------------------------------------------------
def lstm_model_forward(x_btd, params):
    """x_btd: (B, T, Din) batch_first, like the PyTorch module."""
    B, T, Din = x_btd.shape
    num_layers = len(params["lstm_layers"])
    H = params["lstm_layers"][0][1].shape[0]
    Dout = params["fc_w"].shape[1]

    # Time-major for the kernel; pad batch to a full sublane group (8).
    Bp = max(8, ((B + 7) // 8) * 8)
    x = jnp.transpose(x_btd, (1, 0, 2))                 # (T, B, Din)
    if Bp != B:
        x = jnp.pad(x, ((0, 0), (0, Bp - B), (0, 0)))

    flat_weights = []
    for (w_ih, w_hh, b) in params["lstm_layers"]:
        flat_weights += [w_ih, w_hh, b]

    fc_w_t = jnp.transpose(params["fc_w"])              # (Dout, H), free in XLA

    out = pl.pallas_call(
        _make_fused_lstm_kernel(num_layers),
        out_shape=jax.ShapeDtypeStruct((Bp, Dout), jnp.float32),
        in_specs=[_VMEM_SPEC] * (1 + 3 * num_layers + 4),
        out_specs=_VMEM_SPEC,
        scratch_shapes=[
            pltpu.VMEM((T, Bp, H), jnp.float32),        # inter-layer sequence
            pltpu.VMEM((T, Bp, 4 * H), jnp.float32),    # hoisted input proj
            pltpu.VMEM((Bp, H), jnp.float32),           # h state
            pltpu.VMEM((Bp, H), jnp.float32),           # c state
        ],
    )(x, *flat_weights, params["ln_gamma"], params["ln_beta"], fc_w_t,
      params["fc_b"])
    return out[:B]


# ---------------------------------------------------------------------------
# Pure-JAX reference (for correctness check).
# ---------------------------------------------------------------------------
def lstm_model_reference(x_btd, params):
    B, T, _ = x_btd.shape
    h_seq = x_btd
    for (w_ih, w_hh, b) in params["lstm_layers"]:
        H = w_hh.shape[0]
        h = jnp.zeros((B, H), jnp.float32)
        c = jnp.zeros((B, H), jnp.float32)
        outs = []
        for t in range(T):
            gates = h_seq[:, t, :] @ w_ih + h @ w_hh + b
            i_g = jax.nn.sigmoid(gates[:, 0 * H:1 * H])
            f_g = jax.nn.sigmoid(gates[:, 1 * H:2 * H])
            g_g = jnp.tanh(gates[:, 2 * H:3 * H])
            o_g = jax.nn.sigmoid(gates[:, 3 * H:4 * H])
            c = f_g * c + i_g * g_g
            h = o_g * jnp.tanh(c)
            outs.append(h)
        h_seq = jnp.stack(outs, axis=1)
    y = h_seq[:, -1, :]
    mean = y.mean(-1, keepdims=True)
    var = ((y - mean) ** 2).mean(-1, keepdims=True)
    yn = (y - mean) / jnp.sqrt(var + 1e-5)
    yn = yn * params["ln_gamma"] + params["ln_beta"]
    return yn @ params["fc_w"] + params["fc_b"]


# ---------------------------------------------------------------------------
# Deterministic parameter init (PyTorch-like uniform(-1/sqrt(H), 1/sqrt(H))).
# ---------------------------------------------------------------------------
def init_params(key, input_dim, hidden_dim, layer_dim, output_dim):
    k = 1.0 / jnp.sqrt(hidden_dim)
    params = {"lstm_layers": []}
    for layer in range(layer_dim):
        din = input_dim if layer == 0 else hidden_dim
        key, k1, k2, k3, k4 = jax.random.split(key, 5)
        w_ih = jax.random.uniform(k1, (din, 4 * hidden_dim), jnp.float32, -k, k)
        w_hh = jax.random.uniform(k2, (hidden_dim, 4 * hidden_dim), jnp.float32, -k, k)
        b_ih = jax.random.uniform(k3, (1, 4 * hidden_dim), jnp.float32, -k, k)
        b_hh = jax.random.uniform(k4, (1, 4 * hidden_dim), jnp.float32, -k, k)
        params["lstm_layers"].append((w_ih, w_hh, b_ih + b_hh))
    key, kfw, kfb = jax.random.split(key, 3)
    kf = 1.0 / jnp.sqrt(hidden_dim)
    params["ln_gamma"] = jnp.ones((1, hidden_dim), jnp.float32)
    params["ln_beta"] = jnp.zeros((1, hidden_dim), jnp.float32)
    params["fc_w"] = jax.random.uniform(kfw, (hidden_dim, output_dim), jnp.float32, -kf, kf)
    params["fc_b"] = jax.random.uniform(kfb, (1, output_dim), jnp.float32, -kf, kf)
    return params


if __name__ == "__main__":
    # Small shapes consistent with the module's forward: x is (B, T, input_dim).
    B, T, INPUT_DIM = 2, 8, 16
    HIDDEN_DIM, LAYER_DIM, OUTPUT_DIM = 32, 3, 1

    key = jax.random.PRNGKey(0)
    key, kx = jax.random.split(key)
    x = jax.random.normal(kx, (B, T, INPUT_DIM), jnp.float32)

    params = init_params(key, INPUT_DIM, HIDDEN_DIM, LAYER_DIM, OUTPUT_DIM)

    out = lstm_model_forward(x, params)  # (B, OUTPUT_DIM)
    jax.block_until_ready(out)
    assert out.shape == (B, OUTPUT_DIM), out.shape

    ref = lstm_model_reference(x, params)
    assert jnp.allclose(out, ref, atol=5e-3, rtol=5e-3), (out, ref)

    print("KERNEL_OK")
</pallas_src>

<mosaic_0001>
module attributes {stable_mosaic.version = 11 : i64} {
  func.func @kernel(%arg0: memref<8x8x16xf32, #tpu.memory_space<vmem>>, %arg1: memref<16x128xf32, #tpu.memory_space<vmem>>, %arg2: memref<32x128xf32, #tpu.memory_space<vmem>>, %arg3: memref<1x128xf32, #tpu.memory_space<vmem>>, %arg4: memref<32x128xf32, #tpu.memory_space<vmem>>, %arg5: memref<32x128xf32, #tpu.memory_space<vmem>>, %arg6: memref<1x128xf32, #tpu.memory_space<vmem>>, %arg7: memref<32x128xf32, #tpu.memory_space<vmem>>, %arg8: memref<32x128xf32, #tpu.memory_space<vmem>>, %arg9: memref<1x128xf32, #tpu.memory_space<vmem>>, %arg10: memref<1x32xf32, #tpu.memory_space<vmem>>, %arg11: memref<1x32xf32, #tpu.memory_space<vmem>>, %arg12: memref<1x32xf32, #tpu.memory_space<vmem>>, %arg13: memref<1x1xf32, #tpu.memory_space<vmem>>, %arg14: memref<8x1xf32, #tpu.memory_space<vmem>>, %arg15: memref<8x8x32xf32, #tpu.memory_space<vmem>>, %arg16: memref<8x8x128xf32, #tpu.memory_space<vmem>>, %arg17: memref<8x32xf32, #tpu.memory_space<vmem>>, %arg18: memref<8x32xf32, #tpu.memory_space<vmem>>) attributes {dimension_semantics = [], scalar_prefetch = 0 : i64, scratch_operands = 4 : i64, tpu.core_type = #tpu.core_type<tc>} {
    %c0 = arith.constant 0 : index
    %c0_0 = arith.constant 0 : index
    %c0_1 = arith.constant 0 : index
    %0 = vector.load %arg0[%c0, %c0_0, %c0_1] : memref<8x8x16xf32, #tpu.memory_space<vmem>>, vector<8x8x16xf32>
    %1 = vector.shape_cast %0 : vector<8x8x16xf32> to vector<64x16xf32>
    %c0_2 = arith.constant 0 : index
    %c0_3 = arith.constant 0 : index
    %2 = vector.load %arg1[%c0_2, %c0_3] : memref<16x128xf32, #tpu.memory_space<vmem>>, vector<16x128xf32>
    %cst = arith.constant dense<0.000000e+00> : vector<64x128xf32>
    %3 = tpu.matmul %1, %2, %cst {dimension_numbers = #tpu.dot_dimension_numbers<[1], [0], [0], [1], [0, 0, 1, 1], [], []>} : vector<64x16xf32>, vector<16x128xf32>, vector<64x128xf32> -> vector<64x128xf32>
    %c0_4 = arith.constant 0 : index
    %c0_5 = arith.constant 0 : index
    %4 = vector.load %arg3[%c0_4, %c0_5] : memref<1x128xf32, #tpu.memory_space<vmem>>, vector<1x128xf32>
    %5 = vector.broadcast %4 : vector<1x128xf32> to vector<64x128xf32>
    %6 = arith.addf %3, %5 : vector<64x128xf32>
    %7 = vector.shape_cast %6 : vector<64x128xf32> to vector<8x8x128xf32>
    %c0_6 = arith.constant 0 : index
    %c0_7 = arith.constant 0 : index
    %c0_8 = arith.constant 0 : index
    %8 = vector.load %arg16[%c0_6, %c0_7, %c0_8] : memref<8x8x128xf32, #tpu.memory_space<vmem>>, vector<8x8x128xf32>
    tpu.vector_store %arg16[%c0_6, %c0_7, %c0_8], %7 {strides = array<i32>} : memref<8x8x128xf32, #tpu.memory_space<vmem>>, vector<8x8x128xf32>,
    %cst_9 = arith.constant 0.000000e+00 : f32
    %9 = vector.broadcast %cst_9 : f32 to vector<8x32xf32>
    %c0_10 = arith.constant 0 : index
    %c0_11 = arith.constant 0 : index
    %10 = vector.load %arg17[%c0_10, %c0_11] : memref<8x32xf32, #tpu.memory_space<vmem>>, vector<8x32xf32>
    tpu.vector_store %arg17[%c0_10, %c0_11], %9 {strides = array<i32>} : memref<8x32xf32, #tpu.memory_space<vmem>>, vector<8x32xf32>,
    %cst_12 = arith.constant 0.000000e+00 : f32
    %11 = vector.broadcast %cst_12 : f32 to vector<8x32xf32>
    %c0_13 = arith.constant 0 : index
    %c0_14 = arith.constant 0 : index
    %12 = vector.load %arg18[%c0_13, %c0_14] : memref<8x32xf32, #tpu.memory_space<vmem>>, vector<8x32xf32>
    tpu.vector_store %arg18[%c0_13, %c0_14], %11 {strides = array<i32>} : memref<8x32xf32, #tpu.memory_space<vmem>>, vector<8x32xf32>,
    %c0_i32 = arith.constant 0 : i32
    %13 = arith.index_cast %c0_i32 : i32 to index
    %c0_15 = arith.constant 0 : index
    %c0_16 = arith.constant 0 : index
    %14 = vector.load %arg16[%13, %c0_15, %c0_16] : memref<8x8x128xf32, #tpu.memory_space<vmem>>, vector<1x8x128xf32>
    %15 = vector.shape_cast %14 : vector<1x8x128xf32> to vector<8x128xf32>
    %c0_17 = arith.constant 0 : index
    %c0_18 = arith.constant 0 : index
    %16 = vector.load %arg17[%c0_17, %c0_18] : memref<8x32xf32, #tpu.memory_space<vmem>>, vector<8x32xf32>
    %c0_19 = arith.constant 0 : index
    %c0_20 = arith.constant 0 : index
    %17 = vector.load %arg2[%c0_19, %c0_20] : memref<32x128xf32, #tpu.memory_space<vmem>>, vector<32x128xf32>
    %cst_21 = arith.constant dense<0.000000e+00> : vector<8x128xf32>
    %18 = tpu.matmul %16, %17, %cst_21 {dimension_numbers = #tpu.dot_dimension_numbers<[1], [0], [0], [1], [0, 0, 1, 1], [], []>} : vector<8x32xf32>, vector<32x128xf32>, vector<8x128xf32> -> vector<8x128xf32>
    %19 = arith.addf %15, %18 : vector<8x128xf32>
    %20 = arith.negf %19 : vector<8x128xf32>
    %21 = math.exp %20 : vector<8x128xf32>
    %cst_22 = arith.constant 1.000000e+00 : f32
    %22 = vector.broadcast %cst_22 : f32 to vector<8x128xf32>
    %23 = arith.addf %22, %21 : vector<8x128xf32>
    %24 = arith.divf %22, %23 : vector<8x128xf32>
    %25 = math.tanh %19 : vector<8x128xf32>
    %26 = vector.extract_strided_slice %24 {offsets = [0, 0], sizes = [8, 32], strides = [1, 1]} : vector<8x128xf32> to vector<8x32xf32>
    %27 = vector.extract_strided_slice %24 {offsets = [0, 32], sizes = [8, 32], strides = [1, 1]} : vector<8x128xf32> to vector<8x32xf32>
    %28 = vector.extract_strided_slice %25 {offsets = [0, 64], sizes = [8, 32], strides = [1, 1]} : vector<8x128xf32> to vector<8x32xf32>
    %29 = vector.extract_strided_slice %24 {offsets = [0, 96], sizes = [8, 32], strides = [1, 1]} : vector<8x128xf32> to vector<8x32xf32>
    %c0_23 = arith.constant 0 : index
    %c0_24 = arith.constant 0 : index
    %30 = vector.load %arg18[%c0_23, %c0_24] : memref<8x32xf32, #tpu.memory_space<vmem>>, vector<8x32xf32>
    %31 = arith.mulf %27, %30 : vector<8x32xf32>
    %32 = arith.mulf %26, %28 : vector<8x32xf32>
    %33 = arith.addf %31, %32 : vector<8x32xf32>
    %34 = math.tanh %33 : vector<8x32xf32>
    %35 = arith.mulf %29, %34 : vector<8x32xf32>
    %c0_25 = arith.constant 0 : index
    %c0_26 = arith.constant 0 : index
    %36 = vector.load %arg18[%c0_25, %c0_26] : memref<8x32xf32, #tpu.memory_space<vmem>>, vector<8x32xf32>
    tpu.vector_store %arg18[%c0_25, %c0_26], %33 {strides = array<i32>} : memref<8x32xf32, #tpu.memory_space<vmem>>, vector<8x32xf32>,
    %c0_27 = arith.constant 0 : index
    %c0_28 = arith.constant 0 : index
    %37 = vector.load %arg17[%c0_27, %c0_28] : memref<8x32xf32, #tpu.memory_space<vmem>>, vector<8x32xf32>
    tpu.vector_store %arg17[%c0_27, %c0_28], %35 {strides = array<i32>} : memref<8x32xf32, #tpu.memory_space<vmem>>, vector<8x32xf32>,
    %38 = arith.index_cast %c0_i32 : i32 to index
    %c0_29 = arith.constant 0 : index
    %c0_30 = arith.constant 0 : index
    %39 = vector.load %arg15[%38, %c0_29, %c0_30] : memref<8x8x32xf32, #tpu.memory_space<vmem>>, vector<1x8x32xf32>
    %40 = vector.shape_cast %39 : vector<1x8x32xf32> to vector<8x32xf32>
    %41 = vector.shape_cast %35 : vector<8x32xf32> to vector<1x8x32xf32>
    tpu.vector_store %arg15[%38, %c0_29, %c0_30], %41 {strides = array<i32>} : memref<8x8x32xf32, #tpu.memory_space<vmem>>, vector<1x8x32xf32>,
    %c1_i32 = arith.constant 1 : i32
    %42 = arith.index_cast %c1_i32 : i32 to index
    %c0_31 = arith.constant 0 : index
    %c0_32 = arith.constant 0 : index
    %43 = vector.load %arg16[%42, %c0_31, %c0_32] : memref<8x8x128xf32, #tpu.memory_space<vmem>>, vector<1x8x128xf32>
    %44 = vector.shape_cast %43 : vector<1x8x128xf32> to vector<8x128xf32>
    %c0_33 = arith.constant 0 : index
    %c0_34 = arith.constant 0 : index
    %45 = vector.load %arg17[%c0_33, %c0_34] : memref<8x32xf32, #tpu.memory_space<vmem>>, vector<8x32xf32>
    %c0_35 = arith.constant 0 : index
    %c0_36 = arith.constant 0 : index
    %46 = vector.load %arg2[%c0_35, %c0_36] : memref<32x128xf32, #tpu.memory_space<vmem>>, vector<32x128xf32>
    %cst_37 = arith.constant dense<0.000000e+00> : vector<8x128xf32>
    %47 = tpu.matmul %45, %46, %cst_37 {dimension_numbers = #tpu.dot_dimension_numbers<[1], [0], [0], [1], [0, 0, 1, 1], [], []>} : vector<8x32xf32>, vector<32x128xf32>, vector<8x128xf32> -> vector<8x128xf32>
    %48 = arith.addf %44, %47 : vector<8x128xf32>
    %49 = arith.negf %48 : vector<8x128xf32>
    %50 = math.exp %49 : vector<8x128xf32>
    %cst_38 = arith.constant 1.000000e+00 : f32
    %51 = vector.broadcast %cst_38 : f32 to vector<8x128xf32>
    %52 = arith.addf %51, %50 : vector<8x128xf32>
    %53 = arith.divf %51, %52 : vector<8x128xf32>
    %54 = math.tanh %48 : vector<8x128xf32>
    %55 = vector.extract_strided_slice %53 {offsets = [0, 0], sizes = [8, 32], strides = [1, 1]} : vector<8x128xf32> to vector<8x32xf32>
    %56 = vector.extract_strided_slice %53 {offsets = [0, 32], sizes = [8, 32], strides = [1, 1]} : vector<8x128xf32> to vector<8x32xf32>
    %57 = vector.extract_strided_slice %54 {offsets = [0, 64], sizes = [8, 32], strides = [1, 1]} : vector<8x128xf32> to vector<8x32xf32>
    %58 = vector.extract_strided_slice %53 {offsets = [0, 96], sizes = [8, 32], strides = [1, 1]} : vector<8x128xf32> to vector<8x32xf32>
    %c0_39 = arith.constant 0 : index
    %c0_40 = arith.constant 0 : index
    %59 = vector.load %arg18[%c0_39, %c0_40] : memref<8x32xf32, #tpu.memory_space<vmem>>, vector<8x32xf32>
    %60 = arith.mulf %56, %59 : vector<8x32xf32>
    %61 = arith.mulf %55, %57 : vector<8x32xf32>
    %62 = arith.addf %60, %61 : vector<8x32xf32>
    %63 = math.tanh %62 : vector<8x32xf32>
    %64 = arith.mulf %58, %63 : vector<8x32xf32>
    %c0_41 = arith.constant 0 : index
    %c0_42 = arith.constant 0 : index
    %65 = vector.load %arg18[%c0_41, %c0_42] : memref<8x32xf32, #tpu.memory_space<vmem>>, vector<8x32xf32>
    tpu.vector_store %arg18[%c0_41, %c0_42], %62 {strides = array<i32>} : memref<8x32xf32, #tpu.memory_space<vmem>>, vector<8x32xf32>,
    %c0_43 = arith.constant 0 : index
    %c0_44 = arith.constant 0 : index
    %66 = vector.load %arg17[%c0_43, %c0_44] : memref<8x32xf32, #tpu.memory_space<vmem>>, vector<8x32xf32>
    tpu.vector_store %arg17[%c0_43, %c0_44], %64 {strides = array<i32>} : memref<8x32xf32, #tpu.memory_space<vmem>>, vector<8x32xf32>,
    %67 = arith.index_cast %c1_i32 : i32 to index
    %c0_45 = arith.constant 0 : index
    %c0_46 = arith.constant 0 : index
    %68 = vector.load %arg15[%67, %c0_45, %c0_46] : memref<8x8x32xf32, #tpu.memory_space<vmem>>, vector<1x8x32xf32>
    %69 = vector.shape_cast %68 : vector<1x8x32xf32> to vector<8x32xf32>
    %70 = vector.shape_cast %64 : vector<8x32xf32> to vector<1x8x32xf32>
    tpu.vector_store %arg15[%67, %c0_45, %c0_46], %70 {strides = array<i32>} : memref<8x8x32xf32, #tpu.memory_space<vmem>>, vector<1x8x32xf32>,
    %c2_i32 = arith.constant 2 : i32
    %71 = arith.index_cast %c2_i32 : i32 to index
    %c0_47 = arith.constant 0 : index
    %c0_48 = arith.constant 0 : index
    %72 = vector.load %arg16[%71, %c0_47, %c0_48] : memref<8x8x128xf32, #tpu.memory_space<vmem>>, vector<1x8x128xf32>
    %73 = vector.shape_cast %72 : vector<1x8x128xf32> to vector<8x128xf32>
    %c0_49 = arith.constant 0 : index
    %c0_50 = arith.constant 0 : index
    %74 = vector.load %arg17[%c0_49, %c0_50] : memref<8x32xf32, #tpu.memory_space<vmem>>, vector<8x32xf32>
    %c0_51 = arith.constant 0 : index
    %c0_52 = arith.constant 0 : index
    %75 = vector.load %arg2[%c0_51, %c0_52] : memref<32x128xf32, #tpu.memory_space<vmem>>, vector<32x128xf32>
    %cst_53 = arith.constant dense<0.000000e+00> : vector<8x128xf32>
    %76 = tpu.matmul %74, %75, %cst_53 {dimension_numbers = #tpu.dot_dimension_numbers<[1], [0], [0], [1], [0, 0, 1, 1], [], []>} : vector<8x32xf32>, vector<32x128xf32>, vector<8x128xf32> -> vector<8x128xf32>
    %77 = arith.addf %73, %76 : vector<8x128xf32>
    %78 = arith.negf %77 : vector<8x128xf32>
    %79 = math.exp %78 : vector<8x128xf32>
    %cst_54 = arith.constant 1.000000e+00 : f32
    %80 = vector.broadcast %cst_54 : f32 to vector<8x128xf32>
    %81 = arith.addf %80, %79 : vector<8x128xf32>
    %82 = arith.divf %80, %81 : vector<8x128xf32>
    %83 = math.tanh %77 : vector<8x128xf32>
    %84 = vector.extract_strided_slice %82 {offsets = [0, 0], sizes = [8, 32], strides = [1, 1]} : vector<8x128xf32> to vector<8x32xf32>
    %85 = vector.extract_strided_slice %82 {offsets = [0, 32], sizes = [8, 32], strides = [1, 1]} : vector<8x128xf32> to vector<8x32xf32>
    %86 = vector.extract_strided_slice %83 {offsets = [0, 64], sizes = [8, 32], strides = [1, 1]} : vector<8x128xf32> to vector<8x32xf32>
    %87 = vector.extract_strided_slice %82 {offsets = [0, 96], sizes = [8, 32], strides = [1, 1]} : vector<8x128xf32> to vector<8x32xf32>
    %c0_55 = arith.constant 0 : index
    %c0_56 = arith.constant 0 : index
    %88 = vector.load %arg18[%c0_55, %c0_56] : memref<8x32xf32, #tpu.memory_space<vmem>>, vector<8x32xf32>
    %89 = arith.mulf %85, %88 : vector<8x32xf32>
    %90 = arith.mulf %84, %86 : vector<8x32xf32>
    %91 = arith.addf %89, %90 : vector<8x32xf32>
    %92 = math.tanh %91 : vector<8x32xf32>
    %93 = arith.mulf %87, %92 : vector<8x32xf32>
    %c0_57 = arith.constant 0 : index
    %c0_58 = arith.constant 0 : index
    %94 = vector.load %arg18[%c0_57, %c0_58] : memref<8x32xf32, #tpu.memory_space<vmem>>, vector<8x32xf32>
    tpu.vector_store %arg18[%c0_57, %c0_58], %91 {strides = array<i32>} : memref<8x32xf32, #tpu.memory_space<vmem>>, vector<8x32xf32>,
    %c0_59 = arith.constant 0 : index
    %c0_60 = arith.constant 0 : index
    %95 = vector.load %arg17[%c0_59, %c0_60] : memref<8x32xf32, #tpu.memory_space<vmem>>, vector<8x32xf32>
    tpu.vector_store %arg17[%c0_59, %c0_60], %93 {strides = array<i32>} : memref<8x32xf32, #tpu.memory_space<vmem>>, vector<8x32xf32>,
    %96 = arith.index_cast %c2_i32 : i32 to index
    %c0_61 = arith.constant 0 : index
    %c0_62 = arith.constant 0 : index
    %97 = vector.load %arg15[%96, %c0_61, %c0_62] : memref<8x8x32xf32, #tpu.memory_space<vmem>>, vector<1x8x32xf32>
    %98 = vector.shape_cast %97 : vector<1x8x32xf32> to vector<8x32xf32>
    %99 = vector.shape_cast %93 : vector<8x32xf32> to vector<1x8x32xf32>
    tpu.vector_store %arg15[%96, %c0_61, %c0_62], %99 {strides = array<i32>} : memref<8x8x32xf32, #tpu.memory_space<vmem>>, vector<1x8x32xf32>,
    %c3_i32 = arith.constant 3 : i32
    %100 = arith.index_cast %c3_i32 : i32 to index
    %c0_63 = arith.constant 0 : index
    %c0_64 = arith.constant 0 : index
    %101 = vector.load %arg16[%100, %c0_63, %c0_64] : memref<8x8x128xf32, #tpu.memory_space<vmem>>, vector<1x8x128xf32>
    %102 = vector.shape_cast %101 : vector<1x8x128xf32> to vector<8x128xf32>
    %c0_65 = arith.constant 0 : index
    %c0_66 = arith.constant 0 : index
    %103 = vector.load %arg17[%c0_65, %c0_66] : memref<8x32xf32, #tpu.memory_space<vmem>>, vector<8x32xf32>
    %c0_67 = arith.constant 0 : index
    %c0_68 = arith.constant 0 : index
    %104 = vector.load %arg2[%c0_67, %c0_68] : memref<32x128xf32, #tpu.memory_space<vmem>>, vector<32x128xf32>
    %cst_69 = arith.constant dense<0.000000e+00> : vector<8x128xf32>
    %105 = tpu.matmul %103, %104, %cst_69 {dimension_numbers = #tpu.dot_dimension_numbers<[1], [0], [0], [1], [0, 0, 1, 1], [], []>} : vector<8x32xf32>, vector<32x128xf32>, vector<8x128xf32> -> vector<8x128xf32>
    %106 = arith.addf %102, %105 : vector<8x128xf32>
    %107 = arith.negf %106 : vector<8x128xf32>
    %108 = math.exp %107 : vector<8x128xf32>
    %cst_70 = arith.constant 1.000000e+00 : f32
    %109 = vector.broadcast %cst_70 : f32 to vector<8x128xf32>
    %110 = arith.addf %109, %108 : vector<8x128xf32>
    %111 = arith.divf %109, %110 : vector<8x128xf32>
    %112 = math.tanh %106 : vector<8x128xf32>
    %113 = vector.extract_strided_slice %111 {offsets = [0, 0], sizes = [8, 32], strides = [1, 1]} : vector<8x128xf32> to vector<8x32xf32>
    %114 = vector.extract_strided_slice %111 {offsets = [0, 32], sizes = [8, 32], strides = [1, 1]} : vector<8x128xf32> to vector<8x32xf32>
    %115 = vector.extract_strided_slice %112 {offsets = [0, 64], sizes = [8, 32], strides = [1, 1]} : vector<8x128xf32> to vector<8x32xf32>
    %116 = vector.extract_strided_slice %111 {offsets = [0, 96], sizes = [8, 32], strides = [1, 1]} : vector<8x128xf32> to vector<8x32xf32>
    %c0_71 = arith.constant 0 : index
    %c0_72 = arith.constant 0 : index
    %117 = vector.load %arg18[%c0_71, %c0_72] : memref<8x32xf32, #tpu.memory_space<vmem>>, vector<8x32xf32>
    %118 = arith.mulf %114, %117 : vector<8x32xf32>
    %119 = arith.mulf %113, %115 : vector<8x32xf32>
    %120 = arith.addf %118, %119 : vector<8x32xf32>
    %121 = math.tanh %120 : vector<8x32xf32>
    %122 = arith.mulf %116, %121 : vector<8x32xf32>
    %c0_73 = arith.constant 0 : index
    %c0_74 = arith.constant 0 : index
    %123 = vector.load %arg18[%c0_73, %c0_74] : memref<8x32xf32, #tpu.memory_space<vmem>>, vector<8x32xf32>
    tpu.vector_store %arg18[%c0_73, %c0_74], %120 {strides = array<i32>} : memref<8x32xf32, #tpu.memory_space<vmem>>, vector<8x32xf32>,
    %c0_75 = arith.constant 0 : index
    %c0_76 = arith.constant 0 : index
    %124 = vector.load %arg17[%c0_75, %c0_76] : memref<8x32xf32, #tpu.memory_space<vmem>>, vector<8x32xf32>
    tpu.vector_store %arg17[%c0_75, %c0_76], %122 {strides = array<i32>} : memref<8x32xf32, #tpu.memory_space<vmem>>, vector<8x32xf32>,
    %125 = arith.index_cast %c3_i32 : i32 to index
    %c0_77 = arith.constant 0 : index
    %c0_78 = arith.constant 0 : index
    %126 = vector.load %arg15[%125, %c0_77, %c0_78] : memref<8x8x32xf32, #tpu.memory_space<vmem>>, vector<1x8x32xf32>
    %127 = vector.shape_cast %126 : vector<1x8x32xf32> to vector<8x32xf32>
    %128 = vector.shape_cast %122 : vector<8x32xf32> to vector<1x8x32xf32>
    tpu.vector_store %arg15[%125, %c0_77, %c0_78], %128 {strides = array<i32>} : memref<8x8x32xf32, #tpu.memory_space<vmem>>, vector<1x8x32xf32>,
    %c4_i32 = arith.constant 4 : i32
    %129 = arith.index_cast %c4_i32 : i32 to index
    %c0_79 = arith.constant 0 : index
    %c0_80 = arith.constant 0 : index
    %130 = vector.load %arg16[%129, %c0_79, %c0_80] : memref<8x8x128xf32, #tpu.memory_space<vmem>>, vector<1x8x128xf32>
    %131 = vector.shape_cast %130 : vector<1x8x128xf32> to vector<8x128xf32>
    %c0_81 = arith.constant 0 : index
    %c0_82 = arith.constant 0 : index
    %132 = vector.load %arg17[%c0_81, %c0_82] : memref<8x32xf32, #tpu.memory_space<vmem>>, vector<8x32xf32>
    %c0_83 = arith.constant 0 : index
    %c0_84 = arith.constant 0 : index
    %133 = vector.load %arg2[%c0_83, %c0_84] : memref<32x128xf32, #tpu.memory_space<vmem>>, vector<32x128xf32>
    %cst_85 = arith.constant dense<0.000000e+00> : vector<8x128xf32>
    %134 = tpu.matmul %132, %133, %cst_85 {dimension_numbers = #tpu.dot_dimension_numbers<[1], [0], [0], [1], [0, 0, 1, 1], [], []>} : vector<8x32xf32>, vector<32x128xf32>, vector<8x128xf32> -> vector<8x128xf32>
    %135 = arith.addf %131, %134 : vector<8x128xf32>
    %136 = arith.negf %135 : vector<8x128xf32>
    %137 = math.exp %136 : vector<8x128xf32>
    %cst_86 = arith.constant 1.000000e+00 : f32
    %138 = vector.broadcast %cst_86 : f32 to vector<8x128xf32>
    %139 = arith.addf %138, %137 : vector<8x128xf32>
    %140 = arith.divf %138, %139 : vector<8x128xf32>
    %141 = math.tanh %135 : vector<8x128xf32>
    %142 = vector.extract_strided_slice %140 {offsets = [0, 0], sizes = [8, 32], strides = [1, 1]} : vector<8x128xf32> to vector<8x32xf32>
    %143 = vector.extract_strided_slice %140 {offsets = [0, 32], sizes = [8, 32], strides = [1, 1]} : vector<8x128xf32> to vector<8x32xf32>
    %144 = vector.extract_strided_slice %141 {offsets = [0, 64], sizes = [8, 32], strides = [1, 1]} : vector<8x128xf32> to vector<8x32xf32>
    %145 = vector.extract_strided_slice %140 {offsets = [0, 96], sizes = [8, 32], strides = [1, 1]} : vector<8x128xf32> to vector<8x32xf32>
    %c0_87 = arith.constant 0 : index
    %c0_88 = arith.constant 0 : index
    %146 = vector.load %arg18[%c0_87, %c0_88] : memref<8x32xf32, #tpu.memory_space<vmem>>, vector<8x32xf32>
    %147 = arith.mulf %143, %146 : vector<8x32xf32>
    %148 = arith.mulf %142, %144 : vector<8x32xf32>
    %149 = arith.addf %147, %148 : vector<8x32xf32>
    %150 = math.tanh %149 : vector<8x32xf32>
    %151 = arith.mulf %145, %150 : vector<8x32xf32>
    %c0_89 = arith.constant 0 : index
    %c0_90 = arith.constant 0 : index
    %152 = vector.load %arg18[%c0_89, %c0_90] : memref<8x32xf32, #tpu.memory_space<vmem>>, vector<8x32xf32>
    tpu.vector_store %arg18[%c0_89, %c0_90], %149 {strides = array<i32>} : memref<8x32xf32, #tpu.memory_space<vmem>>, vector<8x32xf32>,
    %c0_91 = arith.constant 0 : index
    %c0_92 = arith.constant 0 : index
    %153 = vector.load %arg17[%c0_91, %c0_92] : memref<8x32xf32, #tpu.memory_space<vmem>>, vector<8x32xf32>
    tpu.vector_store %arg17[%c0_91, %c0_92], %151 {strides = array<i32>} : memref<8x32xf32, #tpu.memory_space<vmem>>, vector<8x32xf32>,
    %154 = arith.index_cast %c4_i32 : i32 to index
    %c0_93 = arith.constant 0 : index
    %c0_94 = arith.constant 0 : index
    %155 = vector.load %arg15[%154, %c0_93, %c0_94] : memref<8x8x32xf32, #tpu.memory_space<vmem>>, vector<1x8x32xf32>
    %156 = vector.shape_cast %155 : vector<1x8x32xf32> to vector<8x32xf32>
    %157 = vector.shape_cast %151 : vector<8x32xf32> to vector<1x8x32xf32>
    tpu.vector_store %arg15[%154, %c0_93, %c0_94], %157 {strides = array<i32>} : memref<8x8x32xf32, #tpu.memory_space<vmem>>, vector<1x8x32xf32>,
    %c5_i32 = arith.constant 5 : i32
    %158 = arith.index_cast %c5_i32 : i32 to index
    %c0_95 = arith.constant 0 : index
    %c0_96 = arith.constant 0 : index
    %159 = vector.load %arg16[%158, %c0_95, %c0_96] : memref<8x8x128xf32, #tpu.memory_space<vmem>>, vector<1x8x128xf32>
    %160 = vector.shape_cast %159 : vector<1x8x128xf32> to vector<8x128xf32>
    %c0_97 = arith.constant 0 : index
    %c0_98 = arith.constant 0 : index
    %161 = vector.load %arg17[%c0_97, %c0_98] : memref<8x32xf32, #tpu.memory_space<vmem>>, vector<8x32xf32>
    %c0_99 = arith.constant 0 : index
    %c0_100 = arith.constant 0 : index
    %162 = vector.load %arg2[%c0_99, %c0_100] : memref<32x128xf32, #tpu.memory_space<vmem>>, vector<32x128xf32>
    %cst_101 = arith.constant dense<0.000000e+00> : vector<8x128xf32>
    %163 = tpu.matmul %161, %162, %cst_101 {dimension_numbers = #tpu.dot_dimension_numbers<[1], [0], [0], [1], [0, 0, 1, 1], [], []>} : vector<8x32xf32>, vector<32x128xf32>, vector<8x128xf32> -> vector<8x128xf32>
    %164 = arith.addf %160, %163 : vector<8x128xf32>
    %165 = arith.negf %164 : vector<8x128xf32>
    %166 = math.exp %165 : vector<8x128xf32>
    %cst_102 = arith.constant 1.000000e+00 : f32
    %167 = vector.broadcast %cst_102 : f32 to vector<8x128xf32>
    %168 = arith.addf %167, %166 : vector<8x128xf32>
    %169 = arith.divf %167, %168 : vector<8x128xf32>
    %170 = math.tanh %164 : vector<8x128xf32>
    %171 = vector.extract_strided_slice %169 {offsets = [0, 0], sizes = [8, 32], strides = [1, 1]} : vector<8x128xf32> to vector<8x32xf32>
    %172 = vector.extract_strided_slice %169 {offsets = [0, 32], sizes = [8, 32], strides = [1, 1]} : vector<8x128xf32> to vector<8x32xf32>
    %173 = vector.extract_strided_slice %170 {offsets = [0, 64], sizes = [8, 32], strides = [1, 1]} : vector<8x128xf32> to vector<8x32xf32>
    %174 = vector.extract_strided_slice %169 {offsets = [0, 96], sizes = [8, 32], strides = [1, 1]} : vector<8x128xf32> to vector<8x32xf32>
    %c0_103 = arith.constant 0 : index
    %c0_104 = arith.constant 0 : index
    %175 = vector.load %arg18[%c0_103, %c0_104] : memref<8x32xf32, #tpu.memory_space<vmem>>, vector<8x32xf32>
    %176 = arith.mulf %172, %175 : vector<8x32xf32>
    %177 = arith.mulf %171, %173 : vector<8x32xf32>
    %178 = arith.addf %176, %177 : vector<8x32xf32>
    %179 = math.tanh %178 : vector<8x32xf32>
    %180 = arith.mulf %174, %179 : vector<8x32xf32>
    %c0_105 = arith.constant 0 : index
    %c0_106 = arith.constant 0 : index
    %181 = vector.load %arg18[%c0_105, %c0_106] : memref<8x32xf32, #tpu.memory_space<vmem>>, vector<8x32xf32>
    tpu.vector_store %arg18[%c0_105, %c0_106], %178 {strides = array<i32>} : memref<8x32xf32, #tpu.memory_space<vmem>>, vector<8x32xf32>,
    %c0_107 = arith.constant 0 : index
    %c0_108 = arith.constant 0 : index
    %182 = vector.load %arg17[%c0_107, %c0_108] : memref<8x32xf32, #tpu.memory_space<vmem>>, vector<8x32xf32>
    tpu.vector_store %arg17[%c0_107, %c0_108], %180 {strides = array<i32>} : memref<8x32xf32, #tpu.memory_space<vmem>>, vector<8x32xf32>,
    %183 = arith.index_cast %c5_i32 : i32 to index
    %c0_109 = arith.constant 0 : index
    %c0_110 = arith.constant 0 : index
    %184 = vector.load %arg15[%183, %c0_109, %c0_110] : memref<8x8x32xf32, #tpu.memory_space<vmem>>, vector<1x8x32xf32>
    %185 = vector.shape_cast %184 : vector<1x8x32xf32> to vector<8x32xf32>
    %186 = vector.shape_cast %180 : vector<8x32xf32> to vector<1x8x32xf32>
    tpu.vector_store %arg15[%183, %c0_109, %c0_110], %186 {strides = array<i32>} : memref<8x8x32xf32, #tpu.memory_space<vmem>>, vector<1x8x32xf32>,
    %c6_i32 = arith.constant 6 : i32
    %187 = arith.index_cast %c6_i32 : i32 to index
    %c0_111 = arith.constant 0 : index
    %c0_112 = arith.constant 0 : index
    %188 = vector.load %arg16[%187, %c0_111, %c0_112] : memref<8x8x128xf32, #tpu.memory_space<vmem>>, vector<1x8x128xf32>
    %189 = vector.shape_cast %188 : vector<1x8x128xf32> to vector<8x128xf32>
    %c0_113 = arith.constant 0 : index
    %c0_114 = arith.constant 0 : index
    %190 = vector.load %arg17[%c0_113, %c0_114] : memref<8x32xf32, #tpu.memory_space<vmem>>, vector<8x32xf32>
    %c0_115 = arith.constant 0 : index
    %c0_116 = arith.constant 0 : index
    %191 = vector.load %arg2[%c0_115, %c0_116] : memref<32x128xf32, #tpu.memory_space<vmem>>, vector<32x128xf32>
    %cst_117 = arith.constant dense<0.000000e+00> : vector<8x128xf32>
    %192 = tpu.matmul %190, %191, %cst_117 {dimension_numbers = #tpu.dot_dimension_numbers<[1], [0], [0], [1], [0, 0, 1, 1], [], []>} : vector<8x32xf32>, vector<32x128xf32>, vector<8x128xf32> -> vector<8x128xf32>
    %193 = arith.addf %189, %192 : vector<8x128xf32>
    %194 = arith.negf %193 : vector<8x128xf32>
    %195 = math.exp %194 : vector<8x128xf32>
    %cst_118 = arith.constant 1.000000e+00 : f32
    %196 = vector.broadcast %cst_118 : f32 to vector<8x128xf32>
    %197 = arith.addf %196, %195 : vector<8x128xf32>
    %198 = arith.divf %196, %197 : vector<8x128xf32>
    %199 = math.tanh %193 : vector<8x128xf32>
    %200 = vector.extract_strided_slice %198 {offsets = [0, 0], sizes = [8, 32], strides = [1, 1]} : vector<8x128xf32> to vector<8x32xf32>
    %201 = vector.extract_strided_slice %198 {offsets = [0, 32], sizes = [8, 32], strides = [1, 1]} : vector<8x128xf32> to vector<8x32xf32>
    %202 = vector.extract_strided_slice %199 {offsets = [0, 64], sizes = [8, 32], strides = [1, 1]} : vector<8x128xf32> to vector<8x32xf32>
    %203 = vector.extract_strided_slice %198 {offsets = [0, 96], sizes = [8, 32], strides = [1, 1]} : vector<8x128xf32> to vector<8x32xf32>
    %c0_119 = arith.constant 0 : index
    %c0_120 = arith.constant 0 : index
    %204 = vector.load %arg18[%c0_119, %c0_120] : memref<8x32xf32, #tpu.memory_space<vmem>>, vector<8x32xf32>
    %205 = arith.mulf %201, %204 : vector<8x32xf32>
    %206 = arith.mulf %200, %202 : vector<8x32xf32>
    %207 = arith.addf %205, %206 : vector<8x32xf32>
    %208 = math.tanh %207 : vector<8x32xf32>
    %209 = arith.mulf %203, %208 : vector<8x32xf32>
    %c0_121 = arith.constant 0 : index
    %c0_122 = arith.constant 0 : index
    %210 = vector.load %arg18[%c0_121, %c0_122] : memref<8x32xf32, #tpu.memory_space<vmem>>, vector<8x32xf32>
    tpu.vector_store %arg18[%c0_121, %c0_122], %207 {strides = array<i32>} : memref<8x32xf32, #tpu.memory_space<vmem>>, vector<8x32xf32>,
    %c0_123 = arith.constant 0 : index
    %c0_124 = arith.constant 0 : index
    %211 = vector.load %arg17[%c0_123, %c0_124] : memref<8x32xf32, #tpu.memory_space<vmem>>, vector<8x32xf32>
    tpu.vector_store %arg17[%c0_123, %c0_124], %209 {strides = array<i32>} : memref<8x32xf32, #tpu.memory_space<vmem>>, vector<8x32xf32>,
    %212 = arith.index_cast %c6_i32 : i32 to index
    %c0_125 = arith.constant 0 : index
    %c0_126 = arith.constant 0 : index
    %213 = vector.load %arg15[%212, %c0_125, %c0_126] : memref<8x8x32xf32, #tpu.memory_space<vmem>>, vector<1x8x32xf32>
    %214 = vector.shape_cast %213 : vector<1x8x32xf32> to vector<8x32xf32>
    %215 = vector.shape_cast %209 : vector<8x32xf32> to vector<1x8x32xf32>
    tpu.vector_store %arg15[%212, %c0_125, %c0_126], %215 {strides = array<i32>} : memref<8x8x32xf32, #tpu.memory_space<vmem>>, vector<1x8x32xf32>,
    %c7_i32 = arith.constant 7 : i32
    %216 = arith.index_cast %c7_i32 : i32 to index
    %c0_127 = arith.constant 0 : index
    %c0_128 = arith.constant 0 : index
    %217 = vector.load %arg16[%216, %c0_127, %c0_128] : memref<8x8x128xf32, #tpu.memory_space<vmem>>, vector<1x8x128xf32>
    %218 = vector.shape_cast %217 : vector<1x8x128xf32> to vector<8x128xf32>
    %c0_129 = arith.constant 0 : index
    %c0_130 = arith.constant 0 : index
    %219 = vector.load %arg17[%c0_129, %c0_130] : memref<8x32xf32, #tpu.memory_space<vmem>>, vector<8x32xf32>
    %c0_131 = arith.constant 0 : index
    %c0_132 = arith.constant 0 : index
    %220 = vector.load %arg2[%c0_131, %c0_132] : memref<32x128xf32, #tpu.memory_space<vmem>>, vector<32x128xf32>
    %cst_133 = arith.constant dense<0.000000e+00> : vector<8x128xf32>
    %221 = tpu.matmul %219, %220, %cst_133 {dimension_numbers = #tpu.dot_dimension_numbers<[1], [0], [0], [1], [0, 0, 1, 1], [], []>} : vector<8x32xf32>, vector<32x128xf32>, vector<8x128xf32> -> vector<8x128xf32>
    %222 = arith.addf %218, %221 : vector<8x128xf32>
    %223 = arith.negf %222 : vector<8x128xf32>
    %224 = math.exp %223 : vector<8x128xf32>
    %cst_134 = arith.constant 1.000000e+00 : f32
    %225 = vector.broadcast %cst_134 : f32 to vector<8x128xf32>
    %226 = arith.addf %225, %224 : vector<8x128xf32>
    %227 = arith.divf %225, %226 : vector<8x128xf32>
    %228 = math.tanh %222 : vector<8x128xf32>
    %229 = vector.extract_strided_slice %227 {offsets = [0, 0], sizes = [8, 32], strides = [1, 1]} : vector<8x128xf32> to vector<8x32xf32>
    %230 = vector.extract_strided_slice %227 {offsets = [0, 32], sizes = [8, 32], strides = [1, 1]} : vector<8x128xf32> to vector<8x32xf32>
    %231 = vector.extract_strided_slice %228 {offsets = [0, 64], sizes = [8, 32], strides = [1, 1]} : vector<8x128xf32> to vector<8x32xf32>
    %232 = vector.extract_strided_slice %227 {offsets = [0, 96], sizes = [8, 32], strides = [1, 1]} : vector<8x128xf32> to vector<8x32xf32>
    %c0_135 = arith.constant 0 : index
    %c0_136 = arith.constant 0 : index
    %233 = vector.load %arg18[%c0_135, %c0_136] : memref<8x32xf32, #tpu.memory_space<vmem>>, vector<8x32xf32>
    %234 = arith.mulf %230, %233 : vector<8x32xf32>
    %235 = arith.mulf %229, %231 : vector<8x32xf32>
    %236 = arith.addf %234, %235 : vector<8x32xf32>
    %237 = math.tanh %236 : vector<8x32xf32>
    %238 = arith.mulf %232, %237 : vector<8x32xf32>
    %c0_137 = arith.constant 0 : index
    %c0_138 = arith.constant 0 : index
    %239 = vector.load %arg18[%c0_137, %c0_138] : memref<8x32xf32, #tpu.memory_space<vmem>>, vector<8x32xf32>
    tpu.vector_store %arg18[%c0_137, %c0_138], %236 {strides = array<i32>} : memref<8x32xf32, #tpu.memory_space<vmem>>, vector<8x32xf32>,
    %c0_139 = arith.constant 0 : index
    %c0_140 = arith.constant 0 : index
    %240 = vector.load %arg17[%c0_139, %c0_140] : memref<8x32xf32, #tpu.memory_space<vmem>>, vector<8x32xf32>
    tpu.vector_store %arg17[%c0_139, %c0_140], %238 {strides = array<i32>} : memref<8x32xf32, #tpu.memory_space<vmem>>, vector<8x32xf32>,
    %241 = arith.index_cast %c7_i32 : i32 to index
    %c0_141 = arith.constant 0 : index
    %c0_142 = arith.constant 0 : index
    %242 = vector.load %arg15[%241, %c0_141, %c0_142] : memref<8x8x32xf32, #tpu.memory_space<vmem>>, vector<1x8x32xf32>
    %243 = vector.shape_cast %242 : vector<1x8x32xf32> to vector<8x32xf32>
    %244 = vector.shape_cast %238 : vector<8x32xf32> to vector<1x8x32xf32>
    tpu.vector_store %arg15[%241, %c0_141, %c0_142], %244 {strides = array<i32>} : memref<8x8x32xf32, #tpu.memory_space<vmem>>, vector<1x8x32xf32>,
    %c8_i32 = arith.constant 8 : i32
    %c0_143 = arith.constant 0 : index
    %c0_144 = arith.constant 0 : index
    %c0_145 = arith.constant 0 : index
    %245 = vector.load %arg15[%c0_143, %c0_144, %c0_145] : memref<8x8x32xf32, #tpu.memory_space<vmem>>, vector<8x8x32xf32>
    %246 = vector.shape_cast %245 : vector<8x8x32xf32> to vector<64x32xf32>
    %c0_146 = arith.constant 0 : index
    %c0_147 = arith.constant 0 : index
    %247 = vector.load %arg4[%c0_146, %c0_147] : memref<32x128xf32, #tpu.memory_space<vmem>>, vector<32x128xf32>
    %cst_148 = arith.constant dense<0.000000e+00> : vector<64x128xf32>
    %248 = tpu.matmul %246, %247, %cst_148 {dimension_numbers = #tpu.dot_dimension_numbers<[1], [0], [0], [1], [0, 0, 1, 1], [], []>} : vector<64x32xf32>, vector<32x128xf32>, vector<64x128xf32> -> vector<64x128xf32>
    %c0_149 = arith.constant 0 : index
    %c0_150 = arith.constant 0 : index
    %249 = vector.load %arg6[%c0_149, %c0_150] : memref<1x128xf32, #tpu.memory_space<vmem>>, vector<1x128xf32>
    %250 = vector.broadcast %249 : vector<1x128xf32> to vector<64x128xf32>
    %251 = arith.addf %248, %250 : vector<64x128xf32>
    %252 = vector.shape_cast %251 : vector<64x128xf32> to vector<8x8x128xf32>
    %c0_151 = arith.constant 0 : index
    %c0_152 = arith.constant 0 : index
    %c0_153 = arith.constant 0 : index
    %253 = vector.load %arg16[%c0_151, %c0_152, %c0_153] : memref<8x8x128xf32, #tpu.memory_space<vmem>>, vector<8x8x128xf32>
    tpu.vector_store %arg16[%c0_151, %c0_152, %c0_153], %252 {strides = array<i32>} : memref<8x8x128xf32, #tpu.memory_space<vmem>>, vector<8x8x128xf32>,
    %cst_154 = arith.constant 0.000000e+00 : f32
    %254 = vector.broadcast %cst_154 : f32 to vector<8x32xf32>
    %c0_155 = arith.constant 0 : index
    %c0_156 = arith.constant 0 : index
    %255 = vector.load %arg17[%c0_155, %c0_156] : memref<8x32xf32, #tpu.memory_space<vmem>>, vector<8x32xf32>
    tpu.vector_store %arg17[%c0_155, %c0_156], %254 {strides = array<i32>} : memref<8x32xf32, #tpu.memory_space<vmem>>, vector<8x32xf32>,
    %cst_157 = arith.constant 0.000000e+00 : f32
    %256 = vector.broadcast %cst_157 : f32 to vector<8x32xf32>
    %c0_158 = arith.constant 0 : index
    %c0_159 = arith.constant 0 : index
    %257 = vector.load %arg18[%c0_158, %c0_159] : memref<8x32xf32, #tpu.memory_space<vmem>>, vector<8x32xf32>
    tpu.vector_store %arg18[%c0_158, %c0_159], %256 {strides = array<i32>} : memref<8x32xf32, #tpu.memory_space<vmem>>, vector<8x32xf32>,
    %c0_i32_160 = arith.constant 0 : i32
    %258 = arith.index_cast %c0_i32_160 : i32 to index
    %c0_161 = arith.constant 0 : index
    %c0_162 = arith.constant 0 : index
    %259 = vector.load %arg16[%258, %c0_161, %c0_162] : memref<8x8x128xf32, #tpu.memory_space<vmem>>, vector<1x8x128xf32>
    %260 = vector.shape_cast %259 : vector<1x8x128xf32> to vector<8x128xf32>
    %c0_163 = arith.constant 0 : index
    %c0_164 = arith.constant 0 : index
    %261 = vector.load %arg17[%c0_163, %c0_164] : memref<8x32xf32, #tpu.memory_space<vmem>>, vector<8x32xf32>
    %c0_165 = arith.constant 0 : index
    %c0_166 = arith.constant 0 : index
    %262 = vector.load %arg5[%c0_165, %c0_166] : memref<32x128xf32, #tpu.memory_space<vmem>>, vector<32x128xf32>
    %cst_167 = arith.constant dense<0.000000e+00> : vector<8x128xf32>
    %263 = tpu.matmul %261, %262, %cst_167 {dimension_numbers = #tpu.dot_dimension_numbers<[1], [0], [0], [1], [0, 0, 1, 1], [], []>} : vector<8x32xf32>, vector<32x128xf32>, vector<8x128xf32> -> vector<8x128xf32>
    %264 = arith.addf %260, %263 : vector<8x128xf32>
    %265 = arith.negf %264 : vector<8x128xf32>
    %266 = math.exp %265 : vector<8x128xf32>
    %cst_168 = arith.constant 1.000000e+00 : f32
    %267 = vector.broadcast %cst_168 : f32 to vector<8x128xf32>
    %268 = arith.addf %267, %266 : vector<8x128xf32>
    %269 = arith.divf %267, %268 : vector<8x128xf32>
    %270 = math.tanh %264 : vector<8x128xf32>
    %271 = vector.extract_strided_slice %269 {offsets = [0, 0], sizes = [8, 32], strides = [1, 1]} : vector<8x128xf32> to vector<8x32xf32>
    %272 = vector.extract_strided_slice %269 {offsets = [0, 32], sizes = [8, 32], strides = [1, 1]} : vector<8x128xf32> to vector<8x32xf32>
    %273 = vector.extract_strided_slice %270 {offsets = [0, 64], sizes = [8, 32], strides = [1, 1]} : vector<8x128xf32> to vector<8x32xf32>
    %274 = vector.extract_strided_slice %269 {offsets = [0, 96], sizes = [8, 32], strides = [1, 1]} : vector<8x128xf32> to vector<8x32xf32>
    %c0_169 = arith.constant 0 : index
    %c0_170 = arith.constant 0 : index
    %275 = vector.load %arg18[%c0_169, %c0_170] : memref<8x32xf32, #tpu.memory_space<vmem>>, vector<8x32xf32>
    %276 = arith.mulf %272, %275 : vector<8x32xf32>
    %277 = arith.mulf %271, %273 : vector<8x32xf32>
    %278 = arith.addf %276, %277 : vector<8x32xf32>
    %279 = math.tanh %278 : vector<8x32xf32>
    %280 = arith.mulf %274, %279 : vector<8x32xf32>
    %c0_171 = arith.constant 0 : index
    %c0_172 = arith.constant 0 : index
    %281 = vector.load %arg18[%c0_171, %c0_172] : memref<8x32xf32, #tpu.memory_space<vmem>>, vector<8x32xf32>
    tpu.vector_store %arg18[%c0_171, %c0_172], %278 {strides = array<i32>} : memref<8x32xf32, #tpu.memory_space<vmem>>, vector<8x32xf32>,
    %c0_173 = arith.constant 0 : index
    %c0_174 = arith.constant 0 : index
    %282 = vector.load %arg17[%c0_173, %c0_174] : memref<8x32xf32, #tpu.memory_space<vmem>>, vector<8x32xf32>
    tpu.vector_store %arg17[%c0_173, %c0_174], %280 {strides = array<i32>} : memref<8x32xf32, #tpu.memory_space<vmem>>, vector<8x32xf32>,
    %283 = arith.index_cast %c0_i32_160 : i32 to index
    %c0_175 = arith.constant 0 : index
    %c0_176 = arith.constant 0 : index
    %284 = vector.load %arg15[%283, %c0_175, %c0_176] : memref<8x8x32xf32, #tpu.memory_space<vmem>>, vector<1x8x32xf32>
    %285 = vector.shape_cast %284 : vector<1x8x32xf32> to vector<8x32xf32>
    %286 = vector.shape_cast %280 : vector<8x32xf32> to vector<1x8x32xf32>
    tpu.vector_store %arg15[%283, %c0_175, %c0_176], %286 {strides = array<i32>} : memref<8x8x32xf32, #tpu.memory_space<vmem>>, vector<1x8x32xf32>,
    %c1_i32_177 = arith.constant 1 : i32
    %287 = arith.index_cast %c1_i32_177 : i32 to index
    %c0_178 = arith.constant 0 : index
    %c0_179 = arith.constant 0 : index
    %288 = vector.load %arg16[%287, %c0_178, %c0_179] : memref<8x8x128xf32, #tpu.memory_space<vmem>>, vector<1x8x128xf32>
    %289 = vector.shape_cast %288 : vector<1x8x128xf32> to vector<8x128xf32>
    %c0_180 = arith.constant 0 : index
    %c0_181 = arith.constant 0 : index
    %290 = vector.load %arg17[%c0_180, %c0_181] : memref<8x32xf32, #tpu.memory_space<vmem>>, vector<8x32xf32>
    %c0_182 = arith.constant 0 : index
    %c0_183 = arith.constant 0 : index
    %291 = vector.load %arg5[%c0_182, %c0_183] : memref<32x128xf32, #tpu.memory_space<vmem>>, vector<32x128xf32>
    %cst_184 = arith.constant dense<0.000000e+00> : vector<8x128xf32>
    %292 = tpu.matmul %290, %291, %cst_184 {dimension_numbers = #tpu.dot_dimension_numbers<[1], [0], [0], [1], [0, 0, 1, 1], [], []>} : vector<8x32xf32>, vector<32x128xf32>, vector<8x128xf32> -> vector<8x128xf32>
    %293 = arith.addf %289, %292 : vector<8x128xf32>
    %294 = arith.negf %293 : vector<8x128xf32>
    %295 = math.exp %294 : vector<8x128xf32>
    %cst_185 = arith.constant 1.000000e+00 : f32
    %296 = vector.broadcast %cst_185 : f32 to vector<8x128xf32>
    %297 = arith.addf %296, %295 : vector<8x128xf32>
    %298 = arith.divf %296, %297 : vector<8x128xf32>
    %299 = math.tanh %293 : vector<8x128xf32>
    %300 = vector.extract_strided_slice %298 {offsets = [0, 0], sizes = [8, 32], strides = [1, 1]} : vector<8x128xf32> to vector<8x32xf32>
    %301 = vector.extract_strided_slice %298 {offsets = [0, 32], sizes = [8, 32], strides = [1, 1]} : vector<8x128xf32> to vector<8x32xf32>
    %302 = vector.extract_strided_slice %299 {offsets = [0, 64], sizes = [8, 32], strides = [1, 1]} : vector<8x128xf32> to vector<8x32xf32>
    %303 = vector.extract_strided_slice %298 {offsets = [0, 96], sizes = [8, 32], strides = [1, 1]} : vector<8x128xf32> to vector<8x32xf32>
    %c0_186 = arith.constant 0 : index
    %c0_187 = arith.constant 0 : index
    %304 = vector.load %arg18[%c0_186, %c0_187] : memref<8x32xf32, #tpu.memory_space<vmem>>, vector<8x32xf32>
    %305 = arith.mulf %301, %304 : vector<8x32xf32>
    %306 = arith.mulf %300, %302 : vector<8x32xf32>
    %307 = arith.addf %305, %306 : vector<8x32xf32>
    %308 = math.tanh %307 : vector<8x32xf32>
    %309 = arith.mulf %303, %308 : vector<8x32xf32>
    %c0_188 = arith.constant 0 : index
    %c0_189 = arith.constant 0 : index
    %310 = vector.load %arg18[%c0_188, %c0_189] : memref<8x32xf32, #tpu.memory_space<vmem>>, vector<8x32xf32>
    tpu.vector_store %arg18[%c0_188, %c0_189], %307 {strides = array<i32>} : memref<8x32xf32, #tpu.memory_space<vmem>>, vector<8x32xf32>,
    %c0_190 = arith.constant 0 : index
    %c0_191 = arith.constant 0 : index
    %311 = vector.load %arg17[%c0_190, %c0_191] : memref<8x32xf32, #tpu.memory_space<vmem>>, vector<8x32xf32>
    tpu.vector_store %arg17[%c0_190, %c0_191], %309 {strides = array<i32>} : memref<8x32xf32, #tpu.memory_space<vmem>>, vector<8x32xf32>,
    %312 = arith.index_cast %c1_i32_177 : i32 to index
    %c0_192 = arith.constant 0 : index
    %c0_193 = arith.constant 0 : index
    %313 = vector.load %arg15[%312, %c0_192, %c0_193] : memref<8x8x32xf32, #tpu.memory_space<vmem>>, vector<1x8x32xf32>
    %314 = vector.shape_cast %313 : vector<1x8x32xf32> to vector<8x32xf32>
    %315 = vector.shape_cast %309 : vector<8x32xf32> to vector<1x8x32xf32>
    tpu.vector_store %arg15[%312, %c0_192, %c0_193], %315 {strides = array<i32>} : memref<8x8x32xf32, #tpu.memory_space<vmem>>, vector<1x8x32xf32>,
    %c2_i32_194 = arith.constant 2 : i32
    %316 = arith.index_cast %c2_i32_194 : i32 to index
    %c0_195 = arith.constant 0 : index
    %c0_196 = arith.constant 0 : index
    %317 = vector.load %arg16[%316, %c0_195, %c0_196] : memref<8x8x128xf32, #tpu.memory_space<vmem>>, vector<1x8x128xf32>
    %318 = vector.shape_cast %317 : vector<1x8x128xf32> to vector<8x128xf32>
    %c0_197 = arith.constant 0 : index
    %c0_198 = arith.constant 0 : index
    %319 = vector.load %arg17[%c0_197, %c0_198] : memref<8x32xf32, #tpu.memory_space<vmem>>, vector<8x32xf32>
    %c0_199 = arith.constant 0 : index
    %c0_200 = arith.constant 0 : index
    %320 = vector.load %arg5[%c0_199, %c0_200] : memref<32x128xf32, #tpu.memory_space<vmem>>, vector<32x128xf32>
    %cst_201 = arith.constant dense<0.000000e+00> : vector<8x128xf32>
    %321 = tpu.matmul %319, %320, %cst_201 {dimension_numbers = #tpu.dot_dimension_numbers<[1], [0], [0], [1], [0, 0, 1, 1], [], []>} : vector<8x32xf32>, vector<32x128xf32>, vector<8x128xf32> -> vector<8x128xf32>
    %322 = arith.addf %318, %321 : vector<8x128xf32>
    %323 = arith.negf %322 : vector<8x128xf32>
    %324 = math.exp %323 : vector<8x128xf32>
    %cst_202 = arith.constant 1.000000e+00 : f32
    %325 = vector.broadcast %cst_202 : f32 to vector<8x128xf32>
    %326 = arith.addf %325, %324 : vector<8x128xf32>
    %327 = arith.divf %325, %326 : vector<8x128xf32>
    %328 = math.tanh %322 : vector<8x128xf32>
    %329 = vector.extract_strided_slice %327 {offsets = [0, 0], sizes = [8, 32], strides = [1, 1]} : vector<8x128xf32> to vector<8x32xf32>
    %330 = vector.extract_strided_slice %327 {offsets = [0, 32], sizes = [8, 32], strides = [1, 1]} : vector<8x128xf32> to vector<8x32xf32>
    %331 = vector.extract_strided_slice %328 {offsets = [0, 64], sizes = [8, 32], strides = [1, 1]} : vector<8x128xf32> to vector<8x32xf32>
    %332 = vector.extract_strided_slice %327 {offsets = [0, 96], sizes = [8, 32], strides = [1, 1]} : vector<8x128xf32> to vector<8x32xf32>
    %c0_203 = arith.constant 0 : index
    %c0_204 = arith.constant 0 : index
    %333 = vector.load %arg18[%c0_203, %c0_204] : memref<8x32xf32, #tpu.memory_space<vmem>>, vector<8x32xf32>
    %334 = arith.mulf %330, %333 : vector<8x32xf32>
    %335 = arith.mulf %329, %331 : vector<8x32xf32>
    %336 = arith.addf %334, %335 : vector<8x32xf32>
    %337 = math.tanh %336 : vector<8x32xf32>
    %338 = arith.mulf %332, %337 : vector<8x32xf32>
    %c0_205 = arith.constant 0 : index
    %c0_206 = arith.constant 0 : index
    %339 = vector.load %arg18[%c0_205, %c0_206] : memref<8x32xf32, #tpu.memory_space<vmem>>, vector<8x32xf32>
    tpu.vector_store %arg18[%c0_205, %c0_206], %336 {strides = array<i32>} : memref<8x32xf32, #tpu.memory_space<vmem>>, vector<8x32xf32>,
    %c0_207 = arith.constant 0 : index
    %c0_208 = arith.constant 0 : index
    %340 = vector.load %arg17[%c0_207, %c0_208] : memref<8x32xf32, #tpu.memory_space<vmem>>, vector<8x32xf32>
    tpu.vector_store %arg17[%c0_207, %c0_208], %338 {strides = array<i32>} : memref<8x32xf32, #tpu.memory_space<vmem>>, vector<8x32xf32>,
    %341 = arith.index_cast %c2_i32_194 : i32 to index
    %c0_209 = arith.constant 0 : index
    %c0_210 = arith.constant 0 : index
    %342 = vector.load %arg15[%341, %c0_209, %c0_210] : memref<8x8x32xf32, #tpu.memory_space<vmem>>, vector<1x8x32xf32>
    %343 = vector.shape_cast %342 : vector<1x8x32xf32> to vector<8x32xf32>
    %344 = vector.shape_cast %338 : vector<8x32xf32> to vector<1x8x32xf32>
    tpu.vector_store %arg15[%341, %c0_209, %c0_210], %344 {strides = array<i32>} : memref<8x8x32xf32, #tpu.memory_space<vmem>>, vector<1x8x32xf32>,
    %c3_i32_211 = arith.constant 3 : i32
    %345 = arith.index_cast %c3_i32_211 : i32 to index
    %c0_212 = arith.constant 0 : index
    %c0_213 = arith.constant 0 : index
    %346 = vector.load %arg16[%345, %c0_212, %c0_213] : memref<8x8x128xf32, #tpu.memory_space<vmem>>, vector<1x8x128xf32>
    %347 = vector.shape_cast %346 : vector<1x8x128xf32> to vector<8x128xf32>
    %c0_214 = arith.constant 0 : index
    %c0_215 = arith.constant 0 : index
    %348 = vector.load %arg17[%c0_214, %c0_215] : memref<8x32xf32, #tpu.memory_space<vmem>>, vector<8x32xf32>
    %c0_216 = arith.constant 0 : index
    %c0_217 = arith.constant 0 : index
    %349 = vector.load %arg5[%c0_216, %c0_217] : memref<32x128xf32, #tpu.memory_space<vmem>>, vector<32x128xf32>
    %cst_218 = arith.constant dense<0.000000e+00> : vector<8x128xf32>
    %350 = tpu.matmul %348, %349, %cst_218 {dimension_numbers = #tpu.dot_dimension_numbers<[1], [0], [0], [1], [0, 0, 1, 1], [], []>} : vector<8x32xf32>, vector<32x128xf32>, vector<8x128xf32> -> vector<8x128xf32>
    %351 = arith.addf %347, %350 : vector<8x128xf32>
    %352 = arith.negf %351 : vector<8x128xf32>
    %353 = math.exp %352 : vector<8x128xf32>
    %cst_219 = arith.constant 1.000000e+00 : f32
    %354 = vector.broadcast %cst_219 : f32 to vector<8x128xf32>
    %355 = arith.addf %354, %353 : vector<8x128xf32>
    %356 = arith.divf %354, %355 : vector<8x128xf32>
    %357 = math.tanh %351 : vector<8x128xf32>
    %358 = vector.extract_strided_slice %356 {offsets = [0, 0], sizes = [8, 32], strides = [1, 1]} : vector<8x128xf32> to vector<8x32xf32>
    %359 = vector.extract_strided_slice %356 {offsets = [0, 32], sizes = [8, 32], strides = [1, 1]} : vector<8x128xf32> to vector<8x32xf32>
    %360 = vector.extract_strided_slice %357 {offsets = [0, 64], sizes = [8, 32], strides = [1, 1]} : vector<8x128xf32> to vector<8x32xf32>
    %361 = vector.extract_strided_slice %356 {offsets = [0, 96], sizes = [8, 32], strides = [1, 1]} : vector<8x128xf32> to vector<8x32xf32>
    %c0_220 = arith.constant 0 : index
    %c0_221 = arith.constant 0 : index
    %362 = vector.load %arg18[%c0_220, %c0_221] : memref<8x32xf32, #tpu.memory_space<vmem>>, vector<8x32xf32>
    %363 = arith.mulf %359, %362 : vector<8x32xf32>
    %364 = arith.mulf %358, %360 : vector<8x32xf32>
    %365 = arith.addf %363, %364 : vector<8x32xf32>
    %366 = math.tanh %365 : vector<8x32xf32>
    %367 = arith.mulf %361, %366 : vector<8x32xf32>
    %c0_222 = arith.constant 0 : index
    %c0_223 = arith.constant 0 : index
    %368 = vector.load %arg18[%c0_222, %c0_223] : memref<8x32xf32, #tpu.memory_space<vmem>>, vector<8x32xf32>
    tpu.vector_store %arg18[%c0_222, %c0_223], %365 {strides = array<i32>} : memref<8x32xf32, #tpu.memory_space<vmem>>, vector<8x32xf32>,
    %c0_224 = arith.constant 0 : index
    %c0_225 = arith.constant 0 : index
    %369 = vector.load %arg17[%c0_224, %c0_225] : memref<8x32xf32, #tpu.memory_space<vmem>>, vector<8x32xf32>
    tpu.vector_store %arg17[%c0_224, %c0_225], %367 {strides = array<i32>} : memref<8x32xf32, #tpu.memory_space<vmem>>, vector<8x32xf32>,
    %370 = arith.index_cast %c3_i32_211 : i32 to index
    %c0_226 = arith.constant 0 : index
    %c0_227 = arith.constant 0 : index
    %371 = vector.load %arg15[%370, %c0_226, %c0_227] : memref<8x8x32xf32, #tpu.memory_space<vmem>>, vector<1x8x32xf32>
    %372 = vector.shape_cast %371 : vector<1x8x32xf32> to vector<8x32xf32>
    %373 = vector.shape_cast %367 : vector<8x32xf32> to vector<1x8x32xf32>
    tpu.vector_store %arg15[%370, %c0_226, %c0_227], %373 {strides = array<i32>} : memref<8x8x32xf32, #tpu.memory_space<vmem>>, vector<1x8x32xf32>,
    %c4_i32_228 = arith.constant 4 : i32
    %374 = arith.index_cast %c4_i32_228 : i32 to index
    %c0_229 = arith.constant 0 : index
    %c0_230 = arith.constant 0 : index
    %375 = vector.load %arg16[%374, %c0_229, %c0_230] : memref<8x8x128xf32, #tpu.memory_space<vmem>>, vector<1x8x128xf32>
    %376 = vector.shape_cast %375 : vector<1x8x128xf32> to vector<8x128xf32>
    %c0_231 = arith.constant 0 : index
    %c0_232 = arith.constant 0 : index
    %377 = vector.load %arg17[%c0_231, %c0_232] : memref<8x32xf32, #tpu.memory_space<vmem>>, vector<8x32xf32>
    %c0_233 = arith.constant 0 : index
    %c0_234 = arith.constant 0 : index
    %378 = vector.load %arg5[%c0_233, %c0_234] : memref<32x128xf32, #tpu.memory_space<vmem>>, vector<32x128xf32>
    %cst_235 = arith.constant dense<0.000000e+00> : vector<8x128xf32>
    %379 = tpu.matmul %377, %378, %cst_235 {dimension_numbers = #tpu.dot_dimension_numbers<[1], [0], [0], [1], [0, 0, 1, 1], [], []>} : vector<8x32xf32>, vector<32x128xf32>, vector<8x128xf32> -> vector<8x128xf32>
    %380 = arith.addf %376, %379 : vector<8x128xf32>
    %381 = arith.negf %380 : vector<8x128xf32>
    %382 = math.exp %381 : vector<8x128xf32>
    %cst_236 = arith.constant 1.000000e+00 : f32
    %383 = vector.broadcast %cst_236 : f32 to vector<8x128xf32>
    %384 = arith.addf %383, %382 : vector<8x128xf32>
    %385 = arith.divf %383, %384 : vector<8x128xf32>
    %386 = math.tanh %380 : vector<8x128xf32>
    %387 = vector.extract_strided_slice %385 {offsets = [0, 0], sizes = [8, 32], strides = [1, 1]} : vector<8x128xf32> to vector<8x32xf32>
    %388 = vector.extract_strided_slice %385 {offsets = [0, 32], sizes = [8, 32], strides = [1, 1]} : vector<8x128xf32> to vector<8x32xf32>
    %389 = vector.extract_strided_slice %386 {offsets = [0, 64], sizes = [8, 32], strides = [1, 1]} : vector<8x128xf32> to vector<8x32xf32>
    %390 = vector.extract_strided_slice %385 {offsets = [0, 96], sizes = [8, 32], strides = [1, 1]} : vector<8x128xf32> to vector<8x32xf32>
    %c0_237 = arith.constant 0 : index
    %c0_238 = arith.constant 0 : index
    %391 = vector.load %arg18[%c0_237, %c0_238] : memref<8x32xf32, #tpu.memory_space<vmem>>, vector<8x32xf32>
    %392 = arith.mulf %388, %391 : vector<8x32xf32>
    %393 = arith.mulf %387, %389 : vector<8x32xf32>
    %394 = arith.addf %392, %393 : vector<8x32xf32>
    %395 = math.tanh %394 : vector<8x32xf32>
    %396 = arith.mulf %390, %395 : vector<8x32xf32>
    %c0_239 = arith.constant 0 : index
    %c0_240 = arith.constant 0 : index
    %397 = vector.load %arg18[%c0_239, %c0_240] : memref<8x32xf32, #tpu.memory_space<vmem>>, vector<8x32xf32>
    tpu.vector_store %arg18[%c0_239, %c0_240], %394 {strides = array<i32>} : memref<8x32xf32, #tpu.memory_space<vmem>>, vector<8x32xf32>,
    %c0_241 = arith.constant 0 : index
    %c0_242 = arith.constant 0 : index
    %398 = vector.load %arg17[%c0_241, %c0_242] : memref<8x32xf32, #tpu.memory_space<vmem>>, vector<8x32xf32>
    tpu.vector_store %arg17[%c0_241, %c0_242], %396 {strides = array<i32>} : memref<8x32xf32, #tpu.memory_space<vmem>>, vector<8x32xf32>,
    %399 = arith.index_cast %c4_i32_228 : i32 to index
    %c0_243 = arith.constant 0 : index
    %c0_244 = arith.constant 0 : index
    %400 = vector.load %arg15[%399, %c0_243, %c0_244] : memref<8x8x32xf32, #tpu.memory_space<vmem>>, vector<1x8x32xf32>
    %401 = vector.shape_cast %400 : vector<1x8x32xf32> to vector<8x32xf32>
    %402 = vector.shape_cast %396 : vector<8x32xf32> to vector<1x8x32xf32>
    tpu.vector_store %arg15[%399, %c0_243, %c0_244], %402 {strides = array<i32>} : memref<8x8x32xf32, #tpu.memory_space<vmem>>, vector<1x8x32xf32>,
    %c5_i32_245 = arith.constant 5 : i32
    %403 = arith.index_cast %c5_i32_245 : i32 to index
    %c0_246 = arith.constant 0 : index
    %c0_247 = arith.constant 0 : index
    %404 = vector.load %arg16[%403, %c0_246, %c0_247] : memref<8x8x128xf32, #tpu.memory_space<vmem>>, vector<1x8x128xf32>
    %405 = vector.shape_cast %404 : vector<1x8x128xf32> to vector<8x128xf32>
    %c0_248 = arith.constant 0 : index
    %c0_249 = arith.constant 0 : index
    %406 = vector.load %arg17[%c0_248, %c0_249] : memref<8x32xf32, #tpu.memory_space<vmem>>, vector<8x32xf32>
    %c0_250 = arith.constant 0 : index
    %c0_251 = arith.constant 0 : index
    %407 = vector.load %arg5[%c0_250, %c0_251] : memref<32x128xf32, #tpu.memory_space<vmem>>, vector<32x128xf32>
    %cst_252 = arith.constant dense<0.000000e+00> : vector<8x128xf32>
    %408 = tpu.matmul %406, %407, %cst_252 {dimension_numbers = #tpu.dot_dimension_numbers<[1], [0], [0], [1], [0, 0, 1, 1], [], []>} : vector<8x32xf32>, vector<32x128xf32>, vector<8x128xf32> -> vector<8x128xf32>
    %409 = arith.addf %405, %408 : vector<8x128xf32>
    %410 = arith.negf %409 : vector<8x128xf32>
    %411 = math.exp %410 : vector<8x128xf32>
    %cst_253 = arith.constant 1.000000e+00 : f32
    %412 = vector.broadcast %cst_253 : f32 to vector<8x128xf32>
    %413 = arith.addf %412, %411 : vector<8x128xf32>
    %414 = arith.divf %412, %413 : vector<8x128xf32>
    %415 = math.tanh %409 : vector<8x128xf32>
    %416 = vector.extract_strided_slice %414 {offsets = [0, 0], sizes = [8, 32], strides = [1, 1]} : vector<8x128xf32> to vector<8x32xf32>
    %417 = vector.extract_strided_slice %414 {offsets = [0, 32], sizes = [8, 32], strides = [1, 1]} : vector<8x128xf32> to vector<8x32xf32>
    %418 = vector.extract_strided_slice %415 {offsets = [0, 64], sizes = [8, 32], strides = [1, 1]} : vector<8x128xf32> to vector<8x32xf32>
    %419 = vector.extract_strided_slice %414 {offsets = [0, 96], sizes = [8, 32], strides = [1, 1]} : vector<8x128xf32> to vector<8x32xf32>
    %c0_254 = arith.constant 0 : index
    %c0_255 = arith.constant 0 : index
    %420 = vector.load %arg18[%c0_254, %c0_255] : memref<8x32xf32, #tpu.memory_space<vmem>>, vector<8x32xf32>
    %421 = arith.mulf %417, %420 : vector<8x32xf32>
    %422 = arith.mulf %416, %418 : vector<8x32xf32>
    %423 = arith.addf %421, %422 : vector<8x32xf32>
    %424 = math.tanh %423 : vector<8x32xf32>
    %425 = arith.mulf %419, %424 : vector<8x32xf32>
    %c0_256 = arith.constant 0 : index
    %c0_257 = arith.constant 0 : index
    %426 = vector.load %arg18[%c0_256, %c0_257] : memref<8x32xf32, #tpu.memory_space<vmem>>, vector<8x32xf32>
    tpu.vector_store %arg18[%c0_256, %c0_257], %423 {strides = array<i32>} : memref<8x32xf32, #tpu.memory_space<vmem>>, vector<8x32xf32>,
    %c0_258 = arith.constant 0 : index
    %c0_259 = arith.constant 0 : index
    %427 = vector.load %arg17[%c0_258, %c0_259] : memref<8x32xf32, #tpu.memory_space<vmem>>, vector<8x32xf32>
    tpu.vector_store %arg17[%c0_258, %c0_259], %425 {strides = array<i32>} : memref<8x32xf32, #tpu.memory_space<vmem>>, vector<8x32xf32>,
    %428 = arith.index_cast %c5_i32_245 : i32 to index
    %c0_260 = arith.constant 0 : index
    %c0_261 = arith.constant 0 : index
    %429 = vector.load %arg15[%428, %c0_260, %c0_261] : memref<8x8x32xf32, #tpu.memory_space<vmem>>, vector<1x8x32xf32>
    %430 = vector.shape_cast %429 : vector<1x8x32xf32> to vector<8x32xf32>
    %431 = vector.shape_cast %425 : vector<8x32xf32> to vector<1x8x32xf32>
    tpu.vector_store %arg15[%428, %c0_260, %c0_261], %431 {strides = array<i32>} : memref<8x8x32xf32, #tpu.memory_space<vmem>>, vector<1x8x32xf32>,
    %c6_i32_262 = arith.constant 6 : i32
    %432 = arith.index_cast %c6_i32_262 : i32 to index
    %c0_263 = arith.constant 0 : index
    %c0_264 = arith.constant 0 : index
    %433 = vector.load %arg16[%432, %c0_263, %c0_264] : memref<8x8x128xf32, #tpu.memory_space<vmem>>, vector<1x8x128xf32>
    %434 = vector.shape_cast %433 : vector<1x8x128xf32> to vector<8x128xf32>
    %c0_265 = arith.constant 0 : index
    %c0_266 = arith.constant 0 : index
    %435 = vector.load %arg17[%c0_265, %c0_266] : memref<8x32xf32, #tpu.memory_space<vmem>>, vector<8x32xf32>
    %c0_267 = arith.constant 0 : index
    %c0_268 = arith.constant 0 : index
    %436 = vector.load %arg5[%c0_267, %c0_268] : memref<32x128xf32, #tpu.memory_space<vmem>>, vector<32x128xf32>
    %cst_269 = arith.constant dense<0.000000e+00> : vector<8x128xf32>
    %437 = tpu.matmul %435, %436, %cst_269 {dimension_numbers = #tpu.dot_dimension_numbers<[1], [0], [0], [1], [0, 0, 1, 1], [], []>} : vector<8x32xf32>, vector<32x128xf32>, vector<8x128xf32> -> vector<8x128xf32>
    %438 = arith.addf %434, %437 : vector<8x128xf32>
    %439 = arith.negf %438 : vector<8x128xf32>
    %440 = math.exp %439 : vector<8x128xf32>
    %cst_270 = arith.constant 1.000000e+00 : f32
    %441 = vector.broadcast %cst_270 : f32 to vector<8x128xf32>
    %442 = arith.addf %441, %440 : vector<8x128xf32>
    %443 = arith.divf %441, %442 : vector<8x128xf32>
    %444 = math.tanh %438 : vector<8x128xf32>
    %445 = vector.extract_strided_slice %443 {offsets = [0, 0], sizes = [8, 32], strides = [1, 1]} : vector<8x128xf32> to vector<8x32xf32>
    %446 = vector.extract_strided_slice %443 {offsets = [0, 32], sizes = [8, 32], strides = [1, 1]} : vector<8x128xf32> to vector<8x32xf32>
    %447 = vector.extract_strided_slice %444 {offsets = [0, 64], sizes = [8, 32], strides = [1, 1]} : vector<8x128xf32> to vector<8x32xf32>
    %448 = vector.extract_strided_slice %443 {offsets = [0, 96], sizes = [8, 32], strides = [1, 1]} : vector<8x128xf32> to vector<8x32xf32>
    %c0_271 = arith.constant 0 : index
    %c0_272 = arith.constant 0 : index
    %449 = vector.load %arg18[%c0_271, %c0_272] : memref<8x32xf32, #tpu.memory_space<vmem>>, vector<8x32xf32>
    %450 = arith.mulf %446, %449 : vector<8x32xf32>
    %451 = arith.mulf %445, %447 : vector<8x32xf32>
    %452 = arith.addf %450, %451 : vector<8x32xf32>
    %453 = math.tanh %452 : vector<8x32xf32>
    %454 = arith.mulf %448, %453 : vector<8x32xf32>
    %c0_273 = arith.constant 0 : index
    %c0_274 = arith.constant 0 : index
    %455 = vector.load %arg18[%c0_273, %c0_274] : memref<8x32xf32, #tpu.memory_space<vmem>>, vector<8x32xf32>
    tpu.vector_store %arg18[%c0_273, %c0_274], %452 {strides = array<i32>} : memref<8x32xf32, #tpu.memory_space<vmem>>, vector<8x32xf32>,
    %c0_275 = arith.constant 0 : index
    %c0_276 = arith.constant 0 : index
    %456 = vector.load %arg17[%c0_275, %c0_276] : memref<8x32xf32, #tpu.memory_space<vmem>>, vector<8x32xf32>
    tpu.vector_store %arg17[%c0_275, %c0_276], %454 {strides = array<i32>} : memref<8x32xf32, #tpu.memory_space<vmem>>, vector<8x32xf32>,
    %457 = arith.index_cast %c6_i32_262 : i32 to index
    %c0_277 = arith.constant 0 : index
    %c0_278 = arith.constant 0 : index
    %458 = vector.load %arg15[%457, %c0_277, %c0_278] : memref<8x8x32xf32, #tpu.memory_space<vmem>>, vector<1x8x32xf32>
    %459 = vector.shape_cast %458 : vector<1x8x32xf32> to vector<8x32xf32>
    %460 = vector.shape_cast %454 : vector<8x32xf32> to vector<1x8x32xf32>
    tpu.vector_store %arg15[%457, %c0_277, %c0_278], %460 {strides = array<i32>} : memref<8x8x32xf32, #tpu.memory_space<vmem>>, vector<1x8x32xf32>,
    %c7_i32_279 = arith.constant 7 : i32
    %461 = arith.index_cast %c7_i32_279 : i32 to index
    %c0_280 = arith.constant 0 : index
    %c0_281 = arith.constant 0 : index
    %462 = vector.load %arg16[%461, %c0_280, %c0_281] : memref<8x8x128xf32, #tpu.memory_space<vmem>>, vector<1x8x128xf32>
    %463 = vector.shape_cast %462 : vector<1x8x128xf32> to vector<8x128xf32>
    %c0_282 = arith.constant 0 : index
    %c0_283 = arith.constant 0 : index
    %464 = vector.load %arg17[%c0_282, %c0_283] : memref<8x32xf32, #tpu.memory_space<vmem>>, vector<8x32xf32>
    %c0_284 = arith.constant 0 : index
    %c0_285 = arith.constant 0 : index
    %465 = vector.load %arg5[%c0_284, %c0_285] : memref<32x128xf32, #tpu.memory_space<vmem>>, vector<32x128xf32>
    %cst_286 = arith.constant dense<0.000000e+00> : vector<8x128xf32>
    %466 = tpu.matmul %464, %465, %cst_286 {dimension_numbers = #tpu.dot_dimension_numbers<[1], [0], [0], [1], [0, 0, 1, 1], [], []>} : vector<8x32xf32>, vector<32x128xf32>, vector<8x128xf32> -> vector<8x128xf32>
    %467 = arith.addf %463, %466 : vector<8x128xf32>
    %468 = arith.negf %467 : vector<8x128xf32>
    %469 = math.exp %468 : vector<8x128xf32>
    %cst_287 = arith.constant 1.000000e+00 : f32
    %470 = vector.broadcast %cst_287 : f32 to vector<8x128xf32>
    %471 = arith.addf %470, %469 : vector<8x128xf32>
    %472 = arith.divf %470, %471 : vector<8x128xf32>
    %473 = math.tanh %467 : vector<8x128xf32>
    %474 = vector.extract_strided_slice %472 {offsets = [0, 0], sizes = [8, 32], strides = [1, 1]} : vector<8x128xf32> to vector<8x32xf32>
    %475 = vector.extract_strided_slice %472 {offsets = [0, 32], sizes = [8, 32], strides = [1, 1]} : vector<8x128xf32> to vector<8x32xf32>
    %476 = vector.extract_strided_slice %473 {offsets = [0, 64], sizes = [8, 32], strides = [1, 1]} : vector<8x128xf32> to vector<8x32xf32>
    %477 = vector.extract_strided_slice %472 {offsets = [0, 96], sizes = [8, 32], strides = [1, 1]} : vector<8x128xf32> to vector<8x32xf32>
    %c0_288 = arith.constant 0 : index
    %c0_289 = arith.constant 0 : index
    %478 = vector.load %arg18[%c0_288, %c0_289] : memref<8x32xf32, #tpu.memory_space<vmem>>, vector<8x32xf32>
    %479 = arith.mulf %475, %478 : vector<8x32xf32>
    %480 = arith.mulf %474, %476 : vector<8x32xf32>
    %481 = arith.addf %479, %480 : vector<8x32xf32>
    %482 = math.tanh %481 : vector<8x32xf32>
    %483 = arith.mulf %477, %482 : vector<8x32xf32>
    %c0_290 = arith.constant 0 : index
    %c0_291 = arith.constant 0 : index
    %484 = vector.load %arg18[%c0_290, %c0_291] : memref<8x32xf32, #tpu.memory_space<vmem>>, vector<8x32xf32>
    tpu.vector_store %arg18[%c0_290, %c0_291], %481 {strides = array<i32>} : memref<8x32xf32, #tpu.memory_space<vmem>>, vector<8x32xf32>,
    %c0_292 = arith.constant 0 : index
    %c0_293 = arith.constant 0 : index
    %485 = vector.load %arg17[%c0_292, %c0_293] : memref<8x32xf32, #tpu.memory_space<vmem>>, vector<8x32xf32>
    tpu.vector_store %arg17[%c0_292, %c0_293], %483 {strides = array<i32>} : memref<8x32xf32, #tpu.memory_space<vmem>>, vector<8x32xf32>,
    %486 = arith.index_cast %c7_i32_279 : i32 to index
    %c0_294 = arith.constant 0 : index
    %c0_295 = arith.constant 0 : index
    %487 = vector.load %arg15[%486, %c0_294, %c0_295] : memref<8x8x32xf32, #tpu.memory_space<vmem>>, vector<1x8x32xf32>
    %488 = vector.shape_cast %487 : vector<1x8x32xf32> to vector<8x32xf32>
    %489 = vector.shape_cast %483 : vector<8x32xf32> to vector<1x8x32xf32>
    tpu.vector_store %arg15[%486, %c0_294, %c0_295], %489 {strides = array<i32>} : memref<8x8x32xf32, #tpu.memory_space<vmem>>, vector<1x8x32xf32>,
    %c8_i32_296 = arith.constant 8 : i32
    %c0_297 = arith.constant 0 : index
    %c0_298 = arith.constant 0 : index
    %c0_299 = arith.constant 0 : index
    %490 = vector.load %arg15[%c0_297, %c0_298, %c0_299] : memref<8x8x32xf32, #tpu.memory_space<vmem>>, vector<8x8x32xf32>
    %491 = vector.shape_cast %490 : vector<8x8x32xf32> to vector<64x32xf32>
    %c0_300 = arith.constant 0 : index
    %c0_301 = arith.constant 0 : index
    %492 = vector.load %arg7[%c0_300, %c0_301] : memref<32x128xf32, #tpu.memory_space<vmem>>, vector<32x128xf32>
    %cst_302 = arith.constant dense<0.000000e+00> : vector<64x128xf32>
    %493 = tpu.matmul %491, %492, %cst_302 {dimension_numbers = #tpu.dot_dimension_numbers<[1], [0], [0], [1], [0, 0, 1, 1], [], []>} : vector<64x32xf32>, vector<32x128xf32>, vector<64x128xf32> -> vector<64x128xf32>
    %c0_303 = arith.constant 0 : index
    %c0_304 = arith.constant 0 : index
    %494 = vector.load %arg9[%c0_303, %c0_304] : memref<1x128xf32, #tpu.memory_space<vmem>>, vector<1x128xf32>
    %495 = vector.broadcast %494 : vector<1x128xf32> to vector<64x128xf32>
    %496 = arith.addf %493, %495 : vector<64x128xf32>
    %497 = vector.shape_cast %496 : vector<64x128xf32> to vector<8x8x128xf32>
    %c0_305 = arith.constant 0 : index
    %c0_306 = arith.constant 0 : index
    %c0_307 = arith.constant 0 : index
    %498 = vector.load %arg16[%c0_305, %c0_306, %c0_307] : memref<8x8x128xf32, #tpu.memory_space<vmem>>, vector<8x8x128xf32>
    tpu.vector_store %arg16[%c0_305, %c0_306, %c0_307], %497 {strides = array<i32>} : memref<8x8x128xf32, #tpu.memory_space<vmem>>, vector<8x8x128xf32>,
    %cst_308 = arith.constant 0.000000e+00 : f32
    %499 = vector.broadcast %cst_308 : f32 to vector<8x32xf32>
    %c0_309 = arith.constant 0 : index
    %c0_310 = arith.constant 0 : index
    %500 = vector.load %arg17[%c0_309, %c0_310] : memref<8x32xf32, #tpu.memory_space<vmem>>, vector<8x32xf32>
    tpu.vector_store %arg17[%c0_309, %c0_310], %499 {strides = array<i32>} : memref<8x32xf32, #tpu.memory_space<vmem>>, vector<8x32xf32>,
    %cst_311 = arith.constant 0.000000e+00 : f32
    %501 = vector.broadcast %cst_311 : f32 to vector<8x32xf32>
    %c0_312 = arith.constant 0 : index
    %c0_313 = arith.constant 0 : index
    %502 = vector.load %arg18[%c0_312, %c0_313] : memref<8x32xf32, #tpu.memory_space<vmem>>, vector<8x32xf32>
    tpu.vector_store %arg18[%c0_312, %c0_313], %501 {strides = array<i32>} : memref<8x32xf32, #tpu.memory_space<vmem>>, vector<8x32xf32>,
    %c0_i32_314 = arith.constant 0 : i32
    %503 = arith.index_cast %c0_i32_314 : i32 to index
    %c0_315 = arith.constant 0 : index
    %c0_316 = arith.constant 0 : index
    %504 = vector.load %arg16[%503, %c0_315, %c0_316] : memref<8x8x128xf32, #tpu.memory_space<vmem>>, vector<1x8x128xf32>
    %505 = vector.shape_cast %504 : vector<1x8x128xf32> to vector<8x128xf32>
    %c0_317 = arith.constant 0 : index
    %c0_318 = arith.constant 0 : index
    %506 = vector.load %arg17[%c0_317, %c0_318] : memref<8x32xf32, #tpu.memory_space<vmem>>, vector<8x32xf32>
    %c0_319 = arith.constant 0 : index
    %c0_320 = arith.constant 0 : index
    %507 = vector.load %arg8[%c0_319, %c0_320] : memref<32x128xf32, #tpu.memory_space<vmem>>, vector<32x128xf32>
    %cst_321 = arith.constant dense<0.000000e+00> : vector<8x128xf32>
    %508 = tpu.matmul %506, %507, %cst_321 {dimension_numbers = #tpu.dot_dimension_numbers<[1], [0], [0], [1], [0, 0, 1, 1], [], []>} : vector<8x32xf32>, vector<32x128xf32>, vector<8x128xf32> -> vector<8x128xf32>
    %509 = arith.addf %505, %508 : vector<8x128xf32>
    %510 = arith.negf %509 : vector<8x128xf32>
    %511 = math.exp %510 : vector<8x128xf32>
    %cst_322 = arith.constant 1.000000e+00 : f32
    %512 = vector.broadcast %cst_322 : f32 to vector<8x128xf32>
    %513 = arith.addf %512, %511 : vector<8x128xf32>
    %514 = arith.divf %512, %513 : vector<8x128xf32>
    %515 = math.tanh %509 : vector<8x128xf32>
    %516 = vector.extract_strided_slice %514 {offsets = [0, 0], sizes = [8, 32], strides = [1, 1]} : vector<8x128xf32> to vector<8x32xf32>
    %517 = vector.extract_strided_slice %514 {offsets = [0, 32], sizes = [8, 32], strides = [1, 1]} : vector<8x128xf32> to vector<8x32xf32>
    %518 = vector.extract_strided_slice %515 {offsets = [0, 64], sizes = [8, 32], strides = [1, 1]} : vector<8x128xf32> to vector<8x32xf32>
    %519 = vector.extract_strided_slice %514 {offsets = [0, 96], sizes = [8, 32], strides = [1, 1]} : vector<8x128xf32> to vector<8x32xf32>
    %c0_323 = arith.constant 0 : index
    %c0_324 = arith.constant 0 : index
    %520 = vector.load %arg18[%c0_323, %c0_324] : memref<8x32xf32, #tpu.memory_space<vmem>>, vector<8x32xf32>
    %521 = arith.mulf %517, %520 : vector<8x32xf32>
    %522 = arith.mulf %516, %518 : vector<8x32xf32>
    %523 = arith.addf %521, %522 : vector<8x32xf32>
    %524 = math.tanh %523 : vector<8x32xf32>
    %525 = arith.mulf %519, %524 : vector<8x32xf32>
    %c0_325 = arith.constant 0 : index
    %c0_326 = arith.constant 0 : index
    %526 = vector.load %arg18[%c0_325, %c0_326] : memref<8x32xf32, #tpu.memory_space<vmem>>, vector<8x32xf32>
    tpu.vector_store %arg18[%c0_325, %c0_326], %523 {strides = array<i32>} : memref<8x32xf32, #tpu.memory_space<vmem>>, vector<8x32xf32>,
    %c0_327 = arith.constant 0 : index
    %c0_328 = arith.constant 0 : index
    %527 = vector.load %arg17[%c0_327, %c0_328] : memref<8x32xf32, #tpu.memory_space<vmem>>, vector<8x32xf32>
    tpu.vector_store %arg17[%c0_327, %c0_328], %525 {strides = array<i32>} : memref<8x32xf32, #tpu.memory_space<vmem>>, vector<8x32xf32>,
    %c1_i32_329 = arith.constant 1 : i32
    %528 = arith.index_cast %c1_i32_329 : i32 to index
    %c0_330 = arith.constant 0 : index
    %c0_331 = arith.constant 0 : index
    %529 = vector.load %arg16[%528, %c0_330, %c0_331] : memref<8x8x128xf32, #tpu.memory_space<vmem>>, vector<1x8x128xf32>
    %530 = vector.shape_cast %529 : vector<1x8x128xf32> to vector<8x128xf32>
    %c0_332 = arith.constant 0 : index
    %c0_333 = arith.constant 0 : index
    %531 = vector.load %arg17[%c0_332, %c0_333] : memref<8x32xf32, #tpu.memory_space<vmem>>, vector<8x32xf32>
    %c0_334 = arith.constant 0 : index
    %c0_335 = arith.constant 0 : index
    %532 = vector.load %arg8[%c0_334, %c0_335] : memref<32x128xf32, #tpu.memory_space<vmem>>, vector<32x128xf32>
    %cst_336 = arith.constant dense<0.000000e+00> : vector<8x128xf32>
    %533 = tpu.matmul %531, %532, %cst_336 {dimension_numbers = #tpu.dot_dimension_numbers<[1], [0], [0], [1], [0, 0, 1, 1], [], []>} : vector<8x32xf32>, vector<32x128xf32>, vector<8x128xf32> -> vector<8x128xf32>
    %534 = arith.addf %530, %533 : vector<8x128xf32>
    %535 = arith.negf %534 : vector<8x128xf32>
    %536 = math.exp %535 : vector<8x128xf32>
    %cst_337 = arith.constant 1.000000e+00 : f32
    %537 = vector.broadcast %cst_337 : f32 to vector<8x128xf32>
    %538 = arith.addf %537, %536 : vector<8x128xf32>
    %539 = arith.divf %537, %538 : vector<8x128xf32>
    %540 = math.tanh %534 : vector<8x128xf32>
    %541 = vector.extract_strided_slice %539 {offsets = [0, 0], sizes = [8, 32], strides = [1, 1]} : vector<8x128xf32> to vector<8x32xf32>
    %542 = vector.extract_strided_slice %539 {offsets = [0, 32], sizes = [8, 32], strides = [1, 1]} : vector<8x128xf32> to vector<8x32xf32>
    %543 = vector.extract_strided_slice %540 {offsets = [0, 64], sizes = [8, 32], strides = [1, 1]} : vector<8x128xf32> to vector<8x32xf32>
    %544 = vector.extract_strided_slice %539 {offsets = [0, 96], sizes = [8, 32], strides = [1, 1]} : vector<8x128xf32> to vector<8x32xf32>
    %c0_338 = arith.constant 0 : index
    %c0_339 = arith.constant 0 : index
    %545 = vector.load %arg18[%c0_338, %c0_339] : memref<8x32xf32, #tpu.memory_space<vmem>>, vector<8x32xf32>
    %546 = arith.mulf %542, %545 : vector<8x32xf32>
    %547 = arith.mulf %541, %543 : vector<8x32xf32>
    %548 = arith.addf %546, %547 : vector<8x32xf32>
    %549 = math.tanh %548 : vector<8x32xf32>
    %550 = arith.mulf %544, %549 : vector<8x32xf32>
    %c0_340 = arith.constant 0 : index
    %c0_341 = arith.constant 0 : index
    %551 = vector.load %arg18[%c0_340, %c0_341] : memref<8x32xf32, #tpu.memory_space<vmem>>, vector<8x32xf32>
    tpu.vector_store %arg18[%c0_340, %c0_341], %548 {strides = array<i32>} : memref<8x32xf32, #tpu.memory_space<vmem>>, vector<8x32xf32>,
    %c0_342 = arith.constant 0 : index
    %c0_343 = arith.constant 0 : index
    %552 = vector.load %arg17[%c0_342, %c0_343] : memref<8x32xf32, #tpu.memory_space<vmem>>, vector<8x32xf32>
    tpu.vector_store %arg17[%c0_342, %c0_343], %550 {strides = array<i32>} : memref<8x32xf32, #tpu.memory_space<vmem>>, vector<8x32xf32>,
    %c2_i32_344 = arith.constant 2 : i32
    %553 = arith.index_cast %c2_i32_344 : i32 to index
    %c0_345 = arith.constant 0 : index
    %c0_346 = arith.constant 0 : index
    %554 = vector.load %arg16[%553, %c0_345, %c0_346] : memref<8x8x128xf32, #tpu.memory_space<vmem>>, vector<1x8x128xf32>
    %555 = vector.shape_cast %554 : vector<1x8x128xf32> to vector<8x128xf32>
    %c0_347 = arith.constant 0 : index
    %c0_348 = arith.constant 0 : index
    %556 = vector.load %arg17[%c0_347, %c0_348] : memref<8x32xf32, #tpu.memory_space<vmem>>, vector<8x32xf32>
    %c0_349 = arith.constant 0 : index
    %c0_350 = arith.constant 0 : index
    %557 = vector.load %arg8[%c0_349, %c0_350] : memref<32x128xf32, #tpu.memory_space<vmem>>, vector<32x128xf32>
    %cst_351 = arith.constant dense<0.000000e+00> : vector<8x128xf32>
    %558 = tpu.matmul %556, %557, %cst_351 {dimension_numbers = #tpu.dot_dimension_numbers<[1], [0], [0], [1], [0, 0, 1, 1], [], []>} : vector<8x32xf32>, vector<32x128xf32>, vector<8x128xf32> -> vector<8x128xf32>
    %559 = arith.addf %555, %558 : vector<8x128xf32>
    %560 = arith.negf %559 : vector<8x128xf32>
    %561 = math.exp %560 : vector<8x128xf32>
    %cst_352 = arith.constant 1.000000e+00 : f32
    %562 = vector.broadcast %cst_352 : f32 to vector<8x128xf32>
    %563 = arith.addf %562, %561 : vector<8x128xf32>
    %564 = arith.divf %562, %563 : vector<8x128xf32>
    %565 = math.tanh %559 : vector<8x128xf32>
    %566 = vector.extract_strided_slice %564 {offsets = [0, 0], sizes = [8, 32], strides = [1, 1]} : vector<8x128xf32> to vector<8x32xf32>
    %567 = vector.extract_strided_slice %564 {offsets = [0, 32], sizes = [8, 32], strides = [1, 1]} : vector<8x128xf32> to vector<8x32xf32>
    %568 = vector.extract_strided_slice %565 {offsets = [0, 64], sizes = [8, 32], strides = [1, 1]} : vector<8x128xf32> to vector<8x32xf32>
    %569 = vector.extract_strided_slice %564 {offsets = [0, 96], sizes = [8, 32], strides = [1, 1]} : vector<8x128xf32> to vector<8x32xf32>
    %c0_353 = arith.constant 0 : index
    %c0_354 = arith.constant 0 : index
    %570 = vector.load %arg18[%c0_353, %c0_354] : memref<8x32xf32, #tpu.memory_space<vmem>>, vector<8x32xf32>
    %571 = arith.mulf %567, %570 : vector<8x32xf32>
    %572 = arith.mulf %566, %568 : vector<8x32xf32>
    %573 = arith.addf %571, %572 : vector<8x32xf32>
    %574 = math.tanh %573 : vector<8x32xf32>
    %575 = arith.mulf %569, %574 : vector<8x32xf32>
    %c0_355 = arith.constant 0 : index
    %c0_356 = arith.constant 0 : index
    %576 = vector.load %arg18[%c0_355, %c0_356] : memref<8x32xf32, #tpu.memory_space<vmem>>, vector<8x32xf32>
    tpu.vector_store %arg18[%c0_355, %c0_356], %573 {strides = array<i32>} : memref<8x32xf32, #tpu.memory_space<vmem>>, vector<8x32xf32>,
    %c0_357 = arith.constant 0 : index
    %c0_358 = arith.constant 0 : index
    %577 = vector.load %arg17[%c0_357, %c0_358] : memref<8x32xf32, #tpu.memory_space<vmem>>, vector<8x32xf32>
    tpu.vector_store %arg17[%c0_357, %c0_358], %575 {strides = array<i32>} : memref<8x32xf32, #tpu.memory_space<vmem>>, vector<8x32xf32>,
    %c3_i32_359 = arith.constant 3 : i32
    %578 = arith.index_cast %c3_i32_359 : i32 to index
    %c0_360 = arith.constant 0 : index
    %c0_361 = arith.constant 0 : index
    %579 = vector.load %arg16[%578, %c0_360, %c0_361] : memref<8x8x128xf32, #tpu.memory_space<vmem>>, vector<1x8x128xf32>
    %580 = vector.shape_cast %579 : vector<1x8x128xf32> to vector<8x128xf32>
    %c0_362 = arith.constant 0 : index
    %c0_363 = arith.constant 0 : index
    %581 = vector.load %arg17[%c0_362, %c0_363] : memref<8x32xf32, #tpu.memory_space<vmem>>, vector<8x32xf32>
    %c0_364 = arith.constant 0 : index
    %c0_365 = arith.constant 0 : index
    %582 = vector.load %arg8[%c0_364, %c0_365] : memref<32x128xf32, #tpu.memory_space<vmem>>, vector<32x128xf32>
    %cst_366 = arith.constant dense<0.000000e+00> : vector<8x128xf32>
    %583 = tpu.matmul %581, %582, %cst_366 {dimension_numbers = #tpu.dot_dimension_numbers<[1], [0], [0], [1], [0, 0, 1, 1], [], []>} : vector<8x32xf32>, vector<32x128xf32>, vector<8x128xf32> -> vector<8x128xf32>
    %584 = arith.addf %580, %583 : vector<8x128xf32>
    %585 = arith.negf %584 : vector<8x128xf32>
    %586 = math.exp %585 : vector<8x128xf32>
    %cst_367 = arith.constant 1.000000e+00 : f32
    %587 = vector.broadcast %cst_367 : f32 to vector<8x128xf32>
    %588 = arith.addf %587, %586 : vector<8x128xf32>
    %589 = arith.divf %587, %588 : vector<8x128xf32>
    %590 = math.tanh %584 : vector<8x128xf32>
    %591 = vector.extract_strided_slice %589 {offsets = [0, 0], sizes = [8, 32], strides = [1, 1]} : vector<8x128xf32> to vector<8x32xf32>
    %592 = vector.extract_strided_slice %589 {offsets = [0, 32], sizes = [8, 32], strides = [1, 1]} : vector<8x128xf32> to vector<8x32xf32>
    %593 = vector.extract_strided_slice %590 {offsets = [0, 64], sizes = [8, 32], strides = [1, 1]} : vector<8x128xf32> to vector<8x32xf32>
    %594 = vector.extract_strided_slice %589 {offsets = [0, 96], sizes = [8, 32], strides = [1, 1]} : vector<8x128xf32> to vector<8x32xf32>
    %c0_368 = arith.constant 0 : index
    %c0_369 = arith.constant 0 : index
    %595 = vector.load %arg18[%c0_368, %c0_369] : memref<8x32xf32, #tpu.memory_space<vmem>>, vector<8x32xf32>
    %596 = arith.mulf %592, %595 : vector<8x32xf32>
    %597 = arith.mulf %591, %593 : vector<8x32xf32>
    %598 = arith.addf %596, %597 : vector<8x32xf32>
    %599 = math.tanh %598 : vector<8x32xf32>
    %600 = arith.mulf %594, %599 : vector<8x32xf32>
    %c0_370 = arith.constant 0 : index
    %c0_371 = arith.constant 0 : index
    %601 = vector.load %arg18[%c0_370, %c0_371] : memref<8x32xf32, #tpu.memory_space<vmem>>, vector<8x32xf32>
    tpu.vector_store %arg18[%c0_370, %c0_371], %598 {strides = array<i32>} : memref<8x32xf32, #tpu.memory_space<vmem>>, vector<8x32xf32>,
    %c0_372 = arith.constant 0 : index
    %c0_373 = arith.constant 0 : index
    %602 = vector.load %arg17[%c0_372, %c0_373] : memref<8x32xf32, #tpu.memory_space<vmem>>, vector<8x32xf32>
    tpu.vector_store %arg17[%c0_372, %c0_373], %600 {strides = array<i32>} : memref<8x32xf32, #tpu.memory_space<vmem>>, vector<8x32xf32>,
    %c4_i32_374 = arith.constant 4 : i32
    %603 = arith.index_cast %c4_i32_374 : i32 to index
    %c0_375 = arith.constant 0 : index
    %c0_376 = arith.constant 0 : index
    %604 = vector.load %arg16[%603, %c0_375, %c0_376] : memref<8x8x128xf32, #tpu.memory_space<vmem>>, vector<1x8x128xf32>
    %605 = vector.shape_cast %604 : vector<1x8x128xf32> to vector<8x128xf32>
    %c0_377 = arith.constant 0 : index
    %c0_378 = arith.constant 0 : index
    %606 = vector.load %arg17[%c0_377, %c0_378] : memref<8x32xf32, #tpu.memory_space<vmem>>, vector<8x32xf32>
    %c0_379 = arith.constant 0 : index
    %c0_380 = arith.constant 0 : index
    %607 = vector.load %arg8[%c0_379, %c0_380] : memref<32x128xf32, #tpu.memory_space<vmem>>, vector<32x128xf32>
    %cst_381 = arith.constant dense<0.000000e+00> : vector<8x128xf32>
    %608 = tpu.matmul %606, %607, %cst_381 {dimension_numbers = #tpu.dot_dimension_numbers<[1], [0], [0], [1], [0, 0, 1, 1], [], []>} : vector<8x32xf32>, vector<32x128xf32>, vector<8x128xf32> -> vector<8x128xf32>
    %609 = arith.addf %605, %608 : vector<8x128xf32>
    %610 = arith.negf %609 : vector<8x128xf32>
    %611 = math.exp %610 : vector<8x128xf32>
    %cst_382 = arith.constant 1.000000e+00 : f32
    %612 = vector.broadcast %cst_382 : f32 to vector<8x128xf32>
    %613 = arith.addf %612, %611 : vector<8x128xf32>
    %614 = arith.divf %612, %613 : vector<8x128xf32>
    %615 = math.tanh %609 : vector<8x128xf32>
    %616 = vector.extract_strided_slice %614 {offsets = [0, 0], sizes = [8, 32], strides = [1, 1]} : vector<8x128xf32> to vector<8x32xf32>
    %617 = vector.extract_strided_slice %614 {offsets = [0, 32], sizes = [8, 32], strides = [1, 1]} : vector<8x128xf32> to vector<8x32xf32>
    %618 = vector.extract_strided_slice %615 {offsets = [0, 64], sizes = [8, 32], strides = [1, 1]} : vector<8x128xf32> to vector<8x32xf32>
    %619 = vector.extract_strided_slice %614 {offsets = [0, 96], sizes = [8, 32], strides = [1, 1]} : vector<8x128xf32> to vector<8x32xf32>
    %c0_383 = arith.constant 0 : index
    %c0_384 = arith.constant 0 : index
    %620 = vector.load %arg18[%c0_383, %c0_384] : memref<8x32xf32, #tpu.memory_space<vmem>>, vector<8x32xf32>
    %621 = arith.mulf %617, %620 : vector<8x32xf32>
    %622 = arith.mulf %616, %618 : vector<8x32xf32>
    %623 = arith.addf %621, %622 : vector<8x32xf32>
    %624 = math.tanh %623 : vector<8x32xf32>
    %625 = arith.mulf %619, %624 : vector<8x32xf32>
    %c0_385 = arith.constant 0 : index
    %c0_386 = arith.constant 0 : index
    %626 = vector.load %arg18[%c0_385, %c0_386] : memref<8x32xf32, #tpu.memory_space<vmem>>, vector<8x32xf32>
    tpu.vector_store %arg18[%c0_385, %c0_386], %623 {strides = array<i32>} : memref<8x32xf32, #tpu.memory_space<vmem>>, vector<8x32xf32>,
    %c0_387 = arith.constant 0 : index
    %c0_388 = arith.constant 0 : index
    %627 = vector.load %arg17[%c0_387, %c0_388] : memref<8x32xf32, #tpu.memory_space<vmem>>, vector<8x32xf32>
    tpu.vector_store %arg17[%c0_387, %c0_388], %625 {strides = array<i32>} : memref<8x32xf32, #tpu.memory_space<vmem>>, vector<8x32xf32>,
    %c5_i32_389 = arith.constant 5 : i32
    %628 = arith.index_cast %c5_i32_389 : i32 to index
    %c0_390 = arith.constant 0 : index
    %c0_391 = arith.constant 0 : index
    %629 = vector.load %arg16[%628, %c0_390, %c0_391] : memref<8x8x128xf32, #tpu.memory_space<vmem>>, vector<1x8x128xf32>
    %630 = vector.shape_cast %629 : vector<1x8x128xf32> to vector<8x128xf32>
    %c0_392 = arith.constant 0 : index
    %c0_393 = arith.constant 0 : index
    %631 = vector.load %arg17[%c0_392, %c0_393] : memref<8x32xf32, #tpu.memory_space<vmem>>, vector<8x32xf32>
    %c0_394 = arith.constant 0 : index
    %c0_395 = arith.constant 0 : index
    %632 = vector.load %arg8[%c0_394, %c0_395] : memref<32x128xf32, #tpu.memory_space<vmem>>, vector<32x128xf32>
    %cst_396 = arith.constant dense<0.000000e+00> : vector<8x128xf32>
    %633 = tpu.matmul %631, %632, %cst_396 {dimension_numbers = #tpu.dot_dimension_numbers<[1], [0], [0], [1], [0, 0, 1, 1], [], []>} : vector<8x32xf32>, vector<32x128xf32>, vector<8x128xf32> -> vector<8x128xf32>
    %634 = arith.addf %630, %633 : vector<8x128xf32>
    %635 = arith.negf %634 : vector<8x128xf32>
    %636 = math.exp %635 : vector<8x128xf32>
    %cst_397 = arith.constant 1.000000e+00 : f32
    %637 = vector.broadcast %cst_397 : f32 to vector<8x128xf32>
    %638 = arith.addf %637, %636 : vector<8x128xf32>
    %639 = arith.divf %637, %638 : vector<8x128xf32>
    %640 = math.tanh %634 : vector<8x128xf32>
    %641 = vector.extract_strided_slice %639 {offsets = [0, 0], sizes = [8, 32], strides = [1, 1]} : vector<8x128xf32> to vector<8x32xf32>
    %642 = vector.extract_strided_slice %639 {offsets = [0, 32], sizes = [8, 32], strides = [1, 1]} : vector<8x128xf32> to vector<8x32xf32>
    %643 = vector.extract_strided_slice %640 {offsets = [0, 64], sizes = [8, 32], strides = [1, 1]} : vector<8x128xf32> to vector<8x32xf32>
    %644 = vector.extract_strided_slice %639 {offsets = [0, 96], sizes = [8, 32], strides = [1, 1]} : vector<8x128xf32> to vector<8x32xf32>
    %c0_398 = arith.constant 0 : index
    %c0_399 = arith.constant 0 : index
    %645 = vector.load %arg18[%c0_398, %c0_399] : memref<8x32xf32, #tpu.memory_space<vmem>>, vector<8x32xf32>
    %646 = arith.mulf %642, %645 : vector<8x32xf32>
    %647 = arith.mulf %641, %643 : vector<8x32xf32>
    %648 = arith.addf %646, %647 : vector<8x32xf32>
    %649 = math.tanh %648 : vector<8x32xf32>
    %650 = arith.mulf %644, %649 : vector<8x32xf32>
    %c0_400 = arith.constant 0 : index
    %c0_401 = arith.constant 0 : index
    %651 = vector.load %arg18[%c0_400, %c0_401] : memref<8x32xf32, #tpu.memory_space<vmem>>, vector<8x32xf32>
    tpu.vector_store %arg18[%c0_400, %c0_401], %648 {strides = array<i32>} : memref<8x32xf32, #tpu.memory_space<vmem>>, vector<8x32xf32>,
    %c0_402 = arith.constant 0 : index
    %c0_403 = arith.constant 0 : index
    %652 = vector.load %arg17[%c0_402, %c0_403] : memref<8x32xf32, #tpu.memory_space<vmem>>, vector<8x32xf32>
    tpu.vector_store %arg17[%c0_402, %c0_403], %650 {strides = array<i32>} : memref<8x32xf32, #tpu.memory_space<vmem>>, vector<8x32xf32>,
    %c6_i32_404 = arith.constant 6 : i32
    %653 = arith.index_cast %c6_i32_404 : i32 to index
    %c0_405 = arith.constant 0 : index
    %c0_406 = arith.constant 0 : index
    %654 = vector.load %arg16[%653, %c0_405, %c0_406] : memref<8x8x128xf32, #tpu.memory_space<vmem>>, vector<1x8x128xf32>
    %655 = vector.shape_cast %654 : vector<1x8x128xf32> to vector<8x128xf32>
    %c0_407 = arith.constant 0 : index
    %c0_408 = arith.constant 0 : index
    %656 = vector.load %arg17[%c0_407, %c0_408] : memref<8x32xf32, #tpu.memory_space<vmem>>, vector<8x32xf32>
    %c0_409 = arith.constant 0 : index
    %c0_410 = arith.constant 0 : index
    %657 = vector.load %arg8[%c0_409, %c0_410] : memref<32x128xf32, #tpu.memory_space<vmem>>, vector<32x128xf32>
    %cst_411 = arith.constant dense<0.000000e+00> : vector<8x128xf32>
    %658 = tpu.matmul %656, %657, %cst_411 {dimension_numbers = #tpu.dot_dimension_numbers<[1], [0], [0], [1], [0, 0, 1, 1], [], []>} : vector<8x32xf32>, vector<32x128xf32>, vector<8x128xf32> -> vector<8x128xf32>
    %659 = arith.addf %655, %658 : vector<8x128xf32>
    %660 = arith.negf %659 : vector<8x128xf32>
    %661 = math.exp %660 : vector<8x128xf32>
    %cst_412 = arith.constant 1.000000e+00 : f32
    %662 = vector.broadcast %cst_412 : f32 to vector<8x128xf32>
    %663 = arith.addf %662, %661 : vector<8x128xf32>
    %664 = arith.divf %662, %663 : vector<8x128xf32>
    %665 = math.tanh %659 : vector<8x128xf32>
    %666 = vector.extract_strided_slice %664 {offsets = [0, 0], sizes = [8, 32], strides = [1, 1]} : vector<8x128xf32> to vector<8x32xf32>
    %667 = vector.extract_strided_slice %664 {offsets = [0, 32], sizes = [8, 32], strides = [1, 1]} : vector<8x128xf32> to vector<8x32xf32>
    %668 = vector.extract_strided_slice %665 {offsets = [0, 64], sizes = [8, 32], strides = [1, 1]} : vector<8x128xf32> to vector<8x32xf32>
    %669 = vector.extract_strided_slice %664 {offsets = [0, 96], sizes = [8, 32], strides = [1, 1]} : vector<8x128xf32> to vector<8x32xf32>
    %c0_413 = arith.constant 0 : index
    %c0_414 = arith.constant 0 : index
    %670 = vector.load %arg18[%c0_413, %c0_414] : memref<8x32xf32, #tpu.memory_space<vmem>>, vector<8x32xf32>
    %671 = arith.mulf %667, %670 : vector<8x32xf32>
    %672 = arith.mulf %666, %668 : vector<8x32xf32>
    %673 = arith.addf %671, %672 : vector<8x32xf32>
    %674 = math.tanh %673 : vector<8x32xf32>
    %675 = arith.mulf %669, %674 : vector<8x32xf32>
    %c0_415 = arith.constant 0 : index
    %c0_416 = arith.constant 0 : index
    %676 = vector.load %arg18[%c0_415, %c0_416] : memref<8x32xf32, #tpu.memory_space<vmem>>, vector<8x32xf32>
    tpu.vector_store %arg18[%c0_415, %c0_416], %673 {strides = array<i32>} : memref<8x32xf32, #tpu.memory_space<vmem>>, vector<8x32xf32>,
    %c0_417 = arith.constant 0 : index
    %c0_418 = arith.constant 0 : index
    %677 = vector.load %arg17[%c0_417, %c0_418] : memref<8x32xf32, #tpu.memory_space<vmem>>, vector<8x32xf32>
    tpu.vector_store %arg17[%c0_417, %c0_418], %675 {strides = array<i32>} : memref<8x32xf32, #tpu.memory_space<vmem>>, vector<8x32xf32>,
    %c7_i32_419 = arith.constant 7 : i32
    %678 = arith.index_cast %c7_i32_419 : i32 to index
    %c0_420 = arith.constant 0 : index
    %c0_421 = arith.constant 0 : index
    %679 = vector.load %arg16[%678, %c0_420, %c0_421] : memref<8x8x128xf32, #tpu.memory_space<vmem>>, vector<1x8x128xf32>
    %680 = vector.shape_cast %679 : vector<1x8x128xf32> to vector<8x128xf32>
    %c0_422 = arith.constant 0 : index
    %c0_423 = arith.constant 0 : index
    %681 = vector.load %arg17[%c0_422, %c0_423] : memref<8x32xf32, #tpu.memory_space<vmem>>, vector<8x32xf32>
    %c0_424 = arith.constant 0 : index
    %c0_425 = arith.constant 0 : index
    %682 = vector.load %arg8[%c0_424, %c0_425] : memref<32x128xf32, #tpu.memory_space<vmem>>, vector<32x128xf32>
    %cst_426 = arith.constant dense<0.000000e+00> : vector<8x128xf32>
    %683 = tpu.matmul %681, %682, %cst_426 {dimension_numbers = #tpu.dot_dimension_numbers<[1], [0], [0], [1], [0, 0, 1, 1], [], []>} : vector<8x32xf32>, vector<32x128xf32>, vector<8x128xf32> -> vector<8x128xf32>
    %684 = arith.addf %680, %683 : vector<8x128xf32>
    %685 = arith.negf %684 : vector<8x128xf32>
    %686 = math.exp %685 : vector<8x128xf32>
    %cst_427 = arith.constant 1.000000e+00 : f32
    %687 = vector.broadcast %cst_427 : f32 to vector<8x128xf32>
    %688 = arith.addf %687, %686 : vector<8x128xf32>
    %689 = arith.divf %687, %688 : vector<8x128xf32>
    %690 = math.tanh %684 : vector<8x128xf32>
    %691 = vector.extract_strided_slice %689 {offsets = [0, 0], sizes = [8, 32], strides = [1, 1]} : vector<8x128xf32> to vector<8x32xf32>
    %692 = vector.extract_strided_slice %689 {offsets = [0, 32], sizes = [8, 32], strides = [1, 1]} : vector<8x128xf32> to vector<8x32xf32>
    %693 = vector.extract_strided_slice %690 {offsets = [0, 64], sizes = [8, 32], strides = [1, 1]} : vector<8x128xf32> to vector<8x32xf32>
    %694 = vector.extract_strided_slice %689 {offsets = [0, 96], sizes = [8, 32], strides = [1, 1]} : vector<8x128xf32> to vector<8x32xf32>
    %c0_428 = arith.constant 0 : index
    %c0_429 = arith.constant 0 : index
    %695 = vector.load %arg18[%c0_428, %c0_429] : memref<8x32xf32, #tpu.memory_space<vmem>>, vector<8x32xf32>
    %696 = arith.mulf %692, %695 : vector<8x32xf32>
    %697 = arith.mulf %691, %693 : vector<8x32xf32>
    %698 = arith.addf %696, %697 : vector<8x32xf32>
    %699 = math.tanh %698 : vector<8x32xf32>
    %700 = arith.mulf %694, %699 : vector<8x32xf32>
    %c0_430 = arith.constant 0 : index
    %c0_431 = arith.constant 0 : index
    %701 = vector.load %arg18[%c0_430, %c0_431] : memref<8x32xf32, #tpu.memory_space<vmem>>, vector<8x32xf32>
    tpu.vector_store %arg18[%c0_430, %c0_431], %698 {strides = array<i32>} : memref<8x32xf32, #tpu.memory_space<vmem>>, vector<8x32xf32>,
    %c0_432 = arith.constant 0 : index
    %c0_433 = arith.constant 0 : index
    %702 = vector.load %arg17[%c0_432, %c0_433] : memref<8x32xf32, #tpu.memory_space<vmem>>, vector<8x32xf32>
    tpu.vector_store %arg17[%c0_432, %c0_433], %700 {strides = array<i32>} : memref<8x32xf32, #tpu.memory_space<vmem>>, vector<8x32xf32>,
    %c8_i32_434 = arith.constant 8 : i32
    %c0_435 = arith.constant 0 : index
    %c0_436 = arith.constant 0 : index
    %703 = vector.load %arg17[%c0_435, %c0_436] : memref<8x32xf32, #tpu.memory_space<vmem>>, vector<8x32xf32>
    %cst_437 = arith.constant dense<0.000000e+00> : vector<8xf32>
    %704 = vector.multi_reduction <add>, %703, %cst_437 [1] : vector<8x32xf32> to vector<8xf32>
    %705 = vector.shape_cast %704 : vector<8xf32> to vector<8x1xf32>
    %cst_438 = arith.constant 3.200000e+01 : f32
    %706 = vector.broadcast %cst_438 : f32 to vector<8x1xf32>
    %707 = arith.divf %705, %706 : vector<8x1xf32>
    %708 = vector.broadcast %707 : vector<8x1xf32> to vector<8x32xf32>
    %709 = arith.subf %703, %708 : vector<8x32xf32>
    %710 = arith.mulf %709, %709 : vector<8x32xf32>
    %cst_439 = arith.constant dense<0.000000e+00> : vector<8xf32>
    %711 = vector.multi_reduction <add>, %710, %cst_439 [1] : vector<8x32xf32> to vector<8xf32>
    %712 = vector.shape_cast %711 : vector<8xf32> to vector<8x1xf32>
    %cst_440 = arith.constant 3.200000e+01 : f32
    %713 = vector.broadcast %cst_440 : f32 to vector<8x1xf32>
    %714 = arith.divf %712, %713 : vector<8x1xf32>
    %715 = vector.broadcast %707 : vector<8x1xf32> to vector<8x32xf32>
    %716 = arith.subf %703, %715 : vector<8x32xf32>
    %cst_441 = arith.constant 9.99999974E-6 : f32
    %717 = vector.broadcast %cst_441 : f32 to vector<8x1xf32>
    %718 = arith.addf %714, %717 : vector<8x1xf32>
    %719 = math.rsqrt %718 : vector<8x1xf32>
    %720 = vector.broadcast %719 : vector<8x1xf32> to vector<8x32xf32>
    %721 = arith.mulf %716, %720 : vector<8x32xf32>
    %c0_442 = arith.constant 0 : index
    %c0_443 = arith.constant 0 : index
    %722 = vector.load %arg10[%c0_442, %c0_443] : memref<1x32xf32, #tpu.memory_space<vmem>>, vector<1x32xf32>
    %723 = vector.broadcast %722 : vector<1x32xf32> to vector<8x32xf32>
    %724 = arith.mulf %721, %723 : vector<8x32xf32>
    %c0_444 = arith.constant 0 : index
    %c0_445 = arith.constant 0 : index
    %725 = vector.load %arg11[%c0_444, %c0_445] : memref<1x32xf32, #tpu.memory_space<vmem>>, vector<1x32xf32>
    %726 = vector.broadcast %725 : vector<1x32xf32> to vector<8x32xf32>
    %727 = arith.addf %724, %726 : vector<8x32xf32>
    %c0_446 = arith.constant 0 : index
    %c0_447 = arith.constant 0 : index
    %728 = vector.load %arg12[%c0_446, %c0_447] : memref<1x32xf32, #tpu.memory_space<vmem>>, vector<1x32xf32>
    %729 = vector.broadcast %728 : vector<1x32xf32> to vector<8x32xf32>
    %730 = arith.mulf %727, %729 : vector<8x32xf32>
    %cst_448 = arith.constant dense<0.000000e+00> : vector<8xf32>
    %731 = vector.multi_reduction <add>, %730, %cst_448 [1] : vector<8x32xf32> to vector<8xf32>
    %732 = vector.shape_cast %731 : vector<8xf32> to vector<8x1xf32>
    %c0_449 = arith.constant 0 : index
    %c0_450 = arith.constant 0 : index
    %733 = vector.load %arg13[%c0_449, %c0_450] : memref<1x1xf32, #tpu.memory_space<vmem>>, vector<1x1xf32>
    %734 = vector.broadcast %733 : vector<1x1xf32> to vector<8x1xf32>
    %735 = arith.addf %732, %734 : vector<8x1xf32>
    %c0_451 = arith.constant 0 : index
    %c0_452 = arith.constant 0 : index
    %736 = vector.load %arg14[%c0_451, %c0_452] : memref<8x1xf32, #tpu.memory_space<vmem>>, vector<8x1xf32>
    tpu.vector_store %arg14[%c0_451, %c0_452], %735 {strides = array<i32>} : memref<8x1xf32, #tpu.memory_space<vmem>>, vector<8x1xf32>,
    return
  }
}

</mosaic_0001>

<llo_original>
// kernel: tpu_custom_call.1
$region0: #{tpu_custom_call.1}
  #allocation0 [shape = 'u32[]', space=smem, size = 0x4, offset = 0x4, fixed_abs, tag = 'smem constant byte address 0x4 - core index']
  #allocation1 [shape = 'u32[144,128]{1,0:T(1,128)}', space=vmem, size = 0x12000, scoped, tag = 'internal scratch']
  #allocation2 [shape = 'f32[8,8,32]{2,1,0:T(8,128)}', space=vmem, size = 0x8000, scoped, tag = 'scratch operand']
  #allocation3 [shape = 'f32[8,8,128]{2,1,0:T(8,128)}', space=vmem, size = 0x8000, scoped, tag = 'scratch operand']
  #allocation4 [shape = 'f32[8,32]{1,0:T(8,128)}', space=vmem, size = 0x1000, scoped, tag = 'scratch operand']
  #allocation5 [shape = 'f32[8,32]{1,0:T(8,128)}', space=vmem, size = 0x1000, scoped, tag = 'scratch operand']
  #allocation6 [shape = 'f32[1,1]{1,0:T(1,128)S(1)}', space=vmem, size = 0x200, scoped, tag = 'scoped memory for tpu_custom_call.1']
  %s0 = inlined_call_operand.hbm [shape: f32[8,8,16], index: 0, kind: input, shape index: {}]
  %s1 = inlined_call_operand.hbm [shape: f32[16,128], index: 1, kind: input, shape index: {}]
  %s2 = inlined_call_operand.hbm [shape: f32[32,128], index: 2, kind: input, shape index: {}]
  %s3 = inlined_call_operand.vmem [shape: f32[1,128], index: 3, kind: input, shape index: {}]
  %s4 = inlined_call_operand.hbm [shape: f32[32,128], index: 4, kind: input, shape index: {}]
  %s5 = inlined_call_operand.hbm [shape: f32[32,128], index: 5, kind: input, shape index: {}]
  %s6 = inlined_call_operand.vmem [shape: f32[1,128], index: 6, kind: input, shape index: {}]
  %s7 = inlined_call_operand.hbm [shape: f32[32,128], index: 7, kind: input, shape index: {}]
  %s8 = inlined_call_operand.vmem [shape: f32[32,128], index: 8, kind: input, shape index: {}]
  %s9 = inlined_call_operand.vmem [shape: f32[1,128], index: 9, kind: input, shape index: {}]
  %s10 = inlined_call_operand.vmem [shape: f32[1,32], index: 10, kind: input, shape index: {}]
  %s11 = inlined_call_operand.vmem [shape: f32[1,32], index: 11, kind: input, shape index: {}]
  %s12 = inlined_call_operand.vmem [shape: f32[1,32], index: 12, kind: input, shape index: {}]
  %s13 = inlined_call_operand.<no memory space> [shape: f32[1,1], index: 13, kind: input, shape index: {}]
  %s14 = inlined_call_operand.vmem [shape: f32[8,1], index: 14, kind: output, shape index: {}]
  %s15 = sld [smem:[#allocation0]]
  $region90: #{tpu_custom_call.1} parent=0
    _
  %s17 = ssub.s32 1, %s15
  %s18 = scalar_select 0, %s17, %s15
  %v19 = vstv %s13
  %20 = vst [vmem:[#allocation6] sm:$0x1] %v19
  $region1: #{tpu_custom_call.1} parent=0
    #allocation7 [shape = 'u8[32768]{0}', space=vmem, size = 0x8000, scoped, tag = 'input window, operand 0, single buffered']
    #allocation8 [shape = 's32[1]{0}', space=sflag, size = 0x4, scoped, tag = 'scoped memory for tpu_custom_call.1']
    #allocation9 [shape = 'u8[8192]{0}', space=vmem, size = 0x2000, scoped, tag = 'input window, operand 1, single buffered']
    #allocation10 [shape = 's32[1]{0}', space=sflag, size = 0x4, scoped, tag = 'scoped memory for tpu_custom_call.1']
    #allocation11 [shape = 'u8[16384]{0}', space=vmem, size = 0x4000, scoped, tag = 'input window, operand 2, single buffered']
    #allocation12 [shape = 'u8[16384]{0}', space=vmem, size = 0x4000, scoped, tag = 'input window, operand 4, single buffered']
    #allocation13 [shape = 's32[1]{0}', space=sflag, size = 0x4, scoped, tag = 'scoped memory for tpu_custom_call.1']
    #allocation14 [shape = 'u8[16384]{0}', space=vmem, size = 0x4000, scoped, tag = 'input window, operand 5, single buffered']
    #allocation15 [shape = 'u8[16384]{0}', space=vmem, size = 0x4000, scoped, tag = 'input window, operand 7, single buffered']
    #allocation16 [shape = 's32[1]{0}', space=sflag, size = 0x4, scoped, tag = 'scoped memory for tpu_custom_call.1']
    %21 = vsyncpa [#allocation8], 0
    %22 = vsyncpa [#allocation10], 0
    %23 = vsyncpa [#allocation13], 0
    %24 = vsyncpa [#allocation16], 0
    // Predicated region
    $region2: #{tpu_custom_call.1} parent=1 // pred_check
      _
    $region3: #{tpu_custom_call.1} parent=1 // pred_check_branch
      %26 = sbr.rel (0) target = $region5
    $region4: #{tpu_custom_call.1} parent=1 // pred_region
      %s28 = ssub.s32 1024, 1024
      %29 = vsyncadd [#allocation8], %s28
      %s30 = sshll.u32 [#allocation7], 4
      %s31 = int_to_ptr.vmem [resolvable:$true] %s30
      %36 = dma.hbm_to_vmem [thread:$0]  %s0, 1024, %s31, [#allocation8], 128, 128, 8
    $region5: #{tpu_custom_call.1} parent=1 // pred_fallthru
      _
    // Predicated region
    $region6: #{tpu_custom_call.1} parent=1 // pred_check
      _
    $region7: #{tpu_custom_call.1} parent=1 // pred_check_branch
      %38 = sbr.rel (0) target = $region9
    $region8: #{tpu_custom_call.1} parent=1 // pred_region
      %s40 = ssub.s32 256, 256
      %41 = vsyncadd [#allocation10], %s40
      %s42 = sshll.u32 [#allocation9], 4
      %s43 = int_to_ptr.vmem [resolvable:$true] %s42
      %48 = dma.hbm_to_vmem [thread:$0]  %s1, 256, %s43, [#allocation10], 128, 128, 8
    $region9: #{tpu_custom_call.1} parent=1 // pred_fallthru
      _
    // Predicated region
    $region10: #{tpu_custom_call.1} parent=1 // pred_check
      _
    $region11: #{tpu_custom_call.1} parent=1 // pred_check_branch
      %50 = sbr.rel (0) target = $region13
    $region12: #{tpu_custom_call.1} parent=1 // pred_region
      %s52 = ssub.s32 512, 512
      %53 = vsyncadd [#allocation10], %s52
      %s54 = sshll.u32 [#allocation11], 4
      %s55 = int_to_ptr.vmem [resolvable:$true] %s54
      %60 = dma.hbm_to_vmem [thread:$0]  %s2, 512, %s55, [#allocation10], 128, 128, 8
    $region13: #{tpu_custom_call.1} parent=1 // pred_fallthru
      _
    // Predicated region
    $region14: #{tpu_custom_call.1} parent=1 // pred_check
      _
    $region15: #{tpu_custom_call.1} parent=1 // pred_check_branch
      %62 = sbr.rel (0) target = $region17
    $region16: #{tpu_custom_call.1} parent=1 // pred_region
      _
    $region17: #{tpu_custom_call.1} parent=1 // pred_fallthru
      _
    // Predicated region
    $region18: #{tpu_custom_call.1} parent=1 // pred_check
      _
    $region19: #{tpu_custom_call.1} parent=1 // pred_check_branch
      %64 = sbr.rel (0) target = $region21
    $region20: #{tpu_custom_call.1} parent=1 // pred_region
      %s66 = ssub.s32 512, 512
      %67 = vsyncadd [#allocation13], %s66
      %s68 = sshll.u32 [#allocation12], 4
      %s69 = int_to_ptr.vmem [resolvable:$true] %s68
      %74 = dma.hbm_to_vmem [thread:$0]  %s4, 512, %s69, [#allocation13], 128, 128, 8
    $region21: #{tpu_custom_call.1} parent=1 // pred_fallthru
      _
    // Predicated region
    $region22: #{tpu_custom_call.1} parent=1 // pred_check
      _
    $region23: #{tpu_custom_call.1} parent=1 // pred_check_branch
      %76 = sbr.rel (0) target = $region25
    $region24: #{tpu_custom_call.1} parent=1 // pred_region
      %s78 = ssub.s32 512, 512
      %79 = vsyncadd [#allocation13], %s78
      %s80 = sshll.u32 [#allocation14], 4
      %s81 = int_to_ptr.vmem [resolvable:$true] %s80
      %86 = dma.hbm_to_vmem [thread:$0]  %s5, 512, %s81, [#allocation13], 128, 128, 8
    $region25: #{tpu_custom_call.1} parent=1 // pred_fallthru
      _
    // Predicated region
    $region26: #{tpu_custom_call.1} parent=1 // pred_check
      _
    $region27: #{tpu_custom_call.1} parent=1 // pred_check_branch
      %88 = sbr.rel (0) target = $region29
    $region28: #{tpu_custom_call.1} parent=1 // pred_region
      _
    $region29: #{tpu_custom_call.1} parent=1 // pred_fallthru
      _
    // Predicated region
    $region30: #{tpu_custom_call.1} parent=1 // pred_check
      _
    $region31: #{tpu_custom_call.1} parent=1 // pred_check_branch
      %90 = sbr.rel (0) target = $region33
    $region32: #{tpu_custom_call.1} parent=1 // pred_region
      %s92 = ssub.s32 512, 512
      %93 = vsyncadd [#allocation16], %s92
      %s94 = sshll.u32 [#allocation15], 4
      %s95 = int_to_ptr.vmem [resolvable:$true] %s94
      %100 = dma.hbm_to_vmem [thread:$0]  %s7, 512, %s95, [#allocation16], 128, 128, 8
    $region33: #{tpu_custom_call.1} parent=1 // pred_fallthru
      _
    // Predicated region
    $region34: #{tpu_custom_call.1} parent=1 // pred_check
      _
    $region35: #{tpu_custom_call.1} parent=1 // pred_check_branch
      %102 = sbr.rel (0) target = $region37
    $region36: #{tpu_custom_call.1} parent=1 // pred_region
      _
    $region37: #{tpu_custom_call.1} parent=1 // pred_fallthru
      _
    // Predicated region
    $region38: #{tpu_custom_call.1} parent=1 // pred_check
      _
    $region39: #{tpu_custom_call.1} parent=1 // pred_check_branch
      %104 = sbr.rel (0) target = $region41
    $region40: #{tpu_custom_call.1} parent=1 // pred_region
      _
    $region41: #{tpu_custom_call.1} parent=1 // pred_fallthru
      _
    // Predicated region
    $region42: #{tpu_custom_call.1} parent=1 // pred_check
      _
    $region43: #{tpu_custom_call.1} parent=1 // pred_check_branch
      %106 = sbr.rel (0) target = $region45
    $region44: #{tpu_custom_call.1} parent=1 // pred_region
      _
    $region45: #{tpu_custom_call.1} parent=1 // pred_fallthru
      _
    // Predicated region
    $region46: #{tpu_custom_call.1} parent=1 // pred_check
      _
    $region47: #{tpu_custom_call.1} parent=1 // pred_check_branch
      %108 = sbr.rel (0) target = $region49
    $region48: #{tpu_custom_call.1} parent=1 // pred_region
      _
    $region49: #{tpu_custom_call.1} parent=1 // pred_fallthru
      _
    // Predicated region
    $region50: #{tpu_custom_call.1} parent=1 // pred_check
      _
    $region51: #{tpu_custom_call.1} parent=1 // pred_check_branch
      %110 = sbr.rel (0) target = $region53
    $region52: #{tpu_custom_call.1} parent=1 // pred_region
      _
    $region53: #{tpu_custom_call.1} parent=1 // pred_fallthru
      _
    // Predicated region
    $region54: #{tpu_custom_call.1} parent=1 // pred_check
      _
    $region55: #{tpu_custom_call.1} parent=1 // pred_check_branch
      %112 = sbr.rel (0) target = $region57
    $region56: #{tpu_custom_call.1} parent=1 // pred_region
      _
    $region57: #{tpu_custom_call.1} parent=1 // pred_fallthru
      _
    // Predicated region
    $region58: #{tpu_custom_call.1} parent=1 // pred_check
      _
    $region59: #{tpu_custom_call.1} parent=1 // pred_check_branch
      %114 = sbr.rel (0) target = $region61
    $region60: #{tpu_custom_call.1} parent=1 // pred_region
      %115 = dma.done [#allocation8], 1024
    $region61: #{tpu_custom_call.1} parent=1 // pred_fallthru
      _
    // Predicated region
    $region62: #{tpu_custom_call.1} parent=1 // pred_check
      _
    $region63: #{tpu_custom_call.1} parent=1 // pred_check_branch
      %117 = sbr.rel (0) target = $region65
    $region64: #{tpu_custom_call.1} parent=1 // pred_region
      %118 = dma.done [#allocation10], 256
    $region65: #{tpu_custom_call.1} parent=1 // pred_fallthru
      _
    // Predicated region
    $region66: #{tpu_custom_call.1} parent=1 // pred_check
      _
    $region67: #{tpu_custom_call.1} parent=1 // pred_check_branch
      %120 = sbr.rel (0) target = $region69
    $region68: #{tpu_custom_call.1} parent=1 // pred_region
      %121 = dma.done [#allocation10], 512
    $region69: #{tpu_custom_call.1} parent=1 // pred_fallthru
      _
    // Predicated region
    $region70: #{tpu_custom_call.1} parent=1 // pred_check
      _
    $region71: #{tpu_custom_call.1} parent=1 // pred_check_branch
      %123 = sbr.rel (0) target = $region73
    $region72: #{tpu_custom_call.1} parent=1 // pred_region
      %124 = dma.done [#allocation13], 512
    $region73: #{tpu_custom_call.1} parent=1 // pred_fallthru
      _
    // Predicated region
    $region74: #{tpu_custom_call.1} parent=1 // pred_check
      _
    $region75: #{tpu_custom_call.1} parent=1 // pred_check_branch
      %126 = sbr.rel (0) target = $region77
    $region76: #{tpu_custom_call.1} parent=1 // pred_region
      %127 = dma.done [#allocation13], 512
    $region77: #{tpu_custom_call.1} parent=1 // pred_fallthru
      _
    // Predicated region
    $region78: #{tpu_custom_call.1} parent=1 // pred_check
      _
    $region79: #{tpu_custom_call.1} parent=1 // pred_check_branch
      %129 = sbr.rel (0) target = $region81
    $region80: #{tpu_custom_call.1} parent=1 // pred_region
      %130 = dma.done [#allocation16], 512
    $region81: #{tpu_custom_call.1} parent=1 // pred_fallthru
      _
    %v131 = vld [vmem:[#allocation7] sm:$0xff]
    %v132 = vld [vmem:[#allocation7 + $0x8] sm:$0xff]
    %v133 = vld [vmem:[#allocation7 + $0x10] sm:$0xff]
    %v134 = vld [vmem:[#allocation7 + $0x18] sm:$0xff]
    %v135 = vld [vmem:[#allocation7 + $0x20] sm:$0xff]
    %v136 = vld [vmem:[#allocation7 + $0x28] sm:$0xff]
    %v137 = vld [vmem:[#allocation7 + $0x30] sm:$0xff]
    %v138 = vld [vmem:[#allocation7 + $0x38] sm:$0xff]
    %v139 = vld [vmem:[#allocation9] sm:$0xff]
    %v140 = vld [vmem:[#allocation9 + $0x8] sm:$0xff]
    %v141 = vld [vmem:[%s3] sm:$0x1]
    %v143 = vlaneseq
    %v144 = vshrl.u32 %v143, 7
    %v145 = vsub.s32 0, %v144
    %v146 = vrot.slane %v141, %v145
    %vm148 = vcmask 130048
    %v150 = vsel %vm148, %v131, 0
    %v153 = vsel %vm148, %v132, 0
    %v156 = vsel %vm148, %v133, 0
    %v159 = vsel %vm148, %v134, 0
    %v162 = vsel %vm148, %v135, 0
    %v165 = vsel %vm148, %v136, 0
    %v168 = vsel %vm148, %v137, 0
    %v171 = vsel %vm148, %v138, 0
    %173 = vmatprep.subr.mxu0 0.0
    %174 = vmatpush1.msra.mxu0 %v139
    %175 = vmatprep.subr.mxu0 0.0
    %176 = vmatpush1.msra.mxu0 %v140
    %177 = vmatprep.subr.mxu0 0.0
    %178 = vmatpush1.msra.mxu0 0.0
    %179 = vmatprep.subr.mxu0 0.0
    %180 = vmatpush1.msra.mxu0 0.0
    %181 = vmatprep.subr.mxu0 0.0
    %182 = vmatpush1.msra.mxu0 0.0
    %183 = vmatprep.subr.mxu0 0.0
    %184 = vmatpush1.msra.mxu0 0.0
    %185 = vmatprep.subr.mxu0 0.0
    %186 = vmatpush1.msra.mxu0 0.0
    %187 = vmatprep.subr.mxu0 0.0
    %188 = vmatpush1.msra.mxu0 0.0
    %189 = vmatprep.subr.mxu0 0.0
    %190 = vmatpush1.msra.mxu0 0.0
    %191 = vmatprep.subr.mxu0 0.0
    %192 = vmatpush1.msra.mxu0 0.0
    %193 = vmatprep.subr.mxu0 0.0
    %194 = vmatpush1.msra.mxu0 0.0
    %195 = vmatprep.subr.mxu0 0.0
    %196 = vmatpush1.msra.mxu0 0.0
    %197 = vmatprep.subr.mxu0 0.0
    %198 = vmatpush1.msra.mxu0 0.0
    %199 = vmatprep.subr.mxu0 0.0
    %200 = vmatpush1.msra.mxu0 0.0
    %201 = vmatprep.subr.mxu0 0.0
    %202 = vmatpush1.msra.mxu0 0.0
    %203 = vmatprep.subr.mxu0 0.0
    %204 = vmatpush1.msra.mxu0 0.0
    %205 = vmatprep.subr.mxu0 0.0
    %206 = vmatpush1.msra.mxu0 0.0
    %207 = vmatprep.subr.mxu0 0.0
    %208 = vmatpush1.msra.mxu0 0.0
    %209 = vmatprep.subr.mxu0 0.0
    %210 = vmatpush1.msra.mxu0 0.0
    %211 = vmatprep.subr.mxu0 0.0
    %212 = vmatpush1.msra.mxu0 0.0
    %213 = vmatprep.subr.mxu0 0.0
    %214 = vmatpush1.msra.mxu0 0.0
    %215 = vmatprep.subr.mxu0 0.0
    %216 = vmatpush1.msra.mxu0 0.0
    %217 = vmatprep.subr.mxu0 0.0
    %218 = vmatpush1.msra.mxu0 0.0
    %219 = vmatprep.subr.mxu0 0.0
    %220 = vmatpush1.msra.mxu0 0.0
    %221 = vmatprep.subr.mxu0 0.0
    %222 = vmatpush1.msra.mxu0 0.0
    %223 = vmatprep.subr.mxu0 0.0
    %224 = vmatpush1.msra.mxu0 0.0
    %225 = vmatprep.subr.mxu0 0.0
    %226 = vmatpush1.msra.mxu0 0.0
    %227 = vmatprep.subr.mxu0 0.0
    %228 = vmatpush1.msra.mxu0 0.0
    %229 = vmatprep.subr.mxu0 0.0
    %230 = vmatpush1.msra.mxu0 0.0
    %231 = vmatprep.subr.mxu0 0.0
    %232 = vmatpush1.msra.mxu0 0.0
    %233 = vmatprep.subr.mxu0 0.0
    %234 = vmatpush1.msra.mxu0 0.0
    %235 = vmatprep.subr.mxu0 0.0
    %236 = vmatpush1.msra.mxu0 0.0
    %237 = vmatprep.mubr.f32.mxu0 0.0
    %238 = vmatmul.mubr.f32.gmra.mrb[0].mxu0 %v150
    %v239 = vpop.f32.mrb[0].mxu0
    %v240 = vadd.f32 %v146, %v239
    %v241 = vpop.f32.mrb[0].mxu0
    %242 = vmatprep.mubr.f32.mxu0 0.0
    %243 = vmatmul.mubr.f32.gmra.mrb[0].mxu0 %v153
    %v244 = vpop.f32.mrb[0].mxu0
    %v245 = vadd.f32 %v146, %v244
    %v246 = vpop.f32.mrb[0].mxu0
    %247 = vmatprep.mubr.f32.mxu0 0.0
    %248 = vmatmul.mubr.f32.gmra.mrb[0].mxu0 %v156
    %v249 = vpop.f32.mrb[0].mxu0
    %v250 = vadd.f32 %v146, %v249
    %v251 = vpop.f32.mrb[0].mxu0
    %252 = vmatprep.mubr.f32.mxu0 0.0
    %253 = vmatmul.mubr.f32.gmra.mrb[0].mxu0 %v159
    %v254 = vpop.f32.mrb[0].mxu0
    %v255 = vadd.f32 %v146, %v254
    %v256 = vpop.f32.mrb[0].mxu0
    %257 = vmatprep.mubr.f32.mxu0 0.0
    %258 = vmatmul.mubr.f32.gmra.mrb[0].mxu0 %v162
    %v259 = vpop.f32.mrb[0].mxu0
    %v260 = vadd.f32 %v146, %v259
    %v261 = vpop.f32.mrb[0].mxu0
    %262 = vmatprep.mubr.f32.mxu0 0.0
    %263 = vmatmul.mubr.f32.gmra.mrb[0].mxu0 %v165
    %v264 = vpop.f32.mrb[0].mxu0
    %v265 = vadd.f32 %v146, %v264
    %v266 = vpop.f32.mrb[0].mxu0
    %267 = vmatprep.mubr.f32.mxu0 0.0
    %268 = vmatmul.mubr.f32.gmra.mrb[0].mxu0 %v168
    %v269 = vpop.f32.mrb[0].mxu0
    %v270 = vadd.f32 %v146, %v269
    %v271 = vpop.f32.mrb[0].mxu0
    %272 = vmatprep.mubr.f32.mxu0 0.0
    %273 = vmatmul.mubr.f32.gmra.mrb[0].mxu0 %v171
    %v274 = vpop.f32.mrb[0].mxu0
    %v275 = vadd.f32 %v146, %v274
    %v276 = vpop.f32.mrb[0].mxu0
    %277 = vdwg.mxu0
    %278 = vst [vmem:[#allocation3] sm:$0xff] %v240
    %279 = vst [vmem:[#allocation3 + $0x8] sm:$0xff] %v245
    %280 = vst [vmem:[#allocation3 + $0x10] sm:$0xff] %v250
    %281 = vst [vmem:[#allocation3 + $0x18] sm:$0xff] %v255
    %282 = vst [vmem:[#allocation3 + $0x20] sm:$0xff] %v260
    %283 = vst [vmem:[#allocation3 + $0x28] sm:$0xff] %v265
    %284 = vst [vmem:[#allocation3 + $0x30] sm:$0xff] %v270
    %285 = vst [vmem:[#allocation3 + $0x38] sm:$0xff] %v275
    %vm286 = vcmask 261120
    %287 = vst.msk [vmem:[#allocation4] sm:$0xff] %vm286, 0.0
    %288 = vst.msk [vmem:[#allocation5] sm:$0xff] %vm286, 0.0
    %v289 = vld [vmem:[#allocation3] sm:$0xff]
    %v290 = vld [vmem:[#allocation4] sm:$0xff]
    %v291 = vld [vmem:[#allocation11] sm:$0xff]
    %v292 = vld [vmem:[#allocation11 + $0x8] sm:$0xff]
    %v293 = vld [vmem:[#allocation11 + $0x10] sm:$0xff]
    %v294 = vld [vmem:[#allocation11 + $0x18] sm:$0xff]
    %v296 = vsel %vm286, %v290, 0
    %298 = vmatprep.subr.mxu0 0.0
    %299 = vmatpush1.msra.mxu0 %v291
    %300 = vmatprep.subr.mxu0 0.0
    %301 = vmatpush1.msra.mxu0 %v292
    %302 = vmatprep.subr.mxu0 0.0
    %303 = vmatpush1.msra.mxu0 %v293
    %304 = vmatprep.subr.mxu0 0.0
    %305 = vmatpush1.msra.mxu0 %v294
    %306 = vmatprep.subr.mxu0 0.0
    %307 = vmatpush1.msra.mxu0 0.0
    %308 = vmatprep.subr.mxu0 0.0
    %309 = vmatpush1.msra.mxu0 0.0
    %310 = vmatprep.subr.mxu0 0.0
    %311 = vmatpush1.msra.mxu0 0.0
    %312 = vmatprep.subr.mxu0 0.0
    %313 = vmatpush1.msra.mxu0 0.0
    %314 = vmatprep.subr.mxu0 0.0
    %315 = vmatpush1.msra.mxu0 0.0
    %316 = vmatprep.subr.mxu0 0.0
    %317 = vmatpush1.msra.mxu0 0.0
    %318 = vmatprep.subr.mxu0 0.0
    %319 = vmatpush1.msra.mxu0 0.0
    %320 = vmatprep.subr.mxu0 0.0
    %321 = vmatpush1.msra.mxu0 0.0
    %322 = vmatprep.subr.mxu0 0.0
    %323 = vmatpush1.msra.mxu0 0.0
    %324 = vmatprep.subr.mxu0 0.0
    %325 = vmatpush1.msra.mxu0 0.0
    %326 = vmatprep.subr.mxu0 0.0
    %327 = vmatpush1.msra.mxu0 0.0
    %328 = vmatprep.subr.mxu0 0.0
    %329 = vmatpush1.msra.mxu0 0.0
    %330 = vmatprep.subr.mxu0 0.0
    %331 = vmatpush1.msra.mxu0 0.0
    %332 = vmatprep.subr.mxu0 0.0
    %333 = vmatpush1.msra.mxu0 0.0
    %334 = vmatprep.subr.mxu0 0.0
    %335 = vmatpush1.msra.mxu0 0.0
    %336 = vmatprep.subr.mxu0 0.0
    %337 = vmatpush1.msra.mxu0 0.0
    %338 = vmatprep.subr.mxu0 0.0
    %339 = vmatpush1.msra.mxu0 0.0
    %340 = vmatprep.subr.mxu0 0.0
    %341 = vmatpush1.msra.mxu0 0.0
    %342 = vmatprep.subr.mxu0 0.0
    %343 = vmatpush1.msra.mxu0 0.0
    %344 = vmatprep.subr.mxu0 0.0
    %345 = vmatpush1.msra.mxu0 0.0
    %346 = vmatprep.subr.mxu0 0.0
    %347 = vmatpush1.msra.mxu0 0.0
    %348 = vmatprep.subr.mxu0 0.0
    %349 = vmatpush1.msra.mxu0 0.0
    %350 = vmatprep.subr.mxu0 0.0
    %351 = vmatpush1.msra.mxu0 0.0
    %352 = vmatprep.subr.mxu0 0.0
    %353 = vmatpush1.msra.mxu0 0.0
    %354 = vmatprep.subr.mxu0 0.0
    %355 = vmatpush1.msra.mxu0 0.0
    %356 = vmatprep.subr.mxu0 0.0
    %357 = vmatpush1.msra.mxu0 0.0
    %358 = vmatprep.subr.mxu0 0.0
    %359 = vmatpush1.msra.mxu0 0.0
    %360 = vmatprep.subr.mxu0 0.0
    %361 = vmatpush1.msra.mxu0 0.0
    %362 = vmatprep.mubr.f32.mxu0 0.0
    %363 = vmatmul.mubr.f32.gmra.mrb[0].mxu0 %v296
    %v364 = vpop.f32.mrb[0].mxu0
    %v365 = vadd.f32 0.0, %v364
    %v366 = vpop.f32.mrb[0].mxu0
    %367 = vdwg.mxu0
    %v368 = vadd.f32 %v289, %v365
    %v369 = vxor.u32 %v368, 2147483648
    %v370 = vmul.f32 %v369, 1.442695
    %v371 = vpow.pop %v370
    %v372 = vadd.f32 %v371, 1.0
    %v373 = vrcp.pop %v372
    %v374 = vmul.f32 1.0, %v373
    %v375 = vtanh.pop %v368
    %v376 = vld [vmem:[#allocation5] sm:$0xff]
    %378 = vrot.lane.b32.xlu0 %v376, 32
    %v379 = vpop.permute.xlu0 %378
    %v381 = vmul.f32 %v374, %v379
    %383 = vrot.lane.b32.xlu0 %v375, 64
    %v384 = vpop.permute.xlu0 %383
    %v386 = vmul.f32 %v374, %v384
    %388 = vrot.lane.b32.xlu0 %v386, 32
    %v389 = vpop.permute.xlu0 %388
    %v391 = vadd.f32 %v381, %v389
    %v392 = vtanh.pop %v391
    %394 = vrot.lane.b32.xlu0 %v392, 64
    %v395 = vpop.permute.xlu0 %394
    %v397 = vmul.f32 %v374, %v395
    %399 = vrot.lane.b32.xlu0 %v391, 96
    %v400 = vpop.permute.xlu0 %399
    %402 = vst.msk [vmem:[#allocation5] sm:$0xff] %vm286, %v400
    %404 = vrot.lane.b32.xlu0 %v397, 32
    %v405 = vpop.permute.xlu0 %404
    %407 = vst.msk [vmem:[#allocation4] sm:$0xff] %vm286, %v405
    %408 = vst.msk [vmem:[#allocation2] sm:$0xff] %vm286, %v405
    %s409 = scalar_lea.vmem [#allocation3], 8
    %v410 = vld [vmem:[%s409] sm:$0xff]
    %v411 = vld [vmem:[#allocation4] sm:$0xff]
    %v412 = vld [vmem:[#allocation11] sm:$0xff]
    %v413 = vld [vmem:[#allocation11 + $0x8] sm:$0xff]
    %v414 = vld [vmem:[#allocation11 + $0x10] sm:$0xff]
    %v415 = vld [vmem:[#allocation11 + $0x18] sm:$0xff]
    %v417 = vsel %vm286, %v411, 0
    %419 = vmatprep.subr.mxu0 0.0
    %420 = vmatpush1.msra.mxu0 %v412
    %421 = vmatprep.subr.mxu0 0.0
    %422 = vmatpush1.msra.mxu0 %v413
    %423 = vmatprep.subr.mxu0 0.0
    %424 = vmatpush1.msra.mxu0 %v414
    %425 = vmatprep.subr.mxu0 0.0
    %426 = vmatpush1.msra.mxu0 %v415
    %427 = vmatprep.subr.mxu0 0.0
    %428 = vmatpush1.msra.mxu0 0.0
    %429 = vmatprep.subr.mxu0 0.0
    %430 = vmatpush1.msra.mxu0 0.0
    %431 = vmatprep.subr.mxu0 0.0
    %432 = vmatpush1.msra.mxu0 0.0
    %433 = vmatprep.subr.mxu0 0.0
    %434 = vmatpush1.msra.mxu0 0.0
    %435 = vmatprep.subr.mxu0 0.0
    %436 = vmatpush1.msra.mxu0 0.0
    %437 = vmatprep.subr.mxu0 0.0
    %438 = vmatpush1.msra.mxu0 0.0
    %439 = vmatprep.subr.mxu0 0.0
    %440 = vmatpush1.msra.mxu0 0.0
    %441 = vmatprep.subr.mxu0 0.0
    %442 = vmatpush1.msra.mxu0 0.0
    %443 = vmatprep.subr.mxu0 0.0
    %444 = vmatpush1.msra.mxu0 0.0
    %445 = vmatprep.subr.mxu0 0.0
    %446 = vmatpush1.msra.mxu0 0.0
    %447 = vmatprep.subr.mxu0 0.0
    %448 = vmatpush1.msra.mxu0 0.0
    %449 = vmatprep.subr.mxu0 0.0
    %450 = vmatpush1.msra.mxu0 0.0
    %451 = vmatprep.subr.mxu0 0.0
    %452 = vmatpush1.msra.mxu0 0.0
    %453 = vmatprep.subr.mxu0 0.0
    %454 = vmatpush1.msra.mxu0 0.0
    %455 = vmatprep.subr.mxu0 0.0
    %456 = vmatpush1.msra.mxu0 0.0
    %457 = vmatprep.subr.mxu0 0.0
    %458 = vmatpush1.msra.mxu0 0.0
    %459 = vmatprep.subr.mxu0 0.0
    %460 = vmatpush1.msra.mxu0 0.0
    %461 = vmatprep.subr.mxu0 0.0
    %462 = vmatpush1.msra.mxu0 0.0
    %463 = vmatprep.subr.mxu0 0.0
    %464 = vmatpush1.msra.mxu0 0.0
    %465 = vmatprep.subr.mxu0 0.0
    %466 = vmatpush1.msra.mxu0 0.0
    %467 = vmatprep.subr.mxu0 0.0
    %468 = vmatpush1.msra.mxu0 0.0
    %469 = vmatprep.subr.mxu0 0.0
    %470 = vmatpush1.msra.mxu0 0.0
    %471 = vmatprep.subr.mxu0 0.0
    %472 = vmatpush1.msra.mxu0 0.0
    %473 = vmatprep.subr.mxu0 0.0
    %474 = vmatpush1.msra.mxu0 0.0
    %475 = vmatprep.subr.mxu0 0.0
    %476 = vmatpush1.msra.mxu0 0.0
    %477 = vmatprep.subr.mxu0 0.0
    %478 = vmatpush1.msra.mxu0 0.0
    %479 = vmatprep.subr.mxu0 0.0
    %480 = vmatpush1.msra.mxu0 0.0
    %481 = vmatprep.subr.mxu0 0.0
    %482 = vmatpush1.msra.mxu0 0.0
    %483 = vmatprep.mubr.f32.mxu0 0.0
    %484 = vmatmul.mubr.f32.gmra.mrb[0].mxu0 %v417
    %v485 = vpop.f32.mrb[0].mxu0
    %v486 = vadd.f32 0.0, %v485
    %v487 = vpop.f32.mrb[0].mxu0
    %488 = vdwg.mxu0
    %v489 = vadd.f32 %v410, %v486
    %v490 = vxor.u32 %v489, 2147483648
    %v491 = vmul.f32 %v490, 1.442695
    %v492 = vpow.pop %v491
    %v493 = vadd.f32 %v492, 1.0
    %v494 = vrcp.pop %v493
    %v495 = vmul.f32 1.0, %v494
    %v496 = vtanh.pop %v489
    %v497 = vld [vmem:[#allocation5] sm:$0xff]
    %499 = vrot.lane.b32.xlu0 %v497, 32
    %v500 = vpop.permute.xlu0 %499
    %v502 = vmul.f32 %v495, %v500
    %504 = vrot.lane.b32.xlu0 %v496, 64
    %v505 = vpop.permute.xlu0 %504
    %v507 = vmul.f32 %v495, %v505
    %509 = vrot.lane.b32.xlu0 %v507, 32
    %v510 = vpop.permute.xlu0 %509
    %v512 = vadd.f32 %v502, %v510
    %v513 = vtanh.pop %v512
    %515 = vrot.lane.b32.xlu0 %v513, 64
    %v516 = vpop.permute.xlu0 %515
    %v518 = vmul.f32 %v495, %v516
    %520 = vrot.lane.b32.xlu0 %v512, 96
    %v521 = vpop.permute.xlu0 %520
    %523 = vst.msk [vmem:[#allocation5] sm:$0xff] %vm286, %v521
    %525 = vrot.lane.b32.xlu0 %v518, 32
    %v526 = vpop.permute.xlu0 %525
    %528 = vst.msk [vmem:[#allocation4] sm:$0xff] %vm286, %v526
    %s529 = scalar_lea.vmem [#allocation2], 8
    %530 = vst.msk [vmem:[%s529] sm:$0xff] %vm286, %v526
    %s531 = scalar_lea.vmem [#allocation3], 16
    %v532 = vld [vmem:[%s531] sm:$0xff]
    %v533 = vld [vmem:[#allocation4] sm:$0xff]
    %v534 = vld [vmem:[#allocation11] sm:$0xff]
    %v535 = vld [vmem:[#allocation11 + $0x8] sm:$0xff]
    %v536 = vld [vmem:[#allocation11 + $0x10] sm:$0xff]
    %v537 = vld [vmem:[#allocation11 + $0x18] sm:$0xff]
    %v539 = vsel %vm286, %v533, 0
    %541 = vmatprep.subr.mxu0 0.0
    %542 = vmatpush1.msra.mxu0 %v534
    %543 = vmatprep.subr.mxu0 0.0
    %544 = vmatpush1.msra.mxu0 %v535
    %545 = vmatprep.subr.mxu0 0.0
    %546 = vmatpush1.msra.mxu0 %v536
    %547 = vmatprep.subr.mxu0 0.0
    %548 = vmatpush1.msra.mxu0 %v537
    %549 = vmatprep.subr.mxu0 0.0
    %550 = vmatpush1.msra.mxu0 0.0
    %551 = vmatprep.subr.mxu0 0.0
    %552 = vmatpush1.msra.mxu0 0.0
    %553 = vmatprep.subr.mxu0 0.0
    %554 = vmatpush1.msra.mxu0 0.0
    %555 = vmatprep.subr.mxu0 0.0
    %556 = vmatpush1.msra.mxu0 0.0
    %557 = vmatprep.subr.mxu0 0.0
    %558 = vmatpush1.msra.mxu0 0.0
    %559 = vmatprep.subr.mxu0 0.0
    %560 = vmatpush1.msra.mxu0 0.0
    %561 = vmatprep.subr.mxu0 0.0
    %562 = vmatpush1.msra.mxu0 0.0
    %563 = vmatprep.subr.mxu0 0.0
    %564 = vmatpush1.msra.mxu0 0.0
    %565 = vmatprep.subr.mxu0 0.0
    %566 = vmatpush1.msra.mxu0 0.0
    %567 = vmatprep.subr.mxu0 0.0
    %568 = vmatpush1.msra.mxu0 0.0
    %569 = vmatprep.subr.mxu0 0.0
    %570 = vmatpush1.msra.mxu0 0.0
    %571 = vmatprep.subr.mxu0 0.0
    %572 = vmatpush1.msra.mxu0 0.0
    %573 = vmatprep.subr.mxu0 0.0
    %574 = vmatpush1.msra.mxu0 0.0
    %575 = vmatprep.subr.mxu0 0.0
    %576 = vmatpush1.msra.mxu0 0.0
    %577 = vmatprep.subr.mxu0 0.0
    %578 = vmatpush1.msra.mxu0 0.0
    %579 = vmatprep.subr.mxu0 0.0
    %580 = vmatpush1.msra.mxu0 0.0
    %581 = vmatprep.subr.mxu0 0.0
    %582 = vmatpush1.msra.mxu0 0.0
    %583 = vmatprep.subr.mxu0 0.0
    %584 = vmatpush1.msra.mxu0 0.0
    %585 = vmatprep.subr.mxu0 0.0
    %586 = vmatpush1.msra.mxu0 0.0
    %587 = vmatprep.subr.mxu0 0.0
    %588 = vmatpush1.msra.mxu0 0.0
    %589 = vmatprep.subr.mxu0 0.0
    %590 = vmatpush1.msra.mxu0 0.0
    %591 = vmatprep.subr.mxu0 0.0
    %592 = vmatpush1.msra.mxu0 0.0
    %593 = vmatprep.subr.mxu0 0.0
    %594 = vmatpush1.msra.mxu0 0.0
    %595 = vmatprep.subr.mxu0 0.0
    %596 = vmatpush1.msra.mxu0 0.0
    %597 = vmatprep.subr.mxu0 0.0
    %598 = vmatpush1.msra.mxu0 0.0
    %599 = vmatprep.subr.mxu0 0.0
    %600 = vmatpush1.msra.mxu0 0.0
    %601 = vmatprep.subr.mxu0 0.0
    %602 = vmatpush1.msra.mxu0 0.0
    %603 = vmatprep.subr.mxu0 0.0
    %604 = vmatpush1.msra.mxu0 0.0
    %605 = vmatprep.mubr.f32.mxu0 0.0
    %606 = vmatmul.mubr.f32.gmra.mrb[0].mxu0 %v539
    %v607 = vpop.f32.mrb[0].mxu0
    %v608 = vadd.f32 0.0, %v607
    %v609 = vpop.f32.mrb[0].mxu0
    %610 = vdwg.mxu0
    %v611 = vadd.f32 %v532, %v608
    %v612 = vxor.u32 %v611, 2147483648
    %v613 = vmul.f32 %v612, 1.442695
    %v614 = vpow.pop %v613
    %v615 = vadd.f32 %v614, 1.0
    %v616 = vrcp.pop %v615
    %v617 = vmul.f32 1.0, %v616
    %v618 = vtanh.pop %v611
    %v619 = vld [vmem:[#allocation5] sm:$0xff]
    %621 = vrot.lane.b32.xlu0 %v619, 32
    %v622 = vpop.permute.xlu0 %621
    %v624 = vmul.f32 %v617, %v622
    %626 = vrot.lane.b32.xlu0 %v618, 64
    %v627 = vpop.permute.xlu0 %626
    %v629 = vmul.f32 %v617, %v627
    %631 = vrot.lane.b32.xlu0 %v629, 32
    %v632 = vpop.permute.xlu0 %631
    %v634 = vadd.f32 %v624, %v632
    %v635 = vtanh.pop %v634
    %637 = vrot.lane.b32.xlu0 %v635, 64
    %v638 = vpop.permute.xlu0 %637
    %v640 = vmul.f32 %v617, %v638
    %642 = vrot.lane.b32.xlu0 %v634, 96
    %v643 = vpop.permute.xlu0 %642
    %645 = vst.msk [vmem:[#allocation5] sm:$0xff] %vm286, %v643
    %647 = vrot.lane.b32.xlu0 %v640, 32
    %v648 = vpop.permute.xlu0 %647
    %650 = vst.msk [vmem:[#allocation4] sm:$0xff] %vm286, %v648
    %s651 = scalar_lea.vmem [#allocation2], 16
    %652 = vst.msk [vmem:[%s651] sm:$0xff] %vm286, %v648
    %s653 = scalar_lea.vmem [#allocation3], 24
    %v654 = vld [vmem:[%s653] sm:$0xff]
    %v655 = vld [vmem:[#allocation4] sm:$0xff]
    %v656 = vld [vmem:[#allocation11] sm:$0xff]
    %v657 = vld [vmem:[#allocation11 + $0x8] sm:$0xff]
    %v658 = vld [vmem:[#allocation11 + $0x10] sm:$0xff]
    %v659 = vld [vmem:[#allocation11 + $0x18] sm:$0xff]
    %v661 = vsel %vm286, %v655, 0
    %663 = vmatprep.subr.mxu0 0.0
    %664 = vmatpush1.msra.mxu0 %v656
    %665 = vmatprep.subr.mxu0 0.0
    %666 = vmatpush1.msra.mxu0 %v657
    %667 = vmatprep.subr.mxu0 0.0
    %668 = vmatpush1.msra.mxu0 %v658
    %669 = vmatprep.subr.mxu0 0.0
    %670 = vmatpush1.msra.mxu0 %v659
    %671 = vmatprep.subr.mxu0 0.0
    %672 = vmatpush1.msra.mxu0 0.0
    %673 = vmatprep.subr.mxu0 0.0
    %674 = vmatpush1.msra.mxu0 0.0
    %675 = vmatprep.subr.mxu0 0.0
    %676 = vmatpush1.msra.mxu0 0.0
    %677 = vmatprep.subr.mxu0 0.0
    %678 = vmatpush1.msra.mxu0 0.0
    %679 = vmatprep.subr.mxu0 0.0
    %680 = vmatpush1.msra.mxu0 0.0
    %681 = vmatprep.subr.mxu0 0.0
    %682 = vmatpush1.msra.mxu0 0.0
    %683 = vmatprep.subr.mxu0 0.0
    %684 = vmatpush1.msra.mxu0 0.0
    %685 = vmatprep.subr.mxu0 0.0
    %686 = vmatpush1.msra.mxu0 0.0
    %687 = vmatprep.subr.mxu0 0.0
    %688 = vmatpush1.msra.mxu0 0.0
    %689 = vmatprep.subr.mxu0 0.0
    %690 = vmatpush1.msra.mxu0 0.0
    %691 = vmatprep.subr.mxu0 0.0
    %692 = vmatpush1.msra.mxu0 0.0
    %693 = vmatprep.subr.mxu0 0.0
    %694 = vmatpush1.msra.mxu0 0.0
    %695 = vmatprep.subr.mxu0 0.0
    %696 = vmatpush1.msra.mxu0 0.0
    %697 = vmatprep.subr.mxu0 0.0
    %698 = vmatpush1.msra.mxu0 0.0
    %699 = vmatprep.subr.mxu0 0.0
    %700 = vmatpush1.msra.mxu0 0.0
    %701 = vmatprep.subr.mxu0 0.0
    %702 = vmatpush1.msra.mxu0 0.0
    %703 = vmatprep.subr.mxu0 0.0
    %704 = vmatpush1.msra.mxu0 0.0
    %705 = vmatprep.subr.mxu0 0.0
    %706 = vmatpush1.msra.mxu0 0.0
    %707 = vmatprep.subr.mxu0 0.0
    %708 = vmatpush1.msra.mxu0 0.0
    %709 = vmatprep.subr.mxu0 0.0
    %710 = vmatpush1.msra.mxu0 0.0
    %711 = vmatprep.subr.mxu0 0.0
    %712 = vmatpush1.msra.mxu0 0.0
    %713 = vmatprep.subr.mxu0 0.0
    %714 = vmatpush1.msra.mxu0 0.0
    %715 = vmatprep.subr.mxu0 0.0
    %716 = vmatpush1.msra.mxu0 0.0
    %717 = vmatprep.subr.mxu0 0.0
    %718 = vmatpush1.msra.mxu0 0.0
    %719 = vmatprep.subr.mxu0 0.0
    %720 = vmatpush1.msra.mxu0 0.0
    %721 = vmatprep.subr.mxu0 0.0
    %722 = vmatpush1.msra.mxu0 0.0
    %723 = vmatprep.subr.mxu0 0.0
    %724 = vmatpush1.msra.mxu0 0.0
    %725 = vmatprep.subr.mxu0 0.0
    %726 = vmatpush1.msra.mxu0 0.0
    %727 = vmatprep.mubr.f32.mxu0 0.0
    %728 = vmatmul.mubr.f32.gmra.mrb[0].mxu0 %v661
    %v729 = vpop.f32.mrb[0].mxu0
    %v730 = vadd.f32 0.0, %v729
    %v731 = vpop.f32.mrb[0].mxu0
    %732 = vdwg.mxu0
    %v733 = vadd.f32 %v654, %v730
    %v734 = vxor.u32 %v733, 2147483648
    %v735 = vmul.f32 %v734, 1.442695
    %v736 = vpow.pop %v735
    %v737 = vadd.f32 %v736, 1.0
    %v738 = vrcp.pop %v737
    %v739 = vmul.f32 1.0, %v738
    %v740 = vtanh.pop %v733
    %v741 = vld [vmem:[#allocation5] sm:$0xff]
    %743 = vrot.lane.b32.xlu0 %v741, 32
    %v744 = vpop.permute.xlu0 %743
    %v746 = vmul.f32 %v739, %v744
    %748 = vrot.lane.b32.xlu0 %v740, 64
    %v749 = vpop.permute.xlu0 %748
    %v751 = vmul.f32 %v739, %v749
    %753 = vrot.lane.b32.xlu0 %v751, 32
    %v754 = vpop.permute.xlu0 %753
    %v756 = vadd.f32 %v746, %v754
    %v757 = vtanh.pop %v756
    %759 = vrot.lane.b32.xlu0 %v757, 64
    %v760 = vpop.permute.xlu0 %759
    %v762 = vmul.f32 %v739, %v760
    %764 = vrot.lane.b32.xlu0 %v756, 96
    %v765 = vpop.permute.xlu0 %764
    %767 = vst.msk [vmem:[#allocation5] sm:$0xff] %vm286, %v765
    %769 = vrot.lane.b32.xlu0 %v762, 32
    %v770 = vpop.permute.xlu0 %769
    %772 = vst.msk [vmem:[#allocation4] sm:$0xff] %vm286, %v770
    %s773 = scalar_lea.vmem [#allocation2], 24
    %774 = vst.msk [vmem:[%s773] sm:$0xff] %vm286, %v770
    %s775 = scalar_lea.vmem [#allocation3], 32
    %v776 = vld [vmem:[%s775] sm:$0xff]
    %v777 = vld [vmem:[#allocation4] sm:$0xff]
    %v778 = vld [vmem:[#allocation11] sm:$0xff]
    %v779 = vld [vmem:[#allocation11 + $0x8] sm:$0xff]
    %v780 = vld [vmem:[#allocation11 + $0x10] sm:$0xff]
    %v781 = vld [vmem:[#allocation11 + $0x18] sm:$0xff]
    %v783 = vsel %vm286, %v777, 0
    %785 = vmatprep.subr.mxu0 0.0
    %786 = vmatpush1.msra.mxu0 %v778
    %787 = vmatprep.subr.mxu0 0.0
    %788 = vmatpush1.msra.mxu0 %v779
    %789 = vmatprep.subr.mxu0 0.0
    %790 = vmatpush1.msra.mxu0 %v780
    %791 = vmatprep.subr.mxu0 0.0
    %792 = vmatpush1.msra.mxu0 %v781
    %793 = vmatprep.subr.mxu0 0.0
    %794 = vmatpush1.msra.mxu0 0.0
    %795 = vmatprep.subr.mxu0 0.0
    %796 = vmatpush1.msra.mxu0 0.0
    %797 = vmatprep.subr.mxu0 0.0
    %798 = vmatpush1.msra.mxu0 0.0
    %799 = vmatprep.subr.mxu0 0.0
    %800 = vmatpush1.msra.mxu0 0.0
    %801 = vmatprep.subr.mxu0 0.0
    %802 = vmatpush1.msra.mxu0 0.0
    %803 = vmatprep.subr.mxu0 0.0
    %804 = vmatpush1.msra.mxu0 0.0
    %805 = vmatprep.subr.mxu0 0.0
    %806 = vmatpush1.msra.mxu0 0.0
    %807 = vmatprep.subr.mxu0 0.0
    %808 = vmatpush1.msra.mxu0 0.0
    %809 = vmatprep.subr.mxu0 0.0
    %810 = vmatpush1.msra.mxu0 0.0
    %811 = vmatprep.subr.mxu0 0.0
    %812 = vmatpush1.msra.mxu0 0.0
    %813 = vmatprep.subr.mxu0 0.0
    %814 = vmatpush1.msra.mxu0 0.0
    %815 = vmatprep.subr.mxu0 0.0
    %816 = vmatpush1.msra.mxu0 0.0
    %817 = vmatprep.subr.mxu0 0.0
    %818 = vmatpush1.msra.mxu0 0.0
    %819 = vmatprep.subr.mxu0 0.0
    %820 = vmatpush1.msra.mxu0 0.0
    %821 = vmatprep.subr.mxu0 0.0
    %822 = vmatpush1.msra.mxu0 0.0
    %823 = vmatprep.subr.mxu0 0.0
    %824 = vmatpush1.msra.mxu0 0.0
    %825 = vmatprep.subr.mxu0 0.0
    %826 = vmatpush1.msra.mxu0 0.0
    %827 = vmatprep.subr.mxu0 0.0
    %828 = vmatpush1.msra.mxu0 0.0
    %829 = vmatprep.subr.mxu0 0.0
    %830 = vmatpush1.msra.mxu0 0.0
    %831 = vmatprep.subr.mxu0 0.0
    %832 = vmatpush1.msra.mxu0 0.0
    %833 = vmatprep.subr.mxu0 0.0
    %834 = vmatpush1.msra.mxu0 0.0
    %835 = vmatprep.subr.mxu0 0.0
    %836 = vmatpush1.msra.mxu0 0.0
    %837 = vmatprep.subr.mxu0 0.0
    %838 = vmatpush1.msra.mxu0 0.0
    %839 = vmatprep.subr.mxu0 0.0
    %840 = vmatpush1.msra.mxu0 0.0
    %841 = vmatprep.subr.mxu0 0.0
    %842 = vmatpush1.msra.mxu0 0.0
    %843 = vmatprep.subr.mxu0 0.0
    %844 = vmatpush1.msra.mxu0 0.0
    %845 = vmatprep.subr.mxu0 0.0
    %846 = vmatpush1.msra.mxu0 0.0
    %847 = vmatprep.subr.mxu0 0.0
    %848 = vmatpush1.msra.mxu0 0.0
    %849 = vmatprep.mubr.f32.mxu0 0.0
    %850 = vmatmul.mubr.f32.gmra.mrb[0].mxu0 %v783
    %v851 = vpop.f32.mrb[0].mxu0
    %v852 = vadd.f32 0.0, %v851
    %v853 = vpop.f32.mrb[0].mxu0
    %854 = vdwg.mxu0
    %v855 = vadd.f32 %v776, %v852
    %v856 = vxor.u32 %v855, 2147483648
    %v857 = vmul.f32 %v856, 1.442695
    %v858 = vpow.pop %v857
    %v859 = vadd.f32 %v858, 1.0
    %v860 = vrcp.pop %v859
    %v861 = vmul.f32 1.0, %v860
    %v862 = vtanh.pop %v855
    %v863 = vld [vmem:[#allocation5] sm:$0xff]
    %865 = vrot.lane.b32.xlu0 %v863, 32
    %v866 = vpop.permute.xlu0 %865
    %v868 = vmul.f32 %v861, %v866
    %870 = vrot.lane.b32.xlu0 %v862, 64
    %v871 = vpop.permute.xlu0 %870
    %v873 = vmul.f32 %v861, %v871
    %875 = vrot.lane.b32.xlu0 %v873, 32
    %v876 = vpop.permute.xlu0 %875
    %v878 = vadd.f32 %v868, %v876
    %v879 = vtanh.pop %v878
    %881 = vrot.lane.b32.xlu0 %v879, 64
    %v882 = vpop.permute.xlu0 %881
    %v884 = vmul.f32 %v861, %v882
    %886 = vrot.lane.b32.xlu0 %v878, 96
    %v887 = vpop.permute.xlu0 %886
    %889 = vst.msk [vmem:[#allocation5] sm:$0xff] %vm286, %v887
    %891 = vrot.lane.b32.xlu0 %v884, 32
    %v892 = vpop.permute.xlu0 %891
    %894 = vst.msk [vmem:[#allocation4] sm:$0xff] %vm286, %v892
    %s895 = scalar_lea.vmem [#allocation2], 32
    %896 = vst.msk [vmem:[%s895] sm:$0xff] %vm286, %v892
    %s897 = scalar_lea.vmem [#allocation3], 40
    %v898 = vld [vmem:[%s897] sm:$0xff]
    %v899 = vld [vmem:[#allocation4] sm:$0xff]
    %v900 = vld [vmem:[#allocation11] sm:$0xff]
    %v901 = vld [vmem:[#allocation11 + $0x8] sm:$0xff]
    %v902 = vld [vmem:[#allocation11 + $0x10] sm:$0xff]
    %v903 = vld [vmem:[#allocation11 + $0x18] sm:$0xff]
    %v905 = vsel %vm286, %v899, 0
    %907 = vmatprep.subr.mxu0 0.0
    %908 = vmatpush1.msra.mxu0 %v900
    %909 = vmatprep.subr.mxu0 0.0
    %910 = vmatpush1.msra.mxu0 %v901
    %911 = vmatprep.subr.mxu0 0.0
    %912 = vmatpush1.msra.mxu0 %v902
    %913 = vmatprep.subr.mxu0 0.0
    %914 = vmatpush1.msra.mxu0 %v903
    %915 = vmatprep.subr.mxu0 0.0
    %916 = vmatpush1.msra.mxu0 0.0
    %917 = vmatprep.subr.mxu0 0.0
    %918 = vmatpush1.msra.mxu0 0.0
    %919 = vmatprep.subr.mxu0 0.0
    %920 = vmatpush1.msra.mxu0 0.0
    %921 = vmatprep.subr.mxu0 0.0
    %922 = vmatpush1.msra.mxu0 0.0
    %923 = vmatprep.subr.mxu0 0.0
    %924 = vmatpush1.msra.mxu0 0.0
    %925 = vmatprep.subr.mxu0 0.0
    %926 = vmatpush1.msra.mxu0 0.0
    %927 = vmatprep.subr.mxu0 0.0
    %928 = vmatpush1.msra.mxu0 0.0
    %929 = vmatprep.subr.mxu0 0.0
    %930 = vmatpush1.msra.mxu0 0.0
    %931 = vmatprep.subr.mxu0 0.0
    %932 = vmatpush1.msra.mxu0 0.0
    %933 = vmatprep.subr.mxu0 0.0
    %934 = vmatpush1.msra.mxu0 0.0
    %935 = vmatprep.subr.mxu0 0.0
    %936 = vmatpush1.msra.mxu0 0.0
    %937 = vmatprep.subr.mxu0 0.0
    %938 = vmatpush1.msra.mxu0 0.0
    %939 = vmatprep.subr.mxu0 0.0
    %940 = vmatpush1.msra.mxu0 0.0
    %941 = vmatprep.subr.mxu0 0.0
    %942 = vmatpush1.msra.mxu0 0.0
    %943 = vmatprep.subr.mxu0 0.0
    %944 = vmatpush1.msra.mxu0 0.0
    %945 = vmatprep.subr.mxu0 0.0
    %946 = vmatpush1.msra.mxu0 0.0
    %947 = vmatprep.subr.mxu0 0.0
    %948 = vmatpush1.msra.mxu0 0.0
    %949 = vmatprep.subr.mxu0 0.0
    %950 = vmatpush1.msra.mxu0 0.0
    %951 = vmatprep.subr.mxu0 0.0
    %952 = vmatpush1.msra.mxu0 0.0
    %953 = vmatprep.subr.mxu0 0.0
    %954 = vmatpush1.msra.mxu0 0.0
    %955 = vmatprep.subr.mxu0 0.0
    %956 = vmatpush1.msra.mxu0 0.0
    %957 = vmatprep.subr.mxu0 0.0
    %958 = vmatpush1.msra.mxu0 0.0
    %959 = vmatprep.subr.mxu0 0.0
    %960 = vmatpush1.msra.mxu0 0.0
    %961 = vmatprep.subr.mxu0 0.0
    %962 = vmatpush1.msra.mxu0 0.0
    %963 = vmatprep.subr.mxu0 0.0
    %964 = vmatpush1.msra.mxu0 0.0
    %965 = vmatprep.subr.mxu0 0.0
    %966 = vmatpush1.msra.mxu0 0.0
    %967 = vmatprep.subr.mxu0 0.0
    %968 = vmatpush1.msra.mxu0 0.0
    %969 = vmatprep.subr.mxu0 0.0
    %970 = vmatpush1.msra.mxu0 0.0
    %971 = vmatprep.mubr.f32.mxu0 0.0
    %972 = vmatmul.mubr.f32.gmra.mrb[0].mxu0 %v905
    %v973 = vpop.f32.mrb[0].mxu0
    %v974 = vadd.f32 0.0, %v973
    %v975 = vpop.f32.mrb[0].mxu0
    %976 = vdwg.mxu0
    %v977 = vadd.f32 %v898, %v974
    %v978 = vxor.u32 %v977, 2147483648
    %v979 = vmul.f32 %v978, 1.442695
    %v980 = vpow.pop %v979
    %v981 = vadd.f32 %v980, 1.0
    %v982 = vrcp.pop %v981
    %v983 = vmul.f32 1.0, %v982
    %v984 = vtanh.pop %v977
    %v985 = vld [vmem:[#allocation5] sm:$0xff]
    %987 = vrot.lane.b32.xlu0 %v985, 32
    %v988 = vpop.permute.xlu0 %987
    %v990 = vmul.f32 %v983, %v988
    %992 = vrot.lane.b32.xlu0 %v984, 64
    %v993 = vpop.permute.xlu0 %992
    %v995 = vmul.f32 %v983, %v993
    %997 = vrot.lane.b32.xlu0 %v995, 32
    %v998 = vpop.permute.xlu0 %997
    %v1000 = vadd.f32 %v990, %v998
    %v1001 = vtanh.pop %v1000
    %1003 = vrot.lane.b32.xlu0 %v1001, 64
    %v1004 = vpop.permute.xlu0 %1003
    %v1006 = vmul.f32 %v983, %v1004
    %1008 = vrot.lane.b32.xlu0 %v1000, 96
    %v1009 = vpop.permute.xlu0 %1008
    %1011 = vst.msk [vmem:[#allocation5] sm:$0xff] %vm286, %v1009
    %1013 = vrot.lane.b32.xlu0 %v1006, 32
    %v1014 = vpop.permute.xlu0 %1013
    %1016 = vst.msk [vmem:[#allocation4] sm:$0xff] %vm286, %v1014
    %s1017 = scalar_lea.vmem [#allocation2], 40
    %1018 = vst.msk [vmem:[%s1017] sm:$0xff] %vm286, %v1014
    %s1019 = scalar_lea.vmem [#allocation3], 48
    %v1020 = vld [vmem:[%s1019] sm:$0xff]
    %v1021 = vld [vmem:[#allocation4] sm:$0xff]
    %v1022 = vld [vmem:[#allocation11] sm:$0xff]
    %v1023 = vld [vmem:[#allocation11 + $0x8] sm:$0xff]
    %v1024 = vld [vmem:[#allocation11 + $0x10] sm:$0xff]
    %v1025 = vld [vmem:[#allocation11 + $0x18] sm:$0xff]
    %v1027 = vsel %vm286, %v1021, 0
    %1029 = vmatprep.subr.mxu0 0.0
    %1030 = vmatpush1.msra.mxu0 %v1022
    %1031 = vmatprep.subr.mxu0 0.0
    %1032 = vmatpush1.msra.mxu0 %v1023
    %1033 = vmatprep.subr.mxu0 0.0
    %1034 = vmatpush1.msra.mxu0 %v1024
    %1035 = vmatprep.subr.mxu0 0.0
    %1036 = vmatpush1.msra.mxu0 %v1025
    %1037 = vmatprep.subr.mxu0 0.0
    %1038 = vmatpush1.msra.mxu0 0.0
    %1039 = vmatprep.subr.mxu0 0.0
    %1040 = vmatpush1.msra.mxu0 0.0
    %1041 = vmatprep.subr.mxu0 0.0
    %1042 = vmatpush1.msra.mxu0 0.0
    %1043 = vmatprep.subr.mxu0 0.0
    %1044 = vmatpush1.msra.mxu0 0.0
    %1045 = vmatprep.subr.mxu0 0.0
    %1046 = vmatpush1.msra.mxu0 0.0
    %1047 = vmatprep.subr.mxu0 0.0
    %1048 = vmatpush1.msra.mxu0 0.0
    %1049 = vmatprep.subr.mxu0 0.0
    %1050 = vmatpush1.msra.mxu0 0.0
    %1051 = vmatprep.subr.mxu0 0.0
    %1052 = vmatpush1.msra.mxu0 0.0
    %1053 = vmatprep.subr.mxu0 0.0
    %1054 = vmatpush1.msra.mxu0 0.0
    %1055 = vmatprep.subr.mxu0 0.0
    %1056 = vmatpush1.msra.mxu0 0.0
    %1057 = vmatprep.subr.mxu0 0.0
    %1058 = vmatpush1.msra.mxu0 0.0
    %1059 = vmatprep.subr.mxu0 0.0
    %1060 = vmatpush1.msra.mxu0 0.0
    %1061 = vmatprep.subr.mxu0 0.0
    %1062 = vmatpush1.msra.mxu0 0.0
    %1063 = vmatprep.subr.mxu0 0.0
    %1064 = vmatpush1.msra.mxu0 0.0
    %1065 = vmatprep.subr.mxu0 0.0
    %1066 = vmatpush1.msra.mxu0 0.0
    %1067 = vmatprep.subr.mxu0 0.0
    %1068 = vmatpush1.msra.mxu0 0.0
    %1069 = vmatprep.subr.mxu0 0.0
    %1070 = vmatpush1.msra.mxu0 0.0
    %1071 = vmatprep.subr.mxu0 0.0
    %1072 = vmatpush1.msra.mxu0 0.0
    %1073 = vmatprep.subr.mxu0 0.0
    %1074 = vmatpush1.msra.mxu0 0.0
    %1075 = vmatprep.subr.mxu0 0.0
    %1076 = vmatpush1.msra.mxu0 0.0
    %1077 = vmatprep.subr.mxu0 0.0
    %1078 = vmatpush1.msra.mxu0 0.0
    %1079 = vmatprep.subr.mxu0 0.0
    %1080 = vmatpush1.msra.mxu0 0.0
    %1081 = vmatprep.subr.mxu0 0.0
    %1082 = vmatpush1.msra.mxu0 0.0
    %1083 = vmatprep.subr.mxu0 0.0
    %1084 = vmatpush1.msra.mxu0 0.0
    %1085 = vmatprep.subr.mxu0 0.0
    %1086 = vmatpush1.msra.mxu0 0.0
    %1087 = vmatprep.subr.mxu0 0.0
    %1088 = vmatpush1.msra.mxu0 0.0
    %1089 = vmatprep.subr.mxu0 0.0
    %1090 = vmatpush1.msra.mxu0 0.0
    %1091 = vmatprep.subr.mxu0 0.0
    %1092 = vmatpush1.msra.mxu0 0.0
    %1093 = vmatprep.mubr.f32.mxu0 0.0
    %1094 = vmatmul.mubr.f32.gmra.mrb[0].mxu0 %v1027
    %v1095 = vpop.f32.mrb[0].mxu0
    %v1096 = vadd.f32 0.0, %v1095
    %v1097 = vpop.f32.mrb[0].mxu0
    %1098 = vdwg.mxu0
    %v1099 = vadd.f32 %v1020, %v1096
    %v1100 = vxor.u32 %v1099, 2147483648
    %v1101 = vmul.f32 %v1100, 1.442695
    %v1102 = vpow.pop %v1101
    %v1103 = vadd.f32 %v1102, 1.0
    %v1104 = vrcp.pop %v1103
    %v1105 = vmul.f32 1.0, %v1104
    %v1106 = vtanh.pop %v1099
    %v1107 = vld [vmem:[#allocation5] sm:$0xff]
    %1109 = vrot.lane.b32.xlu0 %v1107, 32
    %v1110 = vpop.permute.xlu0 %1109
    %v1112 = vmul.f32 %v1105, %v1110
    %1114 = vrot.lane.b32.xlu0 %v1106, 64
    %v1115 = vpop.permute.xlu0 %1114
    %v1117 = vmul.f32 %v1105, %v1115
    %1119 = vrot.lane.b32.xlu0 %v1117, 32
    %v1120 = vpop.permute.xlu0 %1119
    %v1122 = vadd.f32 %v1112, %v1120
    %v1123 = vtanh.pop %v1122
    %1125 = vrot.lane.b32.xlu0 %v1123, 64
    %v1126 = vpop.permute.xlu0 %1125
    %v1128 = vmul.f32 %v1105, %v1126
    %1130 = vrot.lane.b32.xlu0 %v1122, 96
    %v1131 = vpop.permute.xlu0 %1130
    %1133 = vst.msk [vmem:[#allocation5] sm:$0xff] %vm286, %v1131
    %1135 = vrot.lane.b32.xlu0 %v1128, 32
    %v1136 = vpop.permute.xlu0 %1135
    %1138 = vst.msk [vmem:[#allocation4] sm:$0xff] %vm286, %v1136
    %s1139 = scalar_lea.vmem [#allocation2], 48
    %1140 = vst.msk [vmem:[%s1139] sm:$0xff] %vm286, %v1136
    %s1141 = scalar_lea.vmem [#allocation3], 56
    %v1142 = vld [vmem:[%s1141] sm:$0xff]
    %v1143 = vld [vmem:[#allocation4] sm:$0xff]
    %v1144 = vld [vmem:[#allocation11] sm:$0xff]
    %v1145 = vld [vmem:[#allocation11 + $0x8] sm:$0xff]
    %v1146 = vld [vmem:[#allocation11 + $0x10] sm:$0xff]
    %v1147 = vld [vmem:[#allocation11 + $0x18] sm:$0xff]
    %v1149 = vsel %vm286, %v1143, 0
    %1151 = vmatprep.subr.mxu0 0.0
    %1152 = vmatpush1.msra.mxu0 %v1144
    %1153 = vmatprep.subr.mxu0 0.0
    %1154 = vmatpush1.msra.mxu0 %v1145
    %1155 = vmatprep.subr.mxu0 0.0
    %1156 = vmatpush1.msra.mxu0 %v1146
    %1157 = vmatprep.subr.mxu0 0.0
    %1158 = vmatpush1.msra.mxu0 %v1147
    %1159 = vmatprep.subr.mxu0 0.0
    %1160 = vmatpush1.msra.mxu0 0.0
    %1161 = vmatprep.subr.mxu0 0.0
    %1162 = vmatpush1.msra.mxu0 0.0
    %1163 = vmatprep.subr.mxu0 0.0
    %1164 = vmatpush1.msra.mxu0 0.0
    %1165 = vmatprep.subr.mxu0 0.0
    %1166 = vmatpush1.msra.mxu0 0.0
    %1167 = vmatprep.subr.mxu0 0.0
    %1168 = vmatpush1.msra.mxu0 0.0
    %1169 = vmatprep.subr.mxu0 0.0
    %1170 = vmatpush1.msra.mxu0 0.0
    %1171 = vmatprep.subr.mxu0 0.0
    %1172 = vmatpush1.msra.mxu0 0.0
    %1173 = vmatprep.subr.mxu0 0.0
    %1174 = vmatpush1.msra.mxu0 0.0
    %1175 = vmatprep.subr.mxu0 0.0
    %1176 = vmatpush1.msra.mxu0 0.0
    %1177 = vmatprep.subr.mxu0 0.0
    %1178 = vmatpush1.msra.mxu0 0.0
    %1179 = vmatprep.subr.mxu0 0.0
    %1180 = vmatpush1.msra.mxu0 0.0
    %1181 = vmatprep.subr.mxu0 0.0
    %1182 = vmatpush1.msra.mxu0 0.0
    %1183 = vmatprep.subr.mxu0 0.0
    %1184 = vmatpush1.msra.mxu0 0.0
    %1185 = vmatprep.subr.mxu0 0.0
    %1186 = vmatpush1.msra.mxu0 0.0
    %1187 = vmatprep.subr.mxu0 0.0
    %1188 = vmatpush1.msra.mxu0 0.0
    %1189 = vmatprep.subr.mxu0 0.0
    %1190 = vmatpush1.msra.mxu0 0.0
    %1191 = vmatprep.subr.mxu0 0.0
    %1192 = vmatpush1.msra.mxu0 0.0
    %1193 = vmatprep.subr.mxu0 0.0
    %1194 = vmatpush1.msra.mxu0 0.0
    %1195 = vmatprep.subr.mxu0 0.0
    %1196 = vmatpush1.msra.mxu0 0.0
    %1197 = vmatprep.subr.mxu0 0.0
    %1198 = vmatpush1.msra.mxu0 0.0
    %1199 = vmatprep.subr.mxu0 0.0
    %1200 = vmatpush1.msra.mxu0 0.0
    %1201 = vmatprep.subr.mxu0 0.0
    %1202 = vmatpush1.msra.mxu0 0.0
    %1203 = vmatprep.subr.mxu0 0.0
    %1204 = vmatpush1.msra.mxu0 0.0
    %1205 = vmatprep.subr.mxu0 0.0
    %1206 = vmatpush1.msra.mxu0 0.0
    %1207 = vmatprep.subr.mxu0 0.0
    %1208 = vmatpush1.msra.mxu0 0.0
    %1209 = vmatprep.subr.mxu0 0.0
    %1210 = vmatpush1.msra.mxu0 0.0
    %1211 = vmatprep.subr.mxu0 0.0
    %1212 = vmatpush1.msra.mxu0 0.0
    %1213 = vmatprep.subr.mxu0 0.0
    %1214 = vmatpush1.msra.mxu0 0.0
    %1215 = vmatprep.mubr.f32.mxu0 0.0
    %1216 = vmatmul.mubr.f32.gmra.mrb[0].mxu0 %v1149
    %v1217 = vpop.f32.mrb[0].mxu0
    %v1218 = vadd.f32 0.0, %v1217
    %v1219 = vpop.f32.mrb[0].mxu0
    %1220 = vdwg.mxu0
    %v1221 = vadd.f32 %v1142, %v1218
    %v1222 = vxor.u32 %v1221, 2147483648
    %v1223 = vmul.f32 %v1222, 1.442695
    %v1224 = vpow.pop %v1223
    %v1225 = vadd.f32 %v1224, 1.0
    %v1226 = vrcp.pop %v1225
    %v1227 = vmul.f32 1.0, %v1226
    %v1228 = vtanh.pop %v1221
    %v1229 = vld [vmem:[#allocation5] sm:$0xff]
    %1231 = vrot.lane.b32.xlu0 %v1229, 32
    %v1232 = vpop.permute.xlu0 %1231
    %v1234 = vmul.f32 %v1227, %v1232
    %1236 = vrot.lane.b32.xlu0 %v1228, 64
    %v1237 = vpop.permute.xlu0 %1236
    %v1239 = vmul.f32 %v1227, %v1237
    %1241 = vrot.lane.b32.xlu0 %v1239, 32
    %v1242 = vpop.permute.xlu0 %1241
    %v1244 = vadd.f32 %v1234, %v1242
    %v1245 = vtanh.pop %v1244
    %1247 = vrot.lane.b32.xlu0 %v1245, 64
    %v1248 = vpop.permute.xlu0 %1247
    %v1250 = vmul.f32 %v1227, %v1248
    %1252 = vrot.lane.b32.xlu0 %v1244, 96
    %v1253 = vpop.permute.xlu0 %1252
    %1255 = vst.msk [vmem:[#allocation5] sm:$0xff] %vm286, %v1253
    %1257 = vrot.lane.b32.xlu0 %v1250, 32
    %v1258 = vpop.permute.xlu0 %1257
    %1260 = vst.msk [vmem:[#allocation4] sm:$0xff] %vm286, %v1258
    %s1261 = scalar_lea.vmem [#allocation2], 56
    %1262 = vst.msk [vmem:[%s1261] sm:$0xff] %vm286, %v1258
    %v1263 = vld [vmem:[#allocation2] sm:$0xff]
    %v1264 = vld [vmem:[#allocation2 + $0x8] sm:$0xff]
    %v1265 = vld [vmem:[#allocation2 + $0x10] sm:$0xff]
    %v1266 = vld [vmem:[#allocation2 + $0x18] sm:$0xff]
    %v1267 = vld [vmem:[#allocation2 + $0x20] sm:$0xff]
    %v1268 = vld [vmem:[#allocation2 + $0x28] sm:$0xff]
    %v1269 = vld [vmem:[#allocation2 + $0x30] sm:$0xff]
    %v1270 = vld [vmem:[#allocation2 + $0x38] sm:$0xff]
    %v1271 = vld [vmem:[#allocation12] sm:$0xff]
    %v1272 = vld [vmem:[#allocation12 + $0x8] sm:$0xff]
    %v1273 = vld [vmem:[#allocation12 + $0x10] sm:$0xff]
    %v1274 = vld [vmem:[#allocation12 + $0x18] sm:$0xff]
    %v1275 = vld [vmem:[%s6] sm:$0x1]
    %v1277 = vlaneseq
    %v1278 = vshrl.u32 %v1277, 7
    %v1279 = vsub.s32 0, %v1278
    %v1280 = vrot.slane %v1275, %v1279
    %v1283 = vsel %vm286, %v1263, 0
    %v1286 = vsel %vm286, %v1264, 0
    %v1289 = vsel %vm286, %v1265, 0
    %v1292 = vsel %vm286, %v1266, 0
    %v1295 = vsel %vm286, %v1267, 0
    %v1298 = vsel %vm286, %v1268, 0
    %v1301 = vsel %vm286, %v1269, 0
    %v1304 = vsel %vm286, %v1270, 0
    %1306 = vmatprep.subr.mxu0 0.0
    %1307 = vmatpush1.msra.mxu0 %v1271
    %1308 = vmatprep.subr.mxu0 0.0
    %1309 = vmatpush1.msra.mxu0 %v1272
    %1310 = vmatprep.subr.mxu0 0.0
    %1311 = vmatpush1.msra.mxu0 %v1273
    %1312 = vmatprep.subr.mxu0 0.0
    %1313 = vmatpush1.msra.mxu0 %v1274
    %1314 = vmatprep.subr.mxu0 0.0
    %1315 = vmatpush1.msra.mxu0 0.0
    %1316 = vmatprep.subr.mxu0 0.0
    %1317 = vmatpush1.msra.mxu0 0.0
    %1318 = vmatprep.subr.mxu0 0.0
    %1319 = vmatpush1.msra.mxu0 0.0
    %1320 = vmatprep.subr.mxu0 0.0
    %1321 = vmatpush1.msra.mxu0 0.0
    %1322 = vmatprep.subr.mxu0 0.0
    %1323 = vmatpush1.msra.mxu0 0.0
    %1324 = vmatprep.subr.mxu0 0.0
    %1325 = vmatpush1.msra.mxu0 0.0
    %1326 = vmatprep.subr.mxu0 0.0
    %1327 = vmatpush1.msra.mxu0 0.0
    %1328 = vmatprep.subr.mxu0 0.0
    %1329 = vmatpush1.msra.mxu0 0.0
    %1330 = vmatprep.subr.mxu0 0.0
    %1331 = vmatpush1.msra.mxu0 0.0
    %1332 = vmatprep.subr.mxu0 0.0
    %1333 = vmatpush1.msra.mxu0 0.0
    %1334 = vmatprep.subr.mxu0 0.0
    %1335 = vmatpush1.msra.mxu0 0.0
    %1336 = vmatprep.subr.mxu0 0.0
    %1337 = vmatpush1.msra.mxu0 0.0
    %1338 = vmatprep.subr.mxu0 0.0
    %1339 = vmatpush1.msra.mxu0 0.0
    %1340 = vmatprep.subr.mxu0 0.0
    %1341 = vmatpush1.msra.mxu0 0.0
    %1342 = vmatprep.subr.mxu0 0.0
    %1343 = vmatpush1.msra.mxu0 0.0
    %1344 = vmatprep.subr.mxu0 0.0
    %1345 = vmatpush1.msra.mxu0 0.0
    %1346 = vmatprep.subr.mxu0 0.0
    %1347 = vmatpush1.msra.mxu0 0.0
    %1348 = vmatprep.subr.mxu0 0.0
    %1349 = vmatpush1.msra.mxu0 0.0
    %1350 = vmatprep.subr.mxu0 0.0
    %1351 = vmatpush1.msra.mxu0 0.0
    %1352 = vmatprep.subr.mxu0 0.0
    %1353 = vmatpush1.msra.mxu0 0.0
    %1354 = vmatprep.subr.mxu0 0.0
    %1355 = vmatpush1.msra.mxu0 0.0
    %1356 = vmatprep.subr.mxu0 0.0
    %1357 = vmatpush1.msra.mxu0 0.0
    %1358 = vmatprep.subr.mxu0 0.0
    %1359 = vmatpush1.msra.mxu0 0.0
    %1360 = vmatprep.subr.mxu0 0.0
    %1361 = vmatpush1.msra.mxu0 0.0
    %1362 = vmatprep.subr.mxu0 0.0
    %1363 = vmatpush1.msra.mxu0 0.0
    %1364 = vmatprep.subr.mxu0 0.0
    %1365 = vmatpush1.msra.mxu0 0.0
    %1366 = vmatprep.subr.mxu0 0.0
    %1367 = vmatpush1.msra.mxu0 0.0
    %1368 = vmatprep.subr.mxu0 0.0
    %1369 = vmatpush1.msra.mxu0 0.0
    %1370 = vmatprep.mubr.f32.mxu0 0.0
    %1371 = vmatmul.mubr.f32.gmra.mrb[0].mxu0 %v1283
    %v1372 = vpop.f32.mrb[0].mxu0
    %v1373 = vadd.f32 %v1280, %v1372
    %v1374 = vpop.f32.mrb[0].mxu0
    %1375 = vmatprep.mubr.f32.mxu0 0.0
    %1376 = vmatmul.mubr.f32.gmra.mrb[0].mxu0 %v1286
    %v1377 = vpop.f32.mrb[0].mxu0
    %v1378 = vadd.f32 %v1280, %v1377
    %v1379 = vpop.f32.mrb[0].mxu0
    %1380 = vmatprep.mubr.f32.mxu0 0.0
    %1381 = vmatmul.mubr.f32.gmra.mrb[0].mxu0 %v1289
    %v1382 = vpop.f32.mrb[0].mxu0
    %v1383 = vadd.f32 %v1280, %v1382
    %v1384 = vpop.f32.mrb[0].mxu0
    %1385 = vmatprep.mubr.f32.mxu0 0.0
    %1386 = vmatmul.mubr.f32.gmra.mrb[0].mxu0 %v1292
    %v1387 = vpop.f32.mrb[0].mxu0
    %v1388 = vadd.f32 %v1280, %v1387
    %v1389 = vpop.f32.mrb[0].mxu0
    %1390 = vmatprep.mubr.f32.mxu0 0.0
    %1391 = vmatmul.mubr.f32.gmra.mrb[0].mxu0 %v1295
    %v1392 = vpop.f32.mrb[0].mxu0
    %v1393 = vadd.f32 %v1280, %v1392
    %v1394 = vpop.f32.mrb[0].mxu0
    %1395 = vmatprep.mubr.f32.mxu0 0.0
    %1396 = vmatmul.mubr.f32.gmra.mrb[0].mxu0 %v1298
    %v1397 = vpop.f32.mrb[0].mxu0
    %v1398 = vadd.f32 %v1280, %v1397
    %v1399 = vpop.f32.mrb[0].mxu0
    %1400 = vmatprep.mubr.f32.mxu0 0.0
    %1401 = vmatmul.mubr.f32.gmra.mrb[0].mxu0 %v1301
    %v1402 = vpop.f32.mrb[0].mxu0
    %v1403 = vadd.f32 %v1280, %v1402
    %v1404 = vpop.f32.mrb[0].mxu0
    %1405 = vmatprep.mubr.f32.mxu0 0.0
    %1406 = vmatmul.mubr.f32.gmra.mrb[0].mxu0 %v1304
    %v1407 = vpop.f32.mrb[0].mxu0
    %v1408 = vadd.f32 %v1280, %v1407
    %v1409 = vpop.f32.mrb[0].mxu0
    %1410 = vdwg.mxu0
    %1411 = vst [vmem:[#allocation3] sm:$0xff] %v1373
    %1412 = vst [vmem:[#allocation3 + $0x8] sm:$0xff] %v1378
    %1413 = vst [vmem:[#allocation3 + $0x10] sm:$0xff] %v1383
    %1414 = vst [vmem:[#allocation3 + $0x18] sm:$0xff] %v1388
    %1415 = vst [vmem:[#allocation3 + $0x20] sm:$0xff] %v1393
    %1416 = vst [vmem:[#allocation3 + $0x28] sm:$0xff] %v1398
    %1417 = vst [vmem:[#allocation3 + $0x30] sm:$0xff] %v1403
    %1418 = vst [vmem:[#allocation3 + $0x38] sm:$0xff] %v1408
    %1419 = vst.msk [vmem:[#allocation4] sm:$0xff] %vm286, 0.0
    %1420 = vst.msk [vmem:[#allocation5] sm:$0xff] %vm286, 0.0
    %v1421 = vld [vmem:[#allocation3] sm:$0xff]
    %v1422 = vld [vmem:[#allocation4] sm:$0xff]
    %v1423 = vld [vmem:[#allocation14] sm:$0xff]
    %v1424 = vld [vmem:[#allocation14 + $0x8] sm:$0xff]
    %v1425 = vld [vmem:[#allocation14 + $0x10] sm:$0xff]
    %v1426 = vld [vmem:[#allocation14 + $0x18] sm:$0xff]
    %v1428 = vsel %vm286, %v1422, 0
    %1430 = vmatprep.subr.mxu0 0.0
    %1431 = vmatpush1.msra.mxu0 %v1423
    %1432 = vmatprep.subr.mxu0 0.0
    %1433 = vmatpush1.msra.mxu0 %v1424
    %1434 = vmatprep.subr.mxu0 0.0
    %1435 = vmatpush1.msra.mxu0 %v1425
    %1436 = vmatprep.subr.mxu0 0.0
    %1437 = vmatpush1.msra.mxu0 %v1426
    %1438 = vmatprep.subr.mxu0 0.0
    %1439 = vmatpush1.msra.mxu0 0.0
    %1440 = vmatprep.subr.mxu0 0.0
    %1441 = vmatpush1.msra.mxu0 0.0
    %1442 = vmatprep.subr.mxu0 0.0
    %1443 = vmatpush1.msra.mxu0 0.0
    %1444 = vmatprep.subr.mxu0 0.0
    %1445 = vmatpush1.msra.mxu0 0.0
    %1446 = vmatprep.subr.mxu0 0.0
    %1447 = vmatpush1.msra.mxu0 0.0
    %1448 = vmatprep.subr.mxu0 0.0
    %1449 = vmatpush1.msra.mxu0 0.0
    %1450 = vmatprep.subr.mxu0 0.0
    %1451 = vmatpush1.msra.mxu0 0.0
    %1452 = vmatprep.subr.mxu0 0.0
    %1453 = vmatpush1.msra.mxu0 0.0
    %1454 = vmatprep.subr.mxu0 0.0
    %1455 = vmatpush1.msra.mxu0 0.0
    %1456 = vmatprep.subr.mxu0 0.0
    %1457 = vmatpush1.msra.mxu0 0.0
    %1458 = vmatprep.subr.mxu0 0.0
    %1459 = vmatpush1.msra.mxu0 0.0
    %1460 = vmatprep.subr.mxu0 0.0
    %1461 = vmatpush1.msra.mxu0 0.0
    %1462 = vmatprep.subr.mxu0 0.0
    %1463 = vmatpush1.msra.mxu0 0.0
    %1464 = vmatprep.subr.mxu0 0.0
    %1465 = vmatpush1.msra.mxu0 0.0
    %1466 = vmatprep.subr.mxu0 0.0
    %1467 = vmatpush1.msra.mxu0 0.0
    %1468 = vmatprep.subr.mxu0 0.0
    %1469 = vmatpush1.msra.mxu0 0.0
    %1470 = vmatprep.subr.mxu0 0.0
    %1471 = vmatpush1.msra.mxu0 0.0
    %1472 = vmatprep.subr.mxu0 0.0
    %1473 = vmatpush1.msra.mxu0 0.0
    %1474 = vmatprep.subr.mxu0 0.0
    %1475 = vmatpush1.msra.mxu0 0.0
    %1476 = vmatprep.subr.mxu0 0.0
    %1477 = vmatpush1.msra.mxu0 0.0
    %1478 = vmatprep.subr.mxu0 0.0
    %1479 = vmatpush1.msra.mxu0 0.0
    %1480 = vmatprep.subr.mxu0 0.0
    %1481 = vmatpush1.msra.mxu0 0.0
    %1482 = vmatprep.subr.mxu0 0.0
    %1483 = vmatpush1.msra.mxu0 0.0
    %1484 = vmatprep.subr.mxu0 0.0
    %1485 = vmatpush1.msra.mxu0 0.0
    %1486 = vmatprep.subr.mxu0 0.0
    %1487 = vmatpush1.msra.mxu0 0.0
    %1488 = vmatprep.subr.mxu0 0.0
    %1489 = vmatpush1.msra.mxu0 0.0
    %1490 = vmatprep.subr.mxu0 0.0
    %1491 = vmatpush1.msra.mxu0 0.0
    %1492 = vmatprep.subr.mxu0 0.0
    %1493 = vmatpush1.msra.mxu0 0.0
    %1494 = vmatprep.mubr.f32.mxu0 0.0
    %1495 = vmatmul.mubr.f32.gmra.mrb[0].mxu0 %v1428
    %v1496 = vpop.f32.mrb[0].mxu0
    %v1497 = vadd.f32 0.0, %v1496
    %v1498 = vpop.f32.mrb[0].mxu0
    %1499 = vdwg.mxu0
    %v1500 = vadd.f32 %v1421, %v1497
    %v1501 = vxor.u32 %v1500, 2147483648
    %v1502 = vmul.f32 %v1501, 1.442695
    %v1503 = vpow.pop %v1502
    %v1504 = vadd.f32 %v1503, 1.0
    %v1505 = vrcp.pop %v1504
    %v1506 = vmul.f32 1.0, %v1505
    %v1507 = vtanh.pop %v1500
    %v1508 = vld [vmem:[#allocation5] sm:$0xff]
    %1510 = vrot.lane.b32.xlu0 %v1508, 32
    %v1511 = vpop.permute.xlu0 %1510
    %v1513 = vmul.f32 %v1506, %v1511
    %1515 = vrot.lane.b32.xlu0 %v1507, 64
    %v1516 = vpop.permute.xlu0 %1515
    %v1518 = vmul.f32 %v1506, %v1516
    %1520 = vrot.lane.b32.xlu0 %v1518, 32
    %v1521 = vpop.permute.xlu0 %1520
    %v1523 = vadd.f32 %v1513, %v1521
    %v1524 = vtanh.pop %v1523
    %1526 = vrot.lane.b32.xlu0 %v1524, 64
    %v1527 = vpop.permute.xlu0 %1526
    %v1529 = vmul.f32 %v1506, %v1527
    %1531 = vrot.lane.b32.xlu0 %v1523, 96
    %v1532 = vpop.permute.xlu0 %1531
    %1534 = vst.msk [vmem:[#allocation5] sm:$0xff] %vm286, %v1532
    %1536 = vrot.lane.b32.xlu0 %v1529, 32
    %v1537 = vpop.permute.xlu0 %1536
    %1539 = vst.msk [vmem:[#allocation4] sm:$0xff] %vm286, %v1537
    %1540 = vst.msk [vmem:[#allocation2] sm:$0xff] %vm286, %v1537
    %v1541 = vld [vmem:[%s409] sm:$0xff]
    %v1542 = vld [vmem:[#allocation4] sm:$0xff]
    %v1543 = vld [vmem:[#allocation14] sm:$0xff]
    %v1544 = vld [vmem:[#allocation14 + $0x8] sm:$0xff]
    %v1545 = vld [vmem:[#allocation14 + $0x10] sm:$0xff]
    %v1546 = vld [vmem:[#allocation14 + $0x18] sm:$0xff]
    %v1548 = vsel %vm286, %v1542, 0
    %1550 = vmatprep.subr.mxu0 0.0
    %1551 = vmatpush1.msra.mxu0 %v1543
    %1552 = vmatprep.subr.mxu0 0.0
    %1553 = vmatpush1.msra.mxu0 %v1544
    %1554 = vmatprep.subr.mxu0 0.0
    %1555 = vmatpush1.msra.mxu0 %v1545
    %1556 = vmatprep.subr.mxu0 0.0
    %1557 = vmatpush1.msra.mxu0 %v1546
    %1558 = vmatprep.subr.mxu0 0.0
    %1559 = vmatpush1.msra.mxu0 0.0
    %1560 = vmatprep.subr.mxu0 0.0
    %1561 = vmatpush1.msra.mxu0 0.0
    %1562 = vmatprep.subr.mxu0 0.0
    %1563 = vmatpush1.msra.mxu0 0.0
    %1564 = vmatprep.subr.mxu0 0.0
    %1565 = vmatpush1.msra.mxu0 0.0
    %1566 = vmatprep.subr.mxu0 0.0
    %1567 = vmatpush1.msra.mxu0 0.0
    %1568 = vmatprep.subr.mxu0 0.0
    %1569 = vmatpush1.msra.mxu0 0.0
    %1570 = vmatprep.subr.mxu0 0.0
    %1571 = vmatpush1.msra.mxu0 0.0
    %1572 = vmatprep.subr.mxu0 0.0
    %1573 = vmatpush1.msra.mxu0 0.0
    %1574 = vmatprep.subr.mxu0 0.0
    %1575 = vmatpush1.msra.mxu0 0.0
    %1576 = vmatprep.subr.mxu0 0.0
    %1577 = vmatpush1.msra.mxu0 0.0
    %1578 = vmatprep.subr.mxu0 0.0
    %1579 = vmatpush1.msra.mxu0 0.0
    %1580 = vmatprep.subr.mxu0 0.0
    %1581 = vmatpush1.msra.mxu0 0.0
    %1582 = vmatprep.subr.mxu0 0.0
    %1583 = vmatpush1.msra.mxu0 0.0
    %1584 = vmatprep.subr.mxu0 0.0
    %1585 = vmatpush1.msra.mxu0 0.0
    %1586 = vmatprep.subr.mxu0 0.0
    %1587 = vmatpush1.msra.mxu0 0.0
    %1588 = vmatprep.subr.mxu0 0.0
    %1589 = vmatpush1.msra.mxu0 0.0
    %1590 = vmatprep.subr.mxu0 0.0
    %1591 = vmatpush1.msra.mxu0 0.0
    %1592 = vmatprep.subr.mxu0 0.0
    %1593 = vmatpush1.msra.mxu0 0.0
    %1594 = vmatprep.subr.mxu0 0.0
    %1595 = vmatpush1.msra.mxu0 0.0
    %1596 = vmatprep.subr.mxu0 0.0
    %1597 = vmatpush1.msra.mxu0 0.0
    %1598 = vmatprep.subr.mxu0 0.0
    %1599 = vmatpush1.msra.mxu0 0.0
    %1600 = vmatprep.subr.mxu0 0.0
    %1601 = vmatpush1.msra.mxu0 0.0
    %1602 = vmatprep.subr.mxu0 0.0
    %1603 = vmatpush1.msra.mxu0 0.0
    %1604 = vmatprep.subr.mxu0 0.0
    %1605 = vmatpush1.msra.mxu0 0.0
    %1606 = vmatprep.subr.mxu0 0.0
    %1607 = vmatpush1.msra.mxu0 0.0
    %1608 = vmatprep.subr.mxu0 0.0
    %1609 = vmatpush1.msra.mxu0 0.0
    %1610 = vmatprep.subr.mxu0 0.0
    %1611 = vmatpush1.msra.mxu0 0.0
    %1612 = vmatprep.subr.mxu0 0.0
    %1613 = vmatpush1.msra.mxu0 0.0
    %1614 = vmatprep.mubr.f32.mxu0 0.0
    %1615 = vmatmul.mubr.f32.gmra.mrb[0].mxu0 %v1548
    %v1616 = vpop.f32.mrb[0].mxu0
    %v1617 = vadd.f32 0.0, %v1616
    %v1618 = vpop.f32.mrb[0].mxu0
    %1619 = vdwg.mxu0
    %v1620 = vadd.f32 %v1541, %v1617
    %v1621 = vxor.u32 %v1620, 2147483648
    %v1622 = vmul.f32 %v1621, 1.442695
    %v1623 = vpow.pop %v1622
    %v1624 = vadd.f32 %v1623, 1.0
    %v1625 = vrcp.pop %v1624
    %v1626 = vmul.f32 1.0, %v1625
    %v1627 = vtanh.pop %v1620
    %v1628 = vld [vmem:[#allocation5] sm:$0xff]
    %1630 = vrot.lane.b32.xlu0 %v1628, 32
    %v1631 = vpop.permute.xlu0 %1630
    %v1633 = vmul.f32 %v1626, %v1631
    %1635 = vrot.lane.b32.xlu0 %v1627, 64
    %v1636 = vpop.permute.xlu0 %1635
    %v1638 = vmul.f32 %v1626, %v1636
    %1640 = vrot.lane.b32.xlu0 %v1638, 32
    %v1641 = vpop.permute.xlu0 %1640
    %v1643 = vadd.f32 %v1633, %v1641
    %v1644 = vtanh.pop %v1643
    %1646 = vrot.lane.b32.xlu0 %v1644, 64
    %v1647 = vpop.permute.xlu0 %1646
    %v1649 = vmul.f32 %v1626, %v1647
    %1651 = vrot.lane.b32.xlu0 %v1643, 96
    %v1652 = vpop.permute.xlu0 %1651
    %1654 = vst.msk [vmem:[#allocation5] sm:$0xff] %vm286, %v1652
    %1656 = vrot.lane.b32.xlu0 %v1649, 32
    %v1657 = vpop.permute.xlu0 %1656
    %1659 = vst.msk [vmem:[#allocation4] sm:$0xff] %vm286, %v1657
    %1660 = vst.msk [vmem:[%s529] sm:$0xff] %vm286, %v1657
    %v1661 = vld [vmem:[%s531] sm:$0xff]
    %v1662 = vld [vmem:[#allocation4] sm:$0xff]
    %v1663 = vld [vmem:[#allocation14] sm:$0xff]
    %v1664 = vld [vmem:[#allocation14 + $0x8] sm:$0xff]
    %v1665 = vld [vmem:[#allocation14 + $0x10] sm:$0xff]
    %v1666 = vld [vmem:[#allocation14 + $0x18] sm:$0xff]
    %v1668 = vsel %vm286, %v1662, 0
    %1670 = vmatprep.subr.mxu0 0.0
    %1671 = vmatpush1.msra.mxu0 %v1663
    %1672 = vmatprep.subr.mxu0 0.0
    %1673 = vmatpush1.msra.mxu0 %v1664
    %1674 = vmatprep.subr.mxu0 0.0
    %1675 = vmatpush1.msra.mxu0 %v1665
    %1676 = vmatprep.subr.mxu0 0.0
    %1677 = vmatpush1.msra.mxu0 %v1666
    %1678 = vmatprep.subr.mxu0 0.0
    %1679 = vmatpush1.msra.mxu0 0.0
    %1680 = vmatprep.subr.mxu0 0.0
    %1681 = vmatpush1.msra.mxu0 0.0
    %1682 = vmatprep.subr.mxu0 0.0
    %1683 = vmatpush1.msra.mxu0 0.0
    %1684 = vmatprep.subr.mxu0 0.0
    %1685 = vmatpush1.msra.mxu0 0.0
    %1686 = vmatprep.subr.mxu0 0.0
    %1687 = vmatpush1.msra.mxu0 0.0
    %1688 = vmatprep.subr.mxu0 0.0
    %1689 = vmatpush1.msra.mxu0 0.0
    %1690 = vmatprep.subr.mxu0 0.0
    %1691 = vmatpush1.msra.mxu0 0.0
    %1692 = vmatprep.subr.mxu0 0.0
    %1693 = vmatpush1.msra.mxu0 0.0
    %1694 = vmatprep.subr.mxu0 0.0
    %1695 = vmatpush1.msra.mxu0 0.0
    %1696 = vmatprep.subr.mxu0 0.0
    %1697 = vmatpush1.msra.mxu0 0.0
    %1698 = vmatprep.subr.mxu0 0.0
    %1699 = vmatpush1.msra.mxu0 0.0
    %1700 = vmatprep.subr.mxu0 0.0
    %1701 = vmatpush1.msra.mxu0 0.0
    %1702 = vmatprep.subr.mxu0 0.0
    %1703 = vmatpush1.msra.mxu0 0.0
    %1704 = vmatprep.subr.mxu0 0.0
    %1705 = vmatpush1.msra.mxu0 0.0
    %1706 = vmatprep.subr.mxu0 0.0
    %1707 = vmatpush1.msra.mxu0 0.0
    %1708 = vmatprep.subr.mxu0 0.0
    %1709 = vmatpush1.msra.mxu0 0.0
    %1710 = vmatprep.subr.mxu0 0.0
    %1711 = vmatpush1.msra.mxu0 0.0
    %1712 = vmatprep.subr.mxu0 0.0
    %1713 = vmatpush1.msra.mxu0 0.0
    %1714 = vmatprep.subr.mxu0 0.0
    %1715 = vmatpush1.msra.mxu0 0.0
    %1716 = vmatprep.subr.mxu0 0.0
    %1717 = vmatpush1.msra.mxu0 0.0
    %1718 = vmatprep.subr.mxu0 0.0
    %1719 = vmatpush1.msra.mxu0 0.0
    %1720 = vmatprep.subr.mxu0 0.0
    %1721 = vmatpush1.msra.mxu0 0.0
    %1722 = vmatprep.subr.mxu0 0.0
    %1723 = vmatpush1.msra.mxu0 0.0
    %1724 = vmatprep.subr.mxu0 0.0
    %1725 = vmatpush1.msra.mxu0 0.0
    %1726 = vmatprep.subr.mxu0 0.0
    %1727 = vmatpush1.msra.mxu0 0.0
    %1728 = vmatprep.subr.mxu0 0.0
    %1729 = vmatpush1.msra.mxu0 0.0
    %1730 = vmatprep.subr.mxu0 0.0
    %1731 = vmatpush1.msra.mxu0 0.0
    %1732 = vmatprep.subr.mxu0 0.0
    %1733 = vmatpush1.msra.mxu0 0.0
    %1734 = vmatprep.mubr.f32.mxu0 0.0
    %1735 = vmatmul.mubr.f32.gmra.mrb[0].mxu0 %v1668
    %v1736 = vpop.f32.mrb[0].mxu0
    %v1737 = vadd.f32 0.0, %v1736
    %v1738 = vpop.f32.mrb[0].mxu0
    %1739 = vdwg.mxu0
    %v1740 = vadd.f32 %v1661, %v1737
    %v1741 = vxor.u32 %v1740, 2147483648
    %v1742 = vmul.f32 %v1741, 1.442695
    %v1743 = vpow.pop %v1742
    %v1744 = vadd.f32 %v1743, 1.0
    %v1745 = vrcp.pop %v1744
    %v1746 = vmul.f32 1.0, %v1745
    %v1747 = vtanh.pop %v1740
    %v1748 = vld [vmem:[#allocation5] sm:$0xff]
    %1750 = vrot.lane.b32.xlu0 %v1748, 32
    %v1751 = vpop.permute.xlu0 %1750
    %v1753 = vmul.f32 %v1746, %v1751
    %1755 = vrot.lane.b32.xlu0 %v1747, 64
    %v1756 = vpop.permute.xlu0 %1755
    %v1758 = vmul.f32 %v1746, %v1756
    %1760 = vrot.lane.b32.xlu0 %v1758, 32
    %v1761 = vpop.permute.xlu0 %1760
    %v1763 = vadd.f32 %v1753, %v1761
    %v1764 = vtanh.pop %v1763
    %1766 = vrot.lane.b32.xlu0 %v1764, 64
    %v1767 = vpop.permute.xlu0 %1766
    %v1769 = vmul.f32 %v1746, %v1767
    %1771 = vrot.lane.b32.xlu0 %v1763, 96
    %v1772 = vpop.permute.xlu0 %1771
    %1774 = vst.msk [vmem:[#allocation5] sm:$0xff] %vm286, %v1772
    %1776 = vrot.lane.b32.xlu0 %v1769, 32
    %v1777 = vpop.permute.xlu0 %1776
    %1779 = vst.msk [vmem:[#allocation4] sm:$0xff] %vm286, %v1777
    %1780 = vst.msk [vmem:[%s651] sm:$0xff] %vm286, %v1777
    %v1781 = vld [vmem:[%s653] sm:$0xff]
    %v1782 = vld [vmem:[#allocation4] sm:$0xff]
    %v1783 = vld [vmem:[#allocation14] sm:$0xff]
    %v1784 = vld [vmem:[#allocation14 + $0x8] sm:$0xff]
    %v1785 = vld [vmem:[#allocation14 + $0x10] sm:$0xff]
    %v1786 = vld [vmem:[#allocation14 + $0x18] sm:$0xff]
    %v1788 = vsel %vm286, %v1782, 0
    %1790 = vmatprep.subr.mxu0 0.0
    %1791 = vmatpush1.msra.mxu0 %v1783
    %1792 = vmatprep.subr.mxu0 0.0
    %1793 = vmatpush1.msra.mxu0 %v1784
    %1794 = vmatprep.subr.mxu0 0.0
    %1795 = vmatpush1.msra.mxu0 %v1785
    %1796 = vmatprep.subr.mxu0 0.0
    %1797 = vmatpush1.msra.mxu0 %v1786
    %1798 = vmatprep.subr.mxu0 0.0
    %1799 = vmatpush1.msra.mxu0 0.0
    %1800 = vmatprep.subr.mxu0 0.0
    %1801 = vmatpush1.msra.mxu0 0.0
    %1802 = vmatprep.subr.mxu0 0.0
    %1803 = vmatpush1.msra.mxu0 0.0
    %1804 = vmatprep.subr.mxu0 0.0
    %1805 = vmatpush1.msra.mxu0 0.0
    %1806 = vmatprep.subr.mxu0 0.0
    %1807 = vmatpush1.msra.mxu0 0.0
    %1808 = vmatprep.subr.mxu0 0.0
    %1809 = vmatpush1.msra.mxu0 0.0
    %1810 = vmatprep.subr.mxu0 0.0
    %1811 = vmatpush1.msra.mxu0 0.0
    %1812 = vmatprep.subr.mxu0 0.0
    %1813 = vmatpush1.msra.mxu0 0.0
    %1814 = vmatprep.subr.mxu0 0.0
    %1815 = vmatpush1.msra.mxu0 0.0
    %1816 = vmatprep.subr.mxu0 0.0
    %1817 = vmatpush1.msra.mxu0 0.0
    %1818 = vmatprep.subr.mxu0 0.0
    %1819 = vmatpush1.msra.mxu0 0.0
    %1820 = vmatprep.subr.mxu0 0.0
    %1821 = vmatpush1.msra.mxu0 0.0
    %1822 = vmatprep.subr.mxu0 0.0
    %1823 = vmatpush1.msra.mxu0 0.0
    %1824 = vmatprep.subr.mxu0 0.0
    %1825 = vmatpush1.msra.mxu0 0.0
    %1826 = vmatprep.subr.mxu0 0.0
    %1827 = vmatpush1.msra.mxu0 0.0
    %1828 = vmatprep.subr.mxu0 0.0
    %1829 = vmatpush1.msra.mxu0 0.0
    %1830 = vmatprep.subr.mxu0 0.0
    %1831 = vmatpush1.msra.mxu0 0.0
    %1832 = vmatprep.subr.mxu0 0.0
    %1833 = vmatpush1.msra.mxu0 0.0
    %1834 = vmatprep.subr.mxu0 0.0
    %1835 = vmatpush1.msra.mxu0 0.0
    %1836 = vmatprep.subr.mxu0 0.0
    %1837 = vmatpush1.msra.mxu0 0.0
    %1838 = vmatprep.subr.mxu0 0.0
    %1839 = vmatpush1.msra.mxu0 0.0
    %1840 = vmatprep.subr.mxu0 0.0
    %1841 = vmatpush1.msra.mxu0 0.0
    %1842 = vmatprep.subr.mxu0 0.0
    %1843 = vmatpush1.msra.mxu0 0.0
    %1844 = vmatprep.subr.mxu0 0.0
    %1845 = vmatpush1.msra.mxu0 0.0
    %1846 = vmatprep.subr.mxu0 0.0
    %1847 = vmatpush1.msra.mxu0 0.0
    %1848 = vmatprep.subr.mxu0 0.0
    %1849 = vmatpush1.msra.mxu0 0.0
    %1850 = vmatprep.subr.mxu0 0.0
    %1851 = vmatpush1.msra.mxu0 0.0
    %1852 = vmatprep.subr.mxu0 0.0
    %1853 = vmatpush1.msra.mxu0 0.0
    %1854 = vmatprep.mubr.f32.mxu0 0.0
    %1855 = vmatmul.mubr.f32.gmra.mrb[0].mxu0 %v1788
    %v1856 = vpop.f32.mrb[0].mxu0
    %v1857 = vadd.f32 0.0, %v1856
    %v1858 = vpop.f32.mrb[0].mxu0
    %1859 = vdwg.mxu0
    %v1860 = vadd.f32 %v1781, %v1857
    %v1861 = vxor.u32 %v1860, 2147483648
    %v1862 = vmul.f32 %v1861, 1.442695
    %v1863 = vpow.pop %v1862
    %v1864 = vadd.f32 %v1863, 1.0
    %v1865 = vrcp.pop %v1864
    %v1866 = vmul.f32 1.0, %v1865
    %v1867 = vtanh.pop %v1860
    %v1868 = vld [vmem:[#allocation5] sm:$0xff]
    %1870 = vrot.lane.b32.xlu0 %v1868, 32
    %v1871 = vpop.permute.xlu0 %1870
    %v1873 = vmul.f32 %v1866, %v1871
    %1875 = vrot.lane.b32.xlu0 %v1867, 64
    %v1876 = vpop.permute.xlu0 %1875
    %v1878 = vmul.f32 %v1866, %v1876
    %1880 = vrot.lane.b32.xlu0 %v1878, 32
    %v1881 = vpop.permute.xlu0 %1880
    %v1883 = vadd.f32 %v1873, %v1881
    %v1884 = vtanh.pop %v1883
    %1886 = vrot.lane.b32.xlu0 %v1884, 64
    %v1887 = vpop.permute.xlu0 %1886
    %v1889 = vmul.f32 %v1866, %v1887
    %1891 = vrot.lane.b32.xlu0 %v1883, 96
    %v1892 = vpop.permute.xlu0 %1891
    %1894 = vst.msk [vmem:[#allocation5] sm:$0xff] %vm286, %v1892
    %1896 = vrot.lane.b32.xlu0 %v1889, 32
    %v1897 = vpop.permute.xlu0 %1896
    %1899 = vst.msk [vmem:[#allocation4] sm:$0xff] %vm286, %v1897
    %1900 = vst.msk [vmem:[%s773] sm:$0xff] %vm286, %v1897
    %v1901 = vld [vmem:[%s775] sm:$0xff]
    %v1902 = vld [vmem:[#allocation4] sm:$0xff]
    %v1903 = vld [vmem:[#allocation14] sm:$0xff]
    %v1904 = vld [vmem:[#allocation14 + $0x8] sm:$0xff]
    %v1905 = vld [vmem:[#allocation14 + $0x10] sm:$0xff]
    %v1906 = vld [vmem:[#allocation14 + $0x18] sm:$0xff]
    %v1908 = vsel %vm286, %v1902, 0
    %1910 = vmatprep.subr.mxu0 0.0
    %1911 = vmatpush1.msra.mxu0 %v1903
    %1912 = vmatprep.subr.mxu0 0.0
    %1913 = vmatpush1.msra.mxu0 %v1904
    %1914 = vmatprep.subr.mxu0 0.0
    %1915 = vmatpush1.msra.mxu0 %v1905
    %1916 = vmatprep.subr.mxu0 0.0
    %1917 = vmatpush1.msra.mxu0 %v1906
    %1918 = vmatprep.subr.mxu0 0.0
    %1919 = vmatpush1.msra.mxu0 0.0
    %1920 = vmatprep.subr.mxu0 0.0
    %1921 = vmatpush1.msra.mxu0 0.0
    %1922 = vmatprep.subr.mxu0 0.0
    %1923 = vmatpush1.msra.mxu0 0.0
    %1924 = vmatprep.subr.mxu0 0.0
    %1925 = vmatpush1.msra.mxu0 0.0
    %1926 = vmatprep.subr.mxu0 0.0
    %1927 = vmatpush1.msra.mxu0 0.0
    %1928 = vmatprep.subr.mxu0 0.0
    %1929 = vmatpush1.msra.mxu0 0.0
    %1930 = vmatprep.subr.mxu0 0.0
    %1931 = vmatpush1.msra.mxu0 0.0
    %1932 = vmatprep.subr.mxu0 0.0
    %1933 = vmatpush1.msra.mxu0 0.0
    %1934 = vmatprep.subr.mxu0 0.0
    %1935 = vmatpush1.msra.mxu0 0.0
    %1936 = vmatprep.subr.mxu0 0.0
    %1937 = vmatpush1.msra.mxu0 0.0
    %1938 = vmatprep.subr.mxu0 0.0
    %1939 = vmatpush1.msra.mxu0 0.0
    %1940 = vmatprep.subr.mxu0 0.0
    %1941 = vmatpush1.msra.mxu0 0.0
    %1942 = vmatprep.subr.mxu0 0.0
    %1943 = vmatpush1.msra.mxu0 0.0
    %1944 = vmatprep.subr.mxu0 0.0
    %1945 = vmatpush1.msra.mxu0 0.0
    %1946 = vmatprep.subr.mxu0 0.0
    %1947 = vmatpush1.msra.mxu0 0.0
    %1948 = vmatprep.subr.mxu0 0.0
    %1949 = vmatpush1.msra.mxu0 0.0
    %1950 = vmatprep.subr.mxu0 0.0
    %1951 = vmatpush1.msra.mxu0 0.0
    %1952 = vmatprep.subr.mxu0 0.0
    %1953 = vmatpush1.msra.mxu0 0.0
    %1954 = vmatprep.subr.mxu0 0.0
    %1955 = vmatpush1.msra.mxu0 0.0
    %1956 = vmatprep.subr.mxu0 0.0
    %1957 = vmatpush1.msra.mxu0 0.0
    %1958 = vmatprep.subr.mxu0 0.0
    %1959 = vmatpush1.msra.mxu0 0.0
    %1960 = vmatprep.subr.mxu0 0.0
    %1961 = vmatpush1.msra.mxu0 0.0
    %1962 = vmatprep.subr.mxu0 0.0
    %1963 = vmatpush1.msra.mxu0 0.0
    %1964 = vmatprep.subr.mxu0 0.0
    %1965 = vmatpush1.msra.mxu0 0.0
    %1966 = vmatprep.subr.mxu0 0.0
    %1967 = vmatpush1.msra.mxu0 0.0
    %1968 = vmatprep.subr.mxu0 0.0
    %1969 = vmatpush1.msra.mxu0 0.0
    %1970 = vmatprep.subr.mxu0 0.0
    %1971 = vmatpush1.msra.mxu0 0.0
    %1972 = vmatprep.subr.mxu0 0.0
    %1973 = vmatpush1.msra.mxu0 0.0
    %1974 = vmatprep.mubr.f32.mxu0 0.0
    %1975 = vmatmul.mubr.f32.gmra.mrb[0].mxu0 %v1908
    %v1976 = vpop.f32.mrb[0].mxu0
    %v1977 = vadd.f32 0.0, %v1976
    %v1978 = vpop.f32.mrb[0].mxu0
    %1979 = vdwg.mxu0
    %v1980 = vadd.f32 %v1901, %v1977
    %v1981 = vxor.u32 %v1980, 2147483648
    %v1982 = vmul.f32 %v1981, 1.442695
    %v1983 = vpow.pop %v1982
    %v1984 = vadd.f32 %v1983, 1.0
    %v1985 = vrcp.pop %v1984
    %v1986 = vmul.f32 1.0, %v1985
    %v1987 = vtanh.pop %v1980
    %v1988 = vld [vmem:[#allocation5] sm:$0xff]
    %1990 = vrot.lane.b32.xlu0 %v1988, 32
    %v1991 = vpop.permute.xlu0 %1990
    %v1993 = vmul.f32 %v1986, %v1991
    %1995 = vrot.lane.b32.xlu0 %v1987, 64
    %v1996 = vpop.permute.xlu0 %1995
    %v1998 = vmul.f32 %v1986, %v1996
    %2000 = vrot.lane.b32.xlu0 %v1998, 32
    %v2001 = vpop.permute.xlu0 %2000
    %v2003 = vadd.f32 %v1993, %v2001
    %v2004 = vtanh.pop %v2003
    %2006 = vrot.lane.b32.xlu0 %v2004, 64
    %v2007 = vpop.permute.xlu0 %2006
    %v2009 = vmul.f32 %v1986, %v2007
    %2011 = vrot.lane.b32.xlu0 %v2003, 96
    %v2012 = vpop.permute.xlu0 %2011
    %2014 = vst.msk [vmem:[#allocation5] sm:$0xff] %vm286, %v2012
    %2016 = vrot.lane.b32.xlu0 %v2009, 32
    %v2017 = vpop.permute.xlu0 %2016
    %2019 = vst.msk [vmem:[#allocation4] sm:$0xff] %vm286, %v2017
    %2020 = vst.msk [vmem:[%s895] sm:$0xff] %vm286, %v2017
    %v2021 = vld [vmem:[%s897] sm:$0xff]
    %v2022 = vld [vmem:[#allocation4] sm:$0xff]
    %v2023 = vld [vmem:[#allocation14] sm:$0xff]
    %v2024 = vld [vmem:[#allocation14 + $0x8] sm:$0xff]
    %v2025 = vld [vmem:[#allocation14 + $0x10] sm:$0xff]
    %v2026 = vld [vmem:[#allocation14 + $0x18] sm:$0xff]
    %v2028 = vsel %vm286, %v2022, 0
    %2030 = vmatprep.subr.mxu0 0.0
    %2031 = vmatpush1.msra.mxu0 %v2023
    %2032 = vmatprep.subr.mxu0 0.0
    %2033 = vmatpush1.msra.mxu0 %v2024
    %2034 = vmatprep.subr.mxu0 0.0
    %2035 = vmatpush1.msra.mxu0 %v2025
    %2036 = vmatprep.subr.mxu0 0.0
    %2037 = vmatpush1.msra.mxu0 %v2026
    %2038 = vmatprep.subr.mxu0 0.0
    %2039 = vmatpush1.msra.mxu0 0.0
    %2040 = vmatprep.subr.mxu0 0.0
    %2041 = vmatpush1.msra.mxu0 0.0
    %2042 = vmatprep.subr.mxu0 0.0
    %2043 = vmatpush1.msra.mxu0 0.0
    %2044 = vmatprep.subr.mxu0 0.0
    %2045 = vmatpush1.msra.mxu0 0.0
    %2046 = vmatprep.subr.mxu0 0.0
    %2047 = vmatpush1.msra.mxu0 0.0
    %2048 = vmatprep.subr.mxu0 0.0
    %2049 = vmatpush1.msra.mxu0 0.0
    %2050 = vmatprep.subr.mxu0 0.0
    %2051 = vmatpush1.msra.mxu0 0.0
    %2052 = vmatprep.subr.mxu0 0.0
    %2053 = vmatpush1.msra.mxu0 0.0
    %2054 = vmatprep.subr.mxu0 0.0
    %2055 = vmatpush1.msra.mxu0 0.0
    %2056 = vmatprep.subr.mxu0 0.0
    %2057 = vmatpush1.msra.mxu0 0.0
    %2058 = vmatprep.subr.mxu0 0.0
    %2059 = vmatpush1.msra.mxu0 0.0
    %2060 = vmatprep.subr.mxu0 0.0
    %2061 = vmatpush1.msra.mxu0 0.0
    %2062 = vmatprep.subr.mxu0 0.0
    %2063 = vmatpush1.msra.mxu0 0.0
    %2064 = vmatprep.subr.mxu0 0.0
    %2065 = vmatpush1.msra.mxu0 0.0
    %2066 = vmatprep.subr.mxu0 0.0
    %2067 = vmatpush1.msra.mxu0 0.0
    %2068 = vmatprep.subr.mxu0 0.0
    %2069 = vmatpush1.msra.mxu0 0.0
    %2070 = vmatprep.subr.mxu0 0.0
    %2071 = vmatpush1.msra.mxu0 0.0
    %2072 = vmatprep.subr.mxu0 0.0
    %2073 = vmatpush1.msra.mxu0 0.0
    %2074 = vmatprep.subr.mxu0 0.0
    %2075 = vmatpush1.msra.mxu0 0.0
    %2076 = vmatprep.subr.mxu0 0.0
    %2077 = vmatpush1.msra.mxu0 0.0
    %2078 = vmatprep.subr.mxu0 0.0
    %2079 = vmatpush1.msra.mxu0 0.0
    %2080 = vmatprep.subr.mxu0 0.0
    %2081 = vmatpush1.msra.mxu0 0.0
    %2082 = vmatprep.subr.mxu0 0.0
    %2083 = vmatpush1.msra.mxu0 0.0
    %2084 = vmatprep.subr.mxu0 0.0
    %2085 = vmatpush1.msra.mxu0 0.0
    %2086 = vmatprep.subr.mxu0 0.0
    %2087 = vmatpush1.msra.mxu0 0.0
    %2088 = vmatprep.subr.mxu0 0.0
    %2089 = vmatpush1.msra.mxu0 0.0
    %2090 = vmatprep.subr.mxu0 0.0
    %2091 = vmatpush1.msra.mxu0 0.0
    %2092 = vmatprep.subr.mxu0 0.0
    %2093 = vmatpush1.msra.mxu0 0.0
    %2094 = vmatprep.mubr.f32.mxu0 0.0
    %2095 = vmatmul.mubr.f32.gmra.mrb[0].mxu0 %v2028
    %v2096 = vpop.f32.mrb[0].mxu0
    %v2097 = vadd.f32 0.0, %v2096
    %v2098 = vpop.f32.mrb[0].mxu0
    %2099 = vdwg.mxu0
    %v2100 = vadd.f32 %v2021, %v2097
    %v2101 = vxor.u32 %v2100, 2147483648
    %v2102 = vmul.f32 %v2101, 1.442695
    %v2103 = vpow.pop %v2102
    %v2104 = vadd.f32 %v2103, 1.0
    %v2105 = vrcp.pop %v2104
    %v2106 = vmul.f32 1.0, %v2105
    %v2107 = vtanh.pop %v2100
    %v2108 = vld [vmem:[#allocation5] sm:$0xff]
    %2110 = vrot.lane.b32.xlu0 %v2108, 32
    %v2111 = vpop.permute.xlu0 %2110
    %v2113 = vmul.f32 %v2106, %v2111
    %2115 = vrot.lane.b32.xlu0 %v2107, 64
    %v2116 = vpop.permute.xlu0 %2115
    %v2118 = vmul.f32 %v2106, %v2116
    %2120 = vrot.lane.b32.xlu0 %v2118, 32
    %v2121 = vpop.permute.xlu0 %2120
    %v2123 = vadd.f32 %v2113, %v2121
    %v2124 = vtanh.pop %v2123
    %2126 = vrot.lane.b32.xlu0 %v2124, 64
    %v2127 = vpop.permute.xlu0 %2126
    %v2129 = vmul.f32 %v2106, %v2127
    %2131 = vrot.lane.b32.xlu0 %v2123, 96
    %v2132 = vpop.permute.xlu0 %2131
    %2134 = vst.msk [vmem:[#allocation5] sm:$0xff] %vm286, %v2132
    %2136 = vrot.lane.b32.xlu0 %v2129, 32
    %v2137 = vpop.permute.xlu0 %2136
    %2139 = vst.msk [vmem:[#allocation4] sm:$0xff] %vm286, %v2137
    %2140 = vst.msk [vmem:[%s1017] sm:$0xff] %vm286, %v2137
    %v2141 = vld [vmem:[%s1019] sm:$0xff]
    %v2142 = vld [vmem:[#allocation4] sm:$0xff]
    %v2143 = vld [vmem:[#allocation14] sm:$0xff]
    %v2144 = vld [vmem:[#allocation14 + $0x8] sm:$0xff]
    %v2145 = vld [vmem:[#allocation14 + $0x10] sm:$0xff]
    %v2146 = vld [vmem:[#allocation14 + $0x18] sm:$0xff]
    %v2148 = vsel %vm286, %v2142, 0
    %2150 = vmatprep.subr.mxu0 0.0
    %2151 = vmatpush1.msra.mxu0 %v2143
    %2152 = vmatprep.subr.mxu0 0.0
    %2153 = vmatpush1.msra.mxu0 %v2144
    %2154 = vmatprep.subr.mxu0 0.0
    %2155 = vmatpush1.msra.mxu0 %v2145
    %2156 = vmatprep.subr.mxu0 0.0
    %2157 = vmatpush1.msra.mxu0 %v2146
    %2158 = vmatprep.subr.mxu0 0.0
    %2159 = vmatpush1.msra.mxu0 0.0
    %2160 = vmatprep.subr.mxu0 0.0
    %2161 = vmatpush1.msra.mxu0 0.0
    %2162 = vmatprep.subr.mxu0 0.0
    %2163 = vmatpush1.msra.mxu0 0.0
    %2164 = vmatprep.subr.mxu0 0.0
    %2165 = vmatpush1.msra.mxu0 0.0
    %2166 = vmatprep.subr.mxu0 0.0
    %2167 = vmatpush1.msra.mxu0 0.0
    %2168 = vmatprep.subr.mxu0 0.0
    %2169 = vmatpush1.msra.mxu0 0.0
    %2170 = vmatprep.subr.mxu0 0.0
    %2171 = vmatpush1.msra.mxu0 0.0
    %2172 = vmatprep.subr.mxu0 0.0
    %2173 = vmatpush1.msra.mxu0 0.0
    %2174 = vmatprep.subr.mxu0 0.0
    %2175 = vmatpush1.msra.mxu0 0.0
    %2176 = vmatprep.subr.mxu0 0.0
    %2177 = vmatpush1.msra.mxu0 0.0
    %2178 = vmatprep.subr.mxu0 0.0
    %2179 = vmatpush1.msra.mxu0 0.0
    %2180 = vmatprep.subr.mxu0 0.0
    %2181 = vmatpush1.msra.mxu0 0.0
    %2182 = vmatprep.subr.mxu0 0.0
    %2183 = vmatpush1.msra.mxu0 0.0
    %2184 = vmatprep.subr.mxu0 0.0
    %2185 = vmatpush1.msra.mxu0 0.0
    %2186 = vmatprep.subr.mxu0 0.0
    %2187 = vmatpush1.msra.mxu0 0.0
    %2188 = vmatprep.subr.mxu0 0.0
    %2189 = vmatpush1.msra.mxu0 0.0
    %2190 = vmatprep.subr.mxu0 0.0
    %2191 = vmatpush1.msra.mxu0 0.0
    %2192 = vmatprep.subr.mxu0 0.0
    %2193 = vmatpush1.msra.mxu0 0.0
    %2194 = vmatprep.subr.mxu0 0.0
    %2195 = vmatpush1.msra.mxu0 0.0
    %2196 = vmatprep.subr.mxu0 0.0
    %2197 = vmatpush1.msra.mxu0 0.0
    %2198 = vmatprep.subr.mxu0 0.0
    %2199 = vmatpush1.msra.mxu0 0.0
    %2200 = vmatprep.subr.mxu0 0.0
    %2201 = vmatpush1.msra.mxu0 0.0
    %2202 = vmatprep.subr.mxu0 0.0
    %2203 = vmatpush1.msra.mxu0 0.0
    %2204 = vmatprep.subr.mxu0 0.0
    %2205 = vmatpush1.msra.mxu0 0.0
    %2206 = vmatprep.subr.mxu0 0.0
    %2207 = vmatpush1.msra.mxu0 0.0
    %2208 = vmatprep.subr.mxu0 0.0
    %2209 = vmatpush1.msra.mxu0 0.0
    %2210 = vmatprep.subr.mxu0 0.0
    %2211 = vmatpush1.msra.mxu0 0.0
    %2212 = vmatprep.subr.mxu0 0.0
    %2213 = vmatpush1.msra.mxu0 0.0
    %2214 = vmatprep.mubr.f32.mxu0 0.0
    %2215 = vmatmul.mubr.f32.gmra.mrb[0].mxu0 %v2148
    %v2216 = vpop.f32.mrb[0].mxu0
    %v2217 = vadd.f32 0.0, %v2216
    %v2218 = vpop.f32.mrb[0].mxu0
    %2219 = vdwg.mxu0
    %v2220 = vadd.f32 %v2141, %v2217
    %v2221 = vxor.u32 %v2220, 2147483648
    %v2222 = vmul.f32 %v2221, 1.442695
    %v2223 = vpow.pop %v2222
    %v2224 = vadd.f32 %v2223, 1.0
    %v2225 = vrcp.pop %v2224
    %v2226 = vmul.f32 1.0, %v2225
    %v2227 = vtanh.pop %v2220
    %v2228 = vld [vmem:[#allocation5] sm:$0xff]
    %2230 = vrot.lane.b32.xlu0 %v2228, 32
    %v2231 = vpop.permute.xlu0 %2230
    %v2233 = vmul.f32 %v2226, %v2231
    %2235 = vrot.lane.b32.xlu0 %v2227, 64
    %v2236 = vpop.permute.xlu0 %2235
    %v2238 = vmul.f32 %v2226, %v2236
    %2240 = vrot.lane.b32.xlu0 %v2238, 32
    %v2241 = vpop.permute.xlu0 %2240
    %v2243 = vadd.f32 %v2233, %v2241
    %v2244 = vtanh.pop %v2243
    %2246 = vrot.lane.b32.xlu0 %v2244, 64
    %v2247 = vpop.permute.xlu0 %2246
    %v2249 = vmul.f32 %v2226, %v2247
    %2251 = vrot.lane.b32.xlu0 %v2243, 96
    %v2252 = vpop.permute.xlu0 %2251
    %2254 = vst.msk [vmem:[#allocation5] sm:$0xff] %vm286, %v2252
    %2256 = vrot.lane.b32.xlu0 %v2249, 32
    %v2257 = vpop.permute.xlu0 %2256
    %2259 = vst.msk [vmem:[#allocation4] sm:$0xff] %vm286, %v2257
    %2260 = vst.msk [vmem:[%s1139] sm:$0xff] %vm286, %v2257
    %v2261 = vld [vmem:[%s1141] sm:$0xff]
    %v2262 = vld [vmem:[#allocation4] sm:$0xff]
    %v2263 = vld [vmem:[#allocation14] sm:$0xff]
    %v2264 = vld [vmem:[#allocation14 + $0x8] sm:$0xff]
    %v2265 = vld [vmem:[#allocation14 + $0x10] sm:$0xff]
    %v2266 = vld [vmem:[#allocation14 + $0x18] sm:$0xff]
    %v2268 = vsel %vm286, %v2262, 0
    %2270 = vmatprep.subr.mxu0 0.0
    %2271 = vmatpush1.msra.mxu0 %v2263
    %2272 = vmatprep.subr.mxu0 0.0
    %2273 = vmatpush1.msra.mxu0 %v2264
    %2274 = vmatprep.subr.mxu0 0.0
    %2275 = vmatpush1.msra.mxu0 %v2265
    %2276 = vmatprep.subr.mxu0 0.0
    %2277 = vmatpush1.msra.mxu0 %v2266
    %2278 = vmatprep.subr.mxu0 0.0
    %2279 = vmatpush1.msra.mxu0 0.0
    %2280 = vmatprep.subr.mxu0 0.0
    %2281 = vmatpush1.msra.mxu0 0.0
    %2282 = vmatprep.subr.mxu0 0.0
    %2283 = vmatpush1.msra.mxu0 0.0
    %2284 = vmatprep.subr.mxu0 0.0
    %2285 = vmatpush1.msra.mxu0 0.0
    %2286 = vmatprep.subr.mxu0 0.0
    %2287 = vmatpush1.msra.mxu0 0.0
    %2288 = vmatprep.subr.mxu0 0.0
    %2289 = vmatpush1.msra.mxu0 0.0
    %2290 = vmatprep.subr.mxu0 0.0
    %2291 = vmatpush1.msra.mxu0 0.0
    %2292 = vmatprep.subr.mxu0 0.0
    %2293 = vmatpush1.msra.mxu0 0.0
    %2294 = vmatprep.subr.mxu0 0.0
    %2295 = vmatpush1.msra.mxu0 0.0
    %2296 = vmatprep.subr.mxu0 0.0
    %2297 = vmatpush1.msra.mxu0 0.0
    %2298 = vmatprep.subr.mxu0 0.0
    %2299 = vmatpush1.msra.mxu0 0.0
    %2300 = vmatprep.subr.mxu0 0.0
    %2301 = vmatpush1.msra.mxu0 0.0
    %2302 = vmatprep.subr.mxu0 0.0
    %2303 = vmatpush1.msra.mxu0 0.0
    %2304 = vmatprep.subr.mxu0 0.0
    %2305 = vmatpush1.msra.mxu0 0.0
    %2306 = vmatprep.subr.mxu0 0.0
    %2307 = vmatpush1.msra.mxu0 0.0
    %2308 = vmatprep.subr.mxu0 0.0
    %2309 = vmatpush1.msra.mxu0 0.0
    %2310 = vmatprep.subr.mxu0 0.0
    %2311 = vmatpush1.msra.mxu0 0.0
    %2312 = vmatprep.subr.mxu0 0.0
    %2313 = vmatpush1.msra.mxu0 0.0
    %2314 = vmatprep.subr.mxu0 0.0
    %2315 = vmatpush1.msra.mxu0 0.0
    %2316 = vmatprep.subr.mxu0 0.0
    %2317 = vmatpush1.msra.mxu0 0.0
    %2318 = vmatprep.subr.mxu0 0.0
    %2319 = vmatpush1.msra.mxu0 0.0
    %2320 = vmatprep.subr.mxu0 0.0
    %2321 = vmatpush1.msra.mxu0 0.0
    %2322 = vmatprep.subr.mxu0 0.0
    %2323 = vmatpush1.msra.mxu0 0.0
    %2324 = vmatprep.subr.mxu0 0.0
    %2325 = vmatpush1.msra.mxu0 0.0
    %2326 = vmatprep.subr.mxu0 0.0
    %2327 = vmatpush1.msra.mxu0 0.0
    %2328 = vmatprep.subr.mxu0 0.0
    %2329 = vmatpush1.msra.mxu0 0.0
    %2330 = vmatprep.subr.mxu0 0.0
    %2331 = vmatpush1.msra.mxu0 0.0
    %2332 = vmatprep.subr.mxu0 0.0
    %2333 = vmatpush1.msra.mxu0 0.0
    %2334 = vmatprep.mubr.f32.mxu0 0.0
    %2335 = vmatmul.mubr.f32.gmra.mrb[0].mxu0 %v2268
    %v2336 = vpop.f32.mrb[0].mxu0
    %v2337 = vadd.f32 0.0, %v2336
    %v2338 = vpop.f32.mrb[0].mxu0
    %2339 = vdwg.mxu0
    %v2340 = vadd.f32 %v2261, %v2337
    %v2341 = vxor.u32 %v2340, 2147483648
    %v2342 = vmul.f32 %v2341, 1.442695
    %v2343 = vpow.pop %v2342
    %v2344 = vadd.f32 %v2343, 1.0
    %v2345 = vrcp.pop %v2344
    %v2346 = vmul.f32 1.0, %v2345
    %v2347 = vtanh.pop %v2340
    %v2348 = vld [vmem:[#allocation5] sm:$0xff]
    %2350 = vrot.lane.b32.xlu0 %v2348, 32
    %v2351 = vpop.permute.xlu0 %2350
    %v2353 = vmul.f32 %v2346, %v2351
    %2355 = vrot.lane.b32.xlu0 %v2347, 64
    %v2356 = vpop.permute.xlu0 %2355
    %v2358 = vmul.f32 %v2346, %v2356
    %2360 = vrot.lane.b32.xlu0 %v2358, 32
    %v2361 = vpop.permute.xlu0 %2360
    %v2363 = vadd.f32 %v2353, %v2361
    %v2364 = vtanh.pop %v2363
    %2366 = vrot.lane.b32.xlu0 %v2364, 64
    %v2367 = vpop.permute.xlu0 %2366
    %v2369 = vmul.f32 %v2346, %v2367
    %2371 = vrot.lane.b32.xlu0 %v2363, 96
    %v2372 = vpop.permute.xlu0 %2371
    %2374 = vst.msk [vmem:[#allocation5] sm:$0xff] %vm286, %v2372
    %2376 = vrot.lane.b32.xlu0 %v2369, 32
    %v2377 = vpop.permute.xlu0 %2376
    %2379 = vst.msk [vmem:[#allocation4] sm:$0xff] %vm286, %v2377
    %2380 = vst.msk [vmem:[%s1261] sm:$0xff] %vm286, %v2377
    %v2381 = vld [vmem:[#allocation2] sm:$0xff]
    %v2382 = vld [vmem:[#allocation2 + $0x8] sm:$0xff]
    %v2383 = vld [vmem:[#allocation2 + $0x10] sm:$0xff]
    %v2384 = vld [vmem:[#allocation2 + $0x18] sm:$0xff]
    %v2385 = vld [vmem:[#allocation2 + $0x20] sm:$0xff]
    %v2386 = vld [vmem:[#allocation2 + $0x28] sm:$0xff]
    %v2387 = vld [vmem:[#allocation2 + $0x30] sm:$0xff]
    %v2388 = vld [vmem:[#allocation2 + $0x38] sm:$0xff]
    %v2389 = vld [vmem:[#allocation15] sm:$0xff]
    %v2390 = vld [vmem:[#allocation15 + $0x8] sm:$0xff]
    %v2391 = vld [vmem:[#allocation15 + $0x10] sm:$0xff]
    %v2392 = vld [vmem:[#allocation15 + $0x18] sm:$0xff]
    %v2393 = vld [vmem:[%s9] sm:$0x1]
    %v2395 = vlaneseq
    %v2396 = vshrl.u32 %v2395, 7
    %v2397 = vsub.s32 0, %v2396
    %v2398 = vrot.slane %v2393, %v2397
    %v2401 = vsel %vm286, %v2381, 0
    %v2404 = vsel %vm286, %v2382, 0
    %v2407 = vsel %vm286, %v2383, 0
    %v2410 = vsel %vm286, %v2384, 0
    %v2413 = vsel %vm286, %v2385, 0
    %v2416 = vsel %vm286, %v2386, 0
    %v2419 = vsel %vm286, %v2387, 0
    %v2422 = vsel %vm286, %v2388, 0
    %2424 = vmatprep.subr.mxu0 0.0
    %2425 = vmatpush1.msra.mxu0 %v2389
    %2426 = vmatprep.subr.mxu0 0.0
    %2427 = vmatpush1.msra.mxu0 %v2390
    %2428 = vmatprep.subr.mxu0 0.0
    %2429 = vmatpush1.msra.mxu0 %v2391
    %2430 = vmatprep.subr.mxu0 0.0
    %2431 = vmatpush1.msra.mxu0 %v2392
    %2432 = vmatprep.subr.mxu0 0.0
    %2433 = vmatpush1.msra.mxu0 0.0
    %2434 = vmatprep.subr.mxu0 0.0
    %2435 = vmatpush1.msra.mxu0 0.0
    %2436 = vmatprep.subr.mxu0 0.0
    %2437 = vmatpush1.msra.mxu0 0.0
    %2438 = vmatprep.subr.mxu0 0.0
    %2439 = vmatpush1.msra.mxu0 0.0
    %2440 = vmatprep.subr.mxu0 0.0
    %2441 = vmatpush1.msra.mxu0 0.0
    %2442 = vmatprep.subr.mxu0 0.0
    %2443 = vmatpush1.msra.mxu0 0.0
    %2444 = vmatprep.subr.mxu0 0.0
    %2445 = vmatpush1.msra.mxu0 0.0
    %2446 = vmatprep.subr.mxu0 0.0
    %2447 = vmatpush1.msra.mxu0 0.0
    %2448 = vmatprep.subr.mxu0 0.0
    %2449 = vmatpush1.msra.mxu0 0.0
    %2450 = vmatprep.subr.mxu0 0.0
    %2451 = vmatpush1.msra.mxu0 0.0
    %2452 = vmatprep.subr.mxu0 0.0
    %2453 = vmatpush1.msra.mxu0 0.0
    %2454 = vmatprep.subr.mxu0 0.0
    %2455 = vmatpush1.msra.mxu0 0.0
    %2456 = vmatprep.subr.mxu0 0.0
    %2457 = vmatpush1.msra.mxu0 0.0
    %2458 = vmatprep.subr.mxu0 0.0
    %2459 = vmatpush1.msra.mxu0 0.0
    %2460 = vmatprep.subr.mxu0 0.0
    %2461 = vmatpush1.msra.mxu0 0.0
    %2462 = vmatprep.subr.mxu0 0.0
    %2463 = vmatpush1.msra.mxu0 0.0
    %2464 = vmatprep.subr.mxu0 0.0
    %2465 = vmatpush1.msra.mxu0 0.0
    %2466 = vmatprep.subr.mxu0 0.0
    %2467 = vmatpush1.msra.mxu0 0.0
    %2468 = vmatprep.subr.mxu0 0.0
    %2469 = vmatpush1.msra.mxu0 0.0
    %2470 = vmatprep.subr.mxu0 0.0
    %2471 = vmatpush1.msra.mxu0 0.0
    %2472 = vmatprep.subr.mxu0 0.0
    %2473 = vmatpush1.msra.mxu0 0.0
    %2474 = vmatprep.subr.mxu0 0.0
    %2475 = vmatpush1.msra.mxu0 0.0
    %2476 = vmatprep.subr.mxu0 0.0
    %2477 = vmatpush1.msra.mxu0 0.0
    %2478 = vmatprep.subr.mxu0 0.0
    %2479 = vmatpush1.msra.mxu0 0.0
    %2480 = vmatprep.subr.mxu0 0.0
    %2481 = vmatpush1.msra.mxu0 0.0
    %2482 = vmatprep.subr.mxu0 0.0
    %2483 = vmatpush1.msra.mxu0 0.0
    %2484 = vmatprep.subr.mxu0 0.0
    %2485 = vmatpush1.msra.mxu0 0.0
    %2486 = vmatprep.subr.mxu0 0.0
    %2487 = vmatpush1.msra.mxu0 0.0
    %2488 = vmatprep.mubr.f32.mxu0 0.0
    %2489 = vmatmul.mubr.f32.gmra.mrb[0].mxu0 %v2401
    %v2490 = vpop.f32.mrb[0].mxu0
    %v2491 = vadd.f32 %v2398, %v2490
    %v2492 = vpop.f32.mrb[0].mxu0
    %2493 = vmatprep.mubr.f32.mxu0 0.0
    %2494 = vmatmul.mubr.f32.gmra.mrb[0].mxu0 %v2404
    %v2495 = vpop.f32.mrb[0].mxu0
    %v2496 = vadd.f32 %v2398, %v2495
    %v2497 = vpop.f32.mrb[0].mxu0
    %2498 = vmatprep.mubr.f32.mxu0 0.0
    %2499 = vmatmul.mubr.f32.gmra.mrb[0].mxu0 %v2407
    %v2500 = vpop.f32.mrb[0].mxu0
    %v2501 = vadd.f32 %v2398, %v2500
    %v2502 = vpop.f32.mrb[0].mxu0
    %2503 = vmatprep.mubr.f32.mxu0 0.0
    %2504 = vmatmul.mubr.f32.gmra.mrb[0].mxu0 %v2410
    %v2505 = vpop.f32.mrb[0].mxu0
    %v2506 = vadd.f32 %v2398, %v2505
    %v2507 = vpop.f32.mrb[0].mxu0
    %2508 = vmatprep.mubr.f32.mxu0 0.0
    %2509 = vmatmul.mubr.f32.gmra.mrb[0].mxu0 %v2413
    %v2510 = vpop.f32.mrb[0].mxu0
    %v2511 = vadd.f32 %v2398, %v2510
    %v2512 = vpop.f32.mrb[0].mxu0
    %2513 = vmatprep.mubr.f32.mxu0 0.0
    %2514 = vmatmul.mubr.f32.gmra.mrb[0].mxu0 %v2416
    %v2515 = vpop.f32.mrb[0].mxu0
    %v2516 = vadd.f32 %v2398, %v2515
    %v2517 = vpop.f32.mrb[0].mxu0
    %2518 = vmatprep.mubr.f32.mxu0 0.0
    %2519 = vmatmul.mubr.f32.gmra.mrb[0].mxu0 %v2419
    %v2520 = vpop.f32.mrb[0].mxu0
    %v2521 = vadd.f32 %v2398, %v2520
    %v2522 = vpop.f32.mrb[0].mxu0
    %2523 = vmatprep.mubr.f32.mxu0 0.0
    %2524 = vmatmul.mubr.f32.gmra.mrb[0].mxu0 %v2422
    %v2525 = vpop.f32.mrb[0].mxu0
    %v2526 = vadd.f32 %v2398, %v2525
    %v2527 = vpop.f32.mrb[0].mxu0
    %2528 = vdwg.mxu0
    %2529 = vst [vmem:[#allocation3] sm:$0xff] %v2491
    %2530 = vst [vmem:[#allocation3 + $0x8] sm:$0xff] %v2496
    %2531 = vst [vmem:[#allocation3 + $0x10] sm:$0xff] %v2501
    %2532 = vst [vmem:[#allocation3 + $0x18] sm:$0xff] %v2506
    %2533 = vst [vmem:[#allocation3 + $0x20] sm:$0xff] %v2511
    %2534 = vst [vmem:[#allocation3 + $0x28] sm:$0xff] %v2516
    %2535 = vst [vmem:[#allocation3 + $0x30] sm:$0xff] %v2521
    %2536 = vst [vmem:[#allocation3 + $0x38] sm:$0xff] %v2526
    %2537 = vst.msk [vmem:[#allocation4] sm:$0xff] %vm286, 0.0
    %2538 = vst.msk [vmem:[#allocation5] sm:$0xff] %vm286, 0.0
    %v2539 = vld [vmem:[#allocation3] sm:$0xff]
    %v2540 = vld [vmem:[#allocation4] sm:$0xff]
    %v2541 = vld [vmem:[%s8] sm:$0xff]
    %v2542 = vld [vmem:[%s8 + $0x8] sm:$0xff]
    %v2543 = vld [vmem:[%s8 + $0x10] sm:$0xff]
    %v2544 = vld [vmem:[%s8 + $0x18] sm:$0xff]
    %v2546 = vsel %vm286, %v2540, 0
    %2548 = vmatprep.subr.mxu0 0.0
    %2549 = vmatpush1.msra.mxu0 %v2541
    %2550 = vmatprep.subr.mxu0 0.0
    %2551 = vmatpush1.msra.mxu0 %v2542
    %2552 = vmatprep.subr.mxu0 0.0
    %2553 = vmatpush1.msra.mxu0 %v2543
    %2554 = vmatprep.subr.mxu0 0.0
    %2555 = vmatpush1.msra.mxu0 %v2544
    %2556 = vmatprep.subr.mxu0 0.0
    %2557 = vmatpush1.msra.mxu0 0.0
    %2558 = vmatprep.subr.mxu0 0.0
    %2559 = vmatpush1.msra.mxu0 0.0
    %2560 = vmatprep.subr.mxu0 0.0
    %2561 = vmatpush1.msra.mxu0 0.0
    %2562 = vmatprep.subr.mxu0 0.0
    %2563 = vmatpush1.msra.mxu0 0.0
    %2564 = vmatprep.subr.mxu0 0.0
    %2565 = vmatpush1.msra.mxu0 0.0
    %2566 = vmatprep.subr.mxu0 0.0
    %2567 = vmatpush1.msra.mxu0 0.0
    %2568 = vmatprep.subr.mxu0 0.0
    %2569 = vmatpush1.msra.mxu0 0.0
    %2570 = vmatprep.subr.mxu0 0.0
    %2571 = vmatpush1.msra.mxu0 0.0
    %2572 = vmatprep.subr.mxu0 0.0
    %2573 = vmatpush1.msra.mxu0 0.0
    %2574 = vmatprep.subr.mxu0 0.0
    %2575 = vmatpush1.msra.mxu0 0.0
    %2576 = vmatprep.subr.mxu0 0.0
    %2577 = vmatpush1.msra.mxu0 0.0
    %2578 = vmatprep.subr.mxu0 0.0
    %2579 = vmatpush1.msra.mxu0 0.0
    %2580 = vmatprep.subr.mxu0 0.0
    %2581 = vmatpush1.msra.mxu0 0.0
    %2582 = vmatprep.subr.mxu0 0.0
    %2583 = vmatpush1.msra.mxu0 0.0
    %2584 = vmatprep.subr.mxu0 0.0
    %2585 = vmatpush1.msra.mxu0 0.0
    %2586 = vmatprep.subr.mxu0 0.0
    %2587 = vmatpush1.msra.mxu0 0.0
    %2588 = vmatprep.subr.mxu0 0.0
    %2589 = vmatpush1.msra.mxu0 0.0
    %2590 = vmatprep.subr.mxu0 0.0
    %2591 = vmatpush1.msra.mxu0 0.0
    %2592 = vmatprep.subr.mxu0 0.0
    %2593 = vmatpush1.msra.mxu0 0.0
    %2594 = vmatprep.subr.mxu0 0.0
    %2595 = vmatpush1.msra.mxu0 0.0
    %2596 = vmatprep.subr.mxu0 0.0
    %2597 = vmatpush1.msra.mxu0 0.0
    %2598 = vmatprep.subr.mxu0 0.0
    %2599 = vmatpush1.msra.mxu0 0.0
    %2600 = vmatprep.subr.mxu0 0.0
    %2601 = vmatpush1.msra.mxu0 0.0
    %2602 = vmatprep.subr.mxu0 0.0
    %2603 = vmatpush1.msra.mxu0 0.0
    %2604 = vmatprep.subr.mxu0 0.0
    %2605 = vmatpush1.msra.mxu0 0.0
    %2606 = vmatprep.subr.mxu0 0.0
    %2607 = vmatpush1.msra.mxu0 0.0
    %2608 = vmatprep.subr.mxu0 0.0
    %2609 = vmatpush1.msra.mxu0 0.0
    %2610 = vmatprep.subr.mxu0 0.0
    %2611 = vmatpush1.msra.mxu0 0.0
    %2612 = vmatprep.mubr.f32.mxu0 0.0
    %2613 = vmatmul.mubr.f32.gmra.mrb[0].mxu0 %v2546
    %v2614 = vpop.f32.mrb[0].mxu0
    %v2615 = vadd.f32 0.0, %v2614
    %v2616 = vpop.f32.mrb[0].mxu0
    %2617 = vdwg.mxu0
    %v2618 = vadd.f32 %v2539, %v2615
    %v2619 = vxor.u32 %v2618, 2147483648
    %v2620 = vmul.f32 %v2619, 1.442695
    %v2621 = vpow.pop %v2620
    %v2622 = vadd.f32 %v2621, 1.0
    %v2623 = vrcp.pop %v2622
    %v2624 = vmul.f32 1.0, %v2623
    %v2625 = vtanh.pop %v2618
    %v2626 = vld [vmem:[#allocation5] sm:$0xff]
    %2628 = vrot.lane.b32.xlu0 %v2626, 32
    %v2629 = vpop.permute.xlu0 %2628
    %v2631 = vmul.f32 %v2624, %v2629
    %2633 = vrot.lane.b32.xlu0 %v2625, 64
    %v2634 = vpop.permute.xlu0 %2633
    %v2636 = vmul.f32 %v2624, %v2634
    %2638 = vrot.lane.b32.xlu0 %v2636, 32
    %v2639 = vpop.permute.xlu0 %2638
    %v2641 = vadd.f32 %v2631, %v2639
    %v2642 = vtanh.pop %v2641
    %2644 = vrot.lane.b32.xlu0 %v2642, 64
    %v2645 = vpop.permute.xlu0 %2644
    %v2647 = vmul.f32 %v2624, %v2645
    %2649 = vrot.lane.b32.xlu0 %v2641, 96
    %v2650 = vpop.permute.xlu0 %2649
    %2652 = vst.msk [vmem:[#allocation5] sm:$0xff] %vm286, %v2650
    %2654 = vrot.lane.b32.xlu0 %v2647, 32
    %v2655 = vpop.permute.xlu0 %2654
    %2657 = vst.msk [vmem:[#allocation4] sm:$0xff] %vm286, %v2655
    %v2658 = vld [vmem:[%s409] sm:$0xff]
    %v2659 = vld [vmem:[#allocation4] sm:$0xff]
    %v2660 = vld [vmem:[%s8] sm:$0xff]
    %v2661 = vld [vmem:[%s8 + $0x8] sm:$0xff]
    %v2662 = vld [vmem:[%s8 + $0x10] sm:$0xff]
    %v2663 = vld [vmem:[%s8 + $0x18] sm:$0xff]
    %v2665 = vsel %vm286, %v2659, 0
    %2667 = vmatprep.subr.mxu0 0.0
    %2668 = vmatpush1.msra.mxu0 %v2660
    %2669 = vmatprep.subr.mxu0 0.0
    %2670 = vmatpush1.msra.mxu0 %v2661
    %2671 = vmatprep.subr.mxu0 0.0
    %2672 = vmatpush1.msra.mxu0 %v2662
    %2673 = vmatprep.subr.mxu0 0.0
    %2674 = vmatpush1.msra.mxu0 %v2663
    %2675 = vmatprep.subr.mxu0 0.0
    %2676 = vmatpush1.msra.mxu0 0.0
    %2677 = vmatprep.subr.mxu0 0.0
    %2678 = vmatpush1.msra.mxu0 0.0
    %2679 = vmatprep.subr.mxu0 0.0
    %2680 = vmatpush1.msra.mxu0 0.0
    %2681 = vmatprep.subr.mxu0 0.0
    %2682 = vmatpush1.msra.mxu0 0.0
    %2683 = vmatprep.subr.mxu0 0.0
    %2684 = vmatpush1.msra.mxu0 0.0
    %2685 = vmatprep.subr.mxu0 0.0
    %2686 = vmatpush1.msra.mxu0 0.0
    %2687 = vmatprep.subr.mxu0 0.0
    %2688 = vmatpush1.msra.mxu0 0.0
    %2689 = vmatprep.subr.mxu0 0.0
    %2690 = vmatpush1.msra.mxu0 0.0
    %2691 = vmatprep.subr.mxu0 0.0
    %2692 = vmatpush1.msra.mxu0 0.0
    %2693 = vmatprep.subr.mxu0 0.0
    %2694 = vmatpush1.msra.mxu0 0.0
    %2695 = vmatprep.subr.mxu0 0.0
    %2696 = vmatpush1.msra.mxu0 0.0
    %2697 = vmatprep.subr.mxu0 0.0
    %2698 = vmatpush1.msra.mxu0 0.0
    %2699 = vmatprep.subr.mxu0 0.0
    %2700 = vmatpush1.msra.mxu0 0.0
    %2701 = vmatprep.subr.mxu0 0.0
    %2702 = vmatpush1.msra.mxu0 0.0
    %2703 = vmatprep.subr.mxu0 0.0
    %2704 = vmatpush1.msra.mxu0 0.0
    %2705 = vmatprep.subr.mxu0 0.0
    %2706 = vmatpush1.msra.mxu0 0.0
    %2707 = vmatprep.subr.mxu0 0.0
    %2708 = vmatpush1.msra.mxu0 0.0
    %2709 = vmatprep.subr.mxu0 0.0
    %2710 = vmatpush1.msra.mxu0 0.0
    %2711 = vmatprep.subr.mxu0 0.0
    %2712 = vmatpush1.msra.mxu0 0.0
    %2713 = vmatprep.subr.mxu0 0.0
    %2714 = vmatpush1.msra.mxu0 0.0
    %2715 = vmatprep.subr.mxu0 0.0
    %2716 = vmatpush1.msra.mxu0 0.0
    %2717 = vmatprep.subr.mxu0 0.0
    %2718 = vmatpush1.msra.mxu0 0.0
    %2719 = vmatprep.subr.mxu0 0.0
    %2720 = vmatpush1.msra.mxu0 0.0
    %2721 = vmatprep.subr.mxu0 0.0
    %2722 = vmatpush1.msra.mxu0 0.0
    %2723 = vmatprep.subr.mxu0 0.0
    %2724 = vmatpush1.msra.mxu0 0.0
    %2725 = vmatprep.subr.mxu0 0.0
    %2726 = vmatpush1.msra.mxu0 0.0
    %2727 = vmatprep.subr.mxu0 0.0
    %2728 = vmatpush1.msra.mxu0 0.0
    %2729 = vmatprep.subr.mxu0 0.0
    %2730 = vmatpush1.msra.mxu0 0.0
    %2731 = vmatprep.mubr.f32.mxu0 0.0
    %2732 = vmatmul.mubr.f32.gmra.mrb[0].mxu0 %v2665
    %v2733 = vpop.f32.mrb[0].mxu0
    %v2734 = vadd.f32 0.0, %v2733
    %v2735 = vpop.f32.mrb[0].mxu0
    %2736 = vdwg.mxu0
    %v2737 = vadd.f32 %v2658, %v2734
    %v2738 = vxor.u32 %v2737, 2147483648
    %v2739 = vmul.f32 %v2738, 1.442695
    %v2740 = vpow.pop %v2739
    %v2741 = vadd.f32 %v2740, 1.0
    %v2742 = vrcp.pop %v2741
    %v2743 = vmul.f32 1.0, %v2742
    %v2744 = vtanh.pop %v2737
    %v2745 = vld [vmem:[#allocation5] sm:$0xff]
    %2747 = vrot.lane.b32.xlu0 %v2745, 32
    %v2748 = vpop.permute.xlu0 %2747
    %v2750 = vmul.f32 %v2743, %v2748
    %2752 = vrot.lane.b32.xlu0 %v2744, 64
    %v2753 = vpop.permute.xlu0 %2752
    %v2755 = vmul.f32 %v2743, %v2753
    %2757 = vrot.lane.b32.xlu0 %v2755, 32
    %v2758 = vpop.permute.xlu0 %2757
    %v2760 = vadd.f32 %v2750, %v2758
    %v2761 = vtanh.pop %v2760
    %2763 = vrot.lane.b32.xlu0 %v2761, 64
    %v2764 = vpop.permute.xlu0 %2763
    %v2766 = vmul.f32 %v2743, %v2764
    %2768 = vrot.lane.b32.xlu0 %v2760, 96
    %v2769 = vpop.permute.xlu0 %2768
    %2771 = vst.msk [vmem:[#allocation5] sm:$0xff] %vm286, %v2769
    %2773 = vrot.lane.b32.xlu0 %v2766, 32
    %v2774 = vpop.permute.xlu0 %2773
    %2776 = vst.msk [vmem:[#allocation4] sm:$0xff] %vm286, %v2774
    %v2777 = vld [vmem:[%s531] sm:$0xff]
    %v2778 = vld [vmem:[#allocation4] sm:$0xff]
    %v2779 = vld [vmem:[%s8] sm:$0xff]
    %v2780 = vld [vmem:[%s8 + $0x8] sm:$0xff]
    %v2781 = vld [vmem:[%s8 + $0x10] sm:$0xff]
    %v2782 = vld [vmem:[%s8 + $0x18] sm:$0xff]
    %v2784 = vsel %vm286, %v2778, 0
    %2786 = vmatprep.subr.mxu0 0.0
    %2787 = vmatpush1.msra.mxu0 %v2779
    %2788 = vmatprep.subr.mxu0 0.0
    %2789 = vmatpush1.msra.mxu0 %v2780
    %2790 = vmatprep.subr.mxu0 0.0
    %2791 = vmatpush1.msra.mxu0 %v2781
    %2792 = vmatprep.subr.mxu0 0.0
    %2793 = vmatpush1.msra.mxu0 %v2782
    %2794 = vmatprep.subr.mxu0 0.0
    %2795 = vmatpush1.msra.mxu0 0.0
    %2796 = vmatprep.subr.mxu0 0.0
    %2797 = vmatpush1.msra.mxu0 0.0
    %2798 = vmatprep.subr.mxu0 0.0
    %2799 = vmatpush1.msra.mxu0 0.0
    %2800 = vmatprep.subr.mxu0 0.0
    %2801 = vmatpush1.msra.mxu0 0.0
    %2802 = vmatprep.subr.mxu0 0.0
    %2803 = vmatpush1.msra.mxu0 0.0
    %2804 = vmatprep.subr.mxu0 0.0
    %2805 = vmatpush1.msra.mxu0 0.0
    %2806 = vmatprep.subr.mxu0 0.0
    %2807 = vmatpush1.msra.mxu0 0.0
    %2808 = vmatprep.subr.mxu0 0.0
    %2809 = vmatpush1.msra.mxu0 0.0
    %2810 = vmatprep.subr.mxu0 0.0
    %2811 = vmatpush1.msra.mxu0 0.0
    %2812 = vmatprep.subr.mxu0 0.0
    %2813 = vmatpush1.msra.mxu0 0.0
    %2814 = vmatprep.subr.mxu0 0.0
    %2815 = vmatpush1.msra.mxu0 0.0
    %2816 = vmatprep.subr.mxu0 0.0
    %2817 = vmatpush1.msra.mxu0 0.0
    %2818 = vmatprep.subr.mxu0 0.0
    %2819 = vmatpush1.msra.mxu0 0.0
    %2820 = vmatprep.subr.mxu0 0.0
    %2821 = vmatpush1.msra.mxu0 0.0
    %2822 = vmatprep.subr.mxu0 0.0
    %2823 = vmatpush1.msra.mxu0 0.0
    %2824 = vmatprep.subr.mxu0 0.0
    %2825 = vmatpush1.msra.mxu0 0.0
    %2826 = vmatprep.subr.mxu0 0.0
    %2827 = vmatpush1.msra.mxu0 0.0
    %2828 = vmatprep.subr.mxu0 0.0
    %2829 = vmatpush1.msra.mxu0 0.0
    %2830 = vmatprep.subr.mxu0 0.0
    %2831 = vmatpush1.msra.mxu0 0.0
    %2832 = vmatprep.subr.mxu0 0.0
    %2833 = vmatpush1.msra.mxu0 0.0
    %2834 = vmatprep.subr.mxu0 0.0
    %2835 = vmatpush1.msra.mxu0 0.0
    %2836 = vmatprep.subr.mxu0 0.0
    %2837 = vmatpush1.msra.mxu0 0.0
    %2838 = vmatprep.subr.mxu0 0.0
    %2839 = vmatpush1.msra.mxu0 0.0
    %2840 = vmatprep.subr.mxu0 0.0
    %2841 = vmatpush1.msra.mxu0 0.0
    %2842 = vmatprep.subr.mxu0 0.0
    %2843 = vmatpush1.msra.mxu0 0.0
    %2844 = vmatprep.subr.mxu0 0.0
    %2845 = vmatpush1.msra.mxu0 0.0
    %2846 = vmatprep.subr.mxu0 0.0
    %2847 = vmatpush1.msra.mxu0 0.0
    %2848 = vmatprep.subr.mxu0 0.0
    %2849 = vmatpush1.msra.mxu0 0.0
    %2850 = vmatprep.mubr.f32.mxu0 0.0
    %2851 = vmatmul.mubr.f32.gmra.mrb[0].mxu0 %v2784
    %v2852 = vpop.f32.mrb[0].mxu0
    %v2853 = vadd.f32 0.0, %v2852
    %v2854 = vpop.f32.mrb[0].mxu0
    %2855 = vdwg.mxu0
    %v2856 = vadd.f32 %v2777, %v2853
    %v2857 = vxor.u32 %v2856, 2147483648
    %v2858 = vmul.f32 %v2857, 1.442695
    %v2859 = vpow.pop %v2858
    %v2860 = vadd.f32 %v2859, 1.0
    %v2861 = vrcp.pop %v2860
    %v2862 = vmul.f32 1.0, %v2861
    %v2863 = vtanh.pop %v2856
    %v2864 = vld [vmem:[#allocation5] sm:$0xff]
    %2866 = vrot.lane.b32.xlu0 %v2864, 32
    %v2867 = vpop.permute.xlu0 %2866
    %v2869 = vmul.f32 %v2862, %v2867
    %2871 = vrot.lane.b32.xlu0 %v2863, 64
    %v2872 = vpop.permute.xlu0 %2871
    %v2874 = vmul.f32 %v2862, %v2872
    %2876 = vrot.lane.b32.xlu0 %v2874, 32
    %v2877 = vpop.permute.xlu0 %2876
    %v2879 = vadd.f32 %v2869, %v2877
    %v2880 = vtanh.pop %v2879
    %2882 = vrot.lane.b32.xlu0 %v2880, 64
    %v2883 = vpop.permute.xlu0 %2882
    %v2885 = vmul.f32 %v2862, %v2883
    %2887 = vrot.lane.b32.xlu0 %v2879, 96
    %v2888 = vpop.permute.xlu0 %2887
    %2890 = vst.msk [vmem:[#allocation5] sm:$0xff] %vm286, %v2888
    %2892 = vrot.lane.b32.xlu0 %v2885, 32
    %v2893 = vpop.permute.xlu0 %2892
    %2895 = vst.msk [vmem:[#allocation4] sm:$0xff] %vm286, %v2893
    %v2896 = vld [vmem:[%s653] sm:$0xff]
    %v2897 = vld [vmem:[#allocation4] sm:$0xff]
    %v2898 = vld [vmem:[%s8] sm:$0xff]
    %v2899 = vld [vmem:[%s8 + $0x8] sm:$0xff]
    %v2900 = vld [vmem:[%s8 + $0x10] sm:$0xff]
    %v2901 = vld [vmem:[%s8 + $0x18] sm:$0xff]
    %v2903 = vsel %vm286, %v2897, 0
    %2905 = vmatprep.subr.mxu0 0.0
    %2906 = vmatpush1.msra.mxu0 %v2898
    %2907 = vmatprep.subr.mxu0 0.0
    %2908 = vmatpush1.msra.mxu0 %v2899
    %2909 = vmatprep.subr.mxu0 0.0
    %2910 = vmatpush1.msra.mxu0 %v2900
    %2911 = vmatprep.subr.mxu0 0.0
    %2912 = vmatpush1.msra.mxu0 %v2901
    %2913 = vmatprep.subr.mxu0 0.0
    %2914 = vmatpush1.msra.mxu0 0.0
    %2915 = vmatprep.subr.mxu0 0.0
    %2916 = vmatpush1.msra.mxu0 0.0
    %2917 = vmatprep.subr.mxu0 0.0
    %2918 = vmatpush1.msra.mxu0 0.0
    %2919 = vmatprep.subr.mxu0 0.0
    %2920 = vmatpush1.msra.mxu0 0.0
    %2921 = vmatprep.subr.mxu0 0.0
    %2922 = vmatpush1.msra.mxu0 0.0
    %2923 = vmatprep.subr.mxu0 0.0
    %2924 = vmatpush1.msra.mxu0 0.0
    %2925 = vmatprep.subr.mxu0 0.0
    %2926 = vmatpush1.msra.mxu0 0.0
    %2927 = vmatprep.subr.mxu0 0.0
    %2928 = vmatpush1.msra.mxu0 0.0
    %2929 = vmatprep.subr.mxu0 0.0
    %2930 = vmatpush1.msra.mxu0 0.0
    %2931 = vmatprep.subr.mxu0 0.0
    %2932 = vmatpush1.msra.mxu0 0.0
    %2933 = vmatprep.subr.mxu0 0.0
    %2934 = vmatpush1.msra.mxu0 0.0
    %2935 = vmatprep.subr.mxu0 0.0
    %2936 = vmatpush1.msra.mxu0 0.0
    %2937 = vmatprep.subr.mxu0 0.0
    %2938 = vmatpush1.msra.mxu0 0.0
    %2939 = vmatprep.subr.mxu0 0.0
    %2940 = vmatpush1.msra.mxu0 0.0
    %2941 = vmatprep.subr.mxu0 0.0
    %2942 = vmatpush1.msra.mxu0 0.0
    %2943 = vmatprep.subr.mxu0 0.0
    %2944 = vmatpush1.msra.mxu0 0.0
    %2945 = vmatprep.subr.mxu0 0.0
    %2946 = vmatpush1.msra.mxu0 0.0
    %2947 = vmatprep.subr.mxu0 0.0
    %2948 = vmatpush1.msra.mxu0 0.0
    %2949 = vmatprep.subr.mxu0 0.0
    %2950 = vmatpush1.msra.mxu0 0.0
    %2951 = vmatprep.subr.mxu0 0.0
    %2952 = vmatpush1.msra.mxu0 0.0
    %2953 = vmatprep.subr.mxu0 0.0
    %2954 = vmatpush1.msra.mxu0 0.0
    %2955 = vmatprep.subr.mxu0 0.0
    %2956 = vmatpush1.msra.mxu0 0.0
    %2957 = vmatprep.subr.mxu0 0.0
    %2958 = vmatpush1.msra.mxu0 0.0
    %2959 = vmatprep.subr.mxu0 0.0
    %2960 = vmatpush1.msra.mxu0 0.0
    %2961 = vmatprep.subr.mxu0 0.0
    %2962 = vmatpush1.msra.mxu0 0.0
    %2963 = vmatprep.subr.mxu0 0.0
    %2964 = vmatpush1.msra.mxu0 0.0
    %2965 = vmatprep.subr.mxu0 0.0
    %2966 = vmatpush1.msra.mxu0 0.0
    %2967 = vmatprep.subr.mxu0 0.0
    %2968 = vmatpush1.msra.mxu0 0.0
    %2969 = vmatprep.mubr.f32.mxu0 0.0
    %2970 = vmatmul.mubr.f32.gmra.mrb[0].mxu0 %v2903
    %v2971 = vpop.f32.mrb[0].mxu0
    %v2972 = vadd.f32 0.0, %v2971
    %v2973 = vpop.f32.mrb[0].mxu0
    %2974 = vdwg.mxu0
    %v2975 = vadd.f32 %v2896, %v2972
    %v2976 = vxor.u32 %v2975, 2147483648
    %v2977 = vmul.f32 %v2976, 1.442695
    %v2978 = vpow.pop %v2977
    %v2979 = vadd.f32 %v2978, 1.0
    %v2980 = vrcp.pop %v2979
    %v2981 = vmul.f32 1.0, %v2980
    %v2982 = vtanh.pop %v2975
    %v2983 = vld [vmem:[#allocation5] sm:$0xff]
    %2985 = vrot.lane.b32.xlu0 %v2983, 32
    %v2986 = vpop.permute.xlu0 %2985
    %v2988 = vmul.f32 %v2981, %v2986
    %2990 = vrot.lane.b32.xlu0 %v2982, 64
    %v2991 = vpop.permute.xlu0 %2990
    %v2993 = vmul.f32 %v2981, %v2991
    %2995 = vrot.lane.b32.xlu0 %v2993, 32
    %v2996 = vpop.permute.xlu0 %2995
    %v2998 = vadd.f32 %v2988, %v2996
    %v2999 = vtanh.pop %v2998
    %3001 = vrot.lane.b32.xlu0 %v2999, 64
    %v3002 = vpop.permute.xlu0 %3001
    %v3004 = vmul.f32 %v2981, %v3002
    %3006 = vrot.lane.b32.xlu0 %v2998, 96
    %v3007 = vpop.permute.xlu0 %3006
    %3009 = vst.msk [vmem:[#allocation5] sm:$0xff] %vm286, %v3007
    %3011 = vrot.lane.b32.xlu0 %v3004, 32
    %v3012 = vpop.permute.xlu0 %3011
    %3014 = vst.msk [vmem:[#allocation4] sm:$0xff] %vm286, %v3012
    %v3015 = vld [vmem:[%s775] sm:$0xff]
    %v3016 = vld [vmem:[#allocation4] sm:$0xff]
    %v3017 = vld [vmem:[%s8] sm:$0xff]
    %v3018 = vld [vmem:[%s8 + $0x8] sm:$0xff]
    %v3019 = vld [vmem:[%s8 + $0x10] sm:$0xff]
    %v3020 = vld [vmem:[%s8 + $0x18] sm:$0xff]
    %v3022 = vsel %vm286, %v3016, 0
    %3024 = vmatprep.subr.mxu0 0.0
    %3025 = vmatpush1.msra.mxu0 %v3017
    %3026 = vmatprep.subr.mxu0 0.0
    %3027 = vmatpush1.msra.mxu0 %v3018
    %3028 = vmatprep.subr.mxu0 0.0
    %3029 = vmatpush1.msra.mxu0 %v3019
    %3030 = vmatprep.subr.mxu0 0.0
    %3031 = vmatpush1.msra.mxu0 %v3020
    %3032 = vmatprep.subr.mxu0 0.0
    %3033 = vmatpush1.msra.mxu0 0.0
    %3034 = vmatprep.subr.mxu0 0.0
    %3035 = vmatpush1.msra.mxu0 0.0
    %3036 = vmatprep.subr.mxu0 0.0
    %3037 = vmatpush1.msra.mxu0 0.0
    %3038 = vmatprep.subr.mxu0 0.0
    %3039 = vmatpush1.msra.mxu0 0.0
    %3040 = vmatprep.subr.mxu0 0.0
    %3041 = vmatpush1.msra.mxu0 0.0
    %3042 = vmatprep.subr.mxu0 0.0
    %3043 = vmatpush1.msra.mxu0 0.0
    %3044 = vmatprep.subr.mxu0 0.0
    %3045 = vmatpush1.msra.mxu0 0.0
    %3046 = vmatprep.subr.mxu0 0.0
    %3047 = vmatpush1.msra.mxu0 0.0
    %3048 = vmatprep.subr.mxu0 0.0
    %3049 = vmatpush1.msra.mxu0 0.0
    %3050 = vmatprep.subr.mxu0 0.0
    %3051 = vmatpush1.msra.mxu0 0.0
    %3052 = vmatprep.subr.mxu0 0.0
    %3053 = vmatpush1.msra.mxu0 0.0
    %3054 = vmatprep.subr.mxu0 0.0
    %3055 = vmatpush1.msra.mxu0 0.0
    %3056 = vmatprep.subr.mxu0 0.0
    %3057 = vmatpush1.msra.mxu0 0.0
    %3058 = vmatprep.subr.mxu0 0.0
    %3059 = vmatpush1.msra.mxu0 0.0
    %3060 = vmatprep.subr.mxu0 0.0
    %3061 = vmatpush1.msra.mxu0 0.0
    %3062 = vmatprep.subr.mxu0 0.0
    %3063 = vmatpush1.msra.mxu0 0.0
    %3064 = vmatprep.subr.mxu0 0.0
    %3065 = vmatpush1.msra.mxu0 0.0
    %3066 = vmatprep.subr.mxu0 0.0
    %3067 = vmatpush1.msra.mxu0 0.0
    %3068 = vmatprep.subr.mxu0 0.0
    %3069 = vmatpush1.msra.mxu0 0.0
    %3070 = vmatprep.subr.mxu0 0.0
    %3071 = vmatpush1.msra.mxu0 0.0
    %3072 = vmatprep.subr.mxu0 0.0
    %3073 = vmatpush1.msra.mxu0 0.0
    %3074 = vmatprep.subr.mxu0 0.0
    %3075 = vmatpush1.msra.mxu0 0.0
    %3076 = vmatprep.subr.mxu0 0.0
    %3077 = vmatpush1.msra.mxu0 0.0
    %3078 = vmatprep.subr.mxu0 0.0
    %3079 = vmatpush1.msra.mxu0 0.0
    %3080 = vmatprep.subr.mxu0 0.0
    %3081 = vmatpush1.msra.mxu0 0.0
    %3082 = vmatprep.subr.mxu0 0.0
    %3083 = vmatpush1.msra.mxu0 0.0
    %3084 = vmatprep.subr.mxu0 0.0
    %3085 = vmatpush1.msra.mxu0 0.0
    %3086 = vmatprep.subr.mxu0 0.0
    %3087 = vmatpush1.msra.mxu0 0.0
    %3088 = vmatprep.mubr.f32.mxu0 0.0
    %3089 = vmatmul.mubr.f32.gmra.mrb[0].mxu0 %v3022
    %v3090 = vpop.f32.mrb[0].mxu0
    %v3091 = vadd.f32 0.0, %v3090
    %v3092 = vpop.f32.mrb[0].mxu0
    %3093 = vdwg.mxu0
    %v3094 = vadd.f32 %v3015, %v3091
    %v3095 = vxor.u32 %v3094, 2147483648
    %v3096 = vmul.f32 %v3095, 1.442695
    %v3097 = vpow.pop %v3096
    %v3098 = vadd.f32 %v3097, 1.0
    %v3099 = vrcp.pop %v3098
    %v3100 = vmul.f32 1.0, %v3099
    %v3101 = vtanh.pop %v3094
    %v3102 = vld [vmem:[#allocation5] sm:$0xff]
    %3104 = vrot.lane.b32.xlu0 %v3102, 32
    %v3105 = vpop.permute.xlu0 %3104
    %v3107 = vmul.f32 %v3100, %v3105
    %3109 = vrot.lane.b32.xlu0 %v3101, 64
    %v3110 = vpop.permute.xlu0 %3109
    %v3112 = vmul.f32 %v3100, %v3110
    %3114 = vrot.lane.b32.xlu0 %v3112, 32
    %v3115 = vpop.permute.xlu0 %3114
    %v3117 = vadd.f32 %v3107, %v3115
    %v3118 = vtanh.pop %v3117
    %3120 = vrot.lane.b32.xlu0 %v3118, 64
    %v3121 = vpop.permute.xlu0 %3120
    %v3123 = vmul.f32 %v3100, %v3121
    %3125 = vrot.lane.b32.xlu0 %v3117, 96
    %v3126 = vpop.permute.xlu0 %3125
    %3128 = vst.msk [vmem:[#allocation5] sm:$0xff] %vm286, %v3126
    %3130 = vrot.lane.b32.xlu0 %v3123, 32
    %v3131 = vpop.permute.xlu0 %3130
    %3133 = vst.msk [vmem:[#allocation4] sm:$0xff] %vm286, %v3131
    %v3134 = vld [vmem:[%s897] sm:$0xff]
    %v3135 = vld [vmem:[#allocation4] sm:$0xff]
    %v3136 = vld [vmem:[%s8] sm:$0xff]
    %v3137 = vld [vmem:[%s8 + $0x8] sm:$0xff]
    %v3138 = vld [vmem:[%s8 + $0x10] sm:$0xff]
    %v3139 = vld [vmem:[%s8 + $0x18] sm:$0xff]
    %v3141 = vsel %vm286, %v3135, 0
    %3143 = vmatprep.subr.mxu0 0.0
    %3144 = vmatpush1.msra.mxu0 %v3136
    %3145 = vmatprep.subr.mxu0 0.0
    %3146 = vmatpush1.msra.mxu0 %v3137
    %3147 = vmatprep.subr.mxu0 0.0
    %3148 = vmatpush1.msra.mxu0 %v3138
    %3149 = vmatprep.subr.mxu0 0.0
    %3150 = vmatpush1.msra.mxu0 %v3139
    %3151 = vmatprep.subr.mxu0 0.0
    %3152 = vmatpush1.msra.mxu0 0.0
    %3153 = vmatprep.subr.mxu0 0.0
    %3154 = vmatpush1.msra.mxu0 0.0
    %3155 = vmatprep.subr.mxu0 0.0
    %3156 = vmatpush1.msra.mxu0 0.0
    %3157 = vmatprep.subr.mxu0 0.0
    %3158 = vmatpush1.msra.mxu0 0.0
    %3159 = vmatprep.subr.mxu0 0.0
    %3160 = vmatpush1.msra.mxu0 0.0
    %3161 = vmatprep.subr.mxu0 0.0
    %3162 = vmatpush1.msra.mxu0 0.0
    %3163 = vmatprep.subr.mxu0 0.0
    %3164 = vmatpush1.msra.mxu0 0.0
    %3165 = vmatprep.subr.mxu0 0.0
    %3166 = vmatpush1.msra.mxu0 0.0
    %3167 = vmatprep.subr.mxu0 0.0
    %3168 = vmatpush1.msra.mxu0 0.0
    %3169 = vmatprep.subr.mxu0 0.0
    %3170 = vmatpush1.msra.mxu0 0.0
    %3171 = vmatprep.subr.mxu0 0.0
    %3172 = vmatpush1.msra.mxu0 0.0
    %3173 = vmatprep.subr.mxu0 0.0
    %3174 = vmatpush1.msra.mxu0 0.0
    %3175 = vmatprep.subr.mxu0 0.0
    %3176 = vmatpush1.msra.mxu0 0.0
    %3177 = vmatprep.subr.mxu0 0.0
    %3178 = vmatpush1.msra.mxu0 0.0
    %3179 = vmatprep.subr.mxu0 0.0
    %3180 = vmatpush1.msra.mxu0 0.0
    %3181 = vmatprep.subr.mxu0 0.0
    %3182 = vmatpush1.msra.mxu0 0.0
    %3183 = vmatprep.subr.mxu0 0.0
    %3184 = vmatpush1.msra.mxu0 0.0
    %3185 = vmatprep.subr.mxu0 0.0
    %3186 = vmatpush1.msra.mxu0 0.0
    %3187 = vmatprep.subr.mxu0 0.0
    %3188 = vmatpush1.msra.mxu0 0.0
    %3189 = vmatprep.subr.mxu0 0.0
    %3190 = vmatpush1.msra.mxu0 0.0
    %3191 = vmatprep.subr.mxu0 0.0
    %3192 = vmatpush1.msra.mxu0 0.0
    %3193 = vmatprep.subr.mxu0 0.0
    %3194 = vmatpush1.msra.mxu0 0.0
    %3195 = vmatprep.subr.mxu0 0.0
    %3196 = vmatpush1.msra.mxu0 0.0
    %3197 = vmatprep.subr.mxu0 0.0
    %3198 = vmatpush1.msra.mxu0 0.0
    %3199 = vmatprep.subr.mxu0 0.0
    %3200 = vmatpush1.msra.mxu0 0.0
    %3201 = vmatprep.subr.mxu0 0.0
    %3202 = vmatpush1.msra.mxu0 0.0
    %3203 = vmatprep.subr.mxu0 0.0
    %3204 = vmatpush1.msra.mxu0 0.0
    %3205 = vmatprep.subr.mxu0 0.0
    %3206 = vmatpush1.msra.mxu0 0.0
    %3207 = vmatprep.mubr.f32.mxu0 0.0
    %3208 = vmatmul.mubr.f32.gmra.mrb[0].mxu0 %v3141
    %v3209 = vpop.f32.mrb[0].mxu0
    %v3210 = vadd.f32 0.0, %v3209
    %v3211 = vpop.f32.mrb[0].mxu0
    %3212 = vdwg.mxu0
    %v3213 = vadd.f32 %v3134, %v3210
    %v3214 = vxor.u32 %v3213, 2147483648
    %v3215 = vmul.f32 %v3214, 1.442695
    %v3216 = vpow.pop %v3215
    %v3217 = vadd.f32 %v3216, 1.0
    %v3218 = vrcp.pop %v3217
    %v3219 = vmul.f32 1.0, %v3218
    %v3220 = vtanh.pop %v3213
    %v3221 = vld [vmem:[#allocation5] sm:$0xff]
    %3223 = vrot.lane.b32.xlu0 %v3221, 32
    %v3224 = vpop.permute.xlu0 %3223
    %v3226 = vmul.f32 %v3219, %v3224
    %3228 = vrot.lane.b32.xlu0 %v3220, 64
    %v3229 = vpop.permute.xlu0 %3228
    %v3231 = vmul.f32 %v3219, %v3229
    %3233 = vrot.lane.b32.xlu0 %v3231, 32
    %v3234 = vpop.permute.xlu0 %3233
    %v3236 = vadd.f32 %v3226, %v3234
    %v3237 = vtanh.pop %v3236
    %3239 = vrot.lane.b32.xlu0 %v3237, 64
    %v3240 = vpop.permute.xlu0 %3239
    %v3242 = vmul.f32 %v3219, %v3240
    %3244 = vrot.lane.b32.xlu0 %v3236, 96
    %v3245 = vpop.permute.xlu0 %3244
    %3247 = vst.msk [vmem:[#allocation5] sm:$0xff] %vm286, %v3245
    %3249 = vrot.lane.b32.xlu0 %v3242, 32
    %v3250 = vpop.permute.xlu0 %3249
    %3252 = vst.msk [vmem:[#allocation4] sm:$0xff] %vm286, %v3250
    %v3253 = vld [vmem:[%s1019] sm:$0xff]
    %v3254 = vld [vmem:[#allocation4] sm:$0xff]
    %v3255 = vld [vmem:[%s8] sm:$0xff]
    %v3256 = vld [vmem:[%s8 + $0x8] sm:$0xff]
    %v3257 = vld [vmem:[%s8 + $0x10] sm:$0xff]
    %v3258 = vld [vmem:[%s8 + $0x18] sm:$0xff]
    %v3260 = vsel %vm286, %v3254, 0
    %3262 = vmatprep.subr.mxu0 0.0
    %3263 = vmatpush1.msra.mxu0 %v3255
    %3264 = vmatprep.subr.mxu0 0.0
    %3265 = vmatpush1.msra.mxu0 %v3256
    %3266 = vmatprep.subr.mxu0 0.0
    %3267 = vmatpush1.msra.mxu0 %v3257
    %3268 = vmatprep.subr.mxu0 0.0
    %3269 = vmatpush1.msra.mxu0 %v3258
    %3270 = vmatprep.subr.mxu0 0.0
    %3271 = vmatpush1.msra.mxu0 0.0
    %3272 = vmatprep.subr.mxu0 0.0
    %3273 = vmatpush1.msra.mxu0 0.0
    %3274 = vmatprep.subr.mxu0 0.0
    %3275 = vmatpush1.msra.mxu0 0.0
    %3276 = vmatprep.subr.mxu0 0.0
    %3277 = vmatpush1.msra.mxu0 0.0
    %3278 = vmatprep.subr.mxu0 0.0
    %3279 = vmatpush1.msra.mxu0 0.0
    %3280 = vmatprep.subr.mxu0 0.0
    %3281 = vmatpush1.msra.mxu0 0.0
    %3282 = vmatprep.subr.mxu0 0.0
    %3283 = vmatpush1.msra.mxu0 0.0
    %3284 = vmatprep.subr.mxu0 0.0
    %3285 = vmatpush1.msra.mxu0 0.0
    %3286 = vmatprep.subr.mxu0 0.0
    %3287 = vmatpush1.msra.mxu0 0.0
    %3288 = vmatprep.subr.mxu0 0.0
    %3289 = vmatpush1.msra.mxu0 0.0
    %3290 = vmatprep.subr.mxu0 0.0
    %3291 = vmatpush1.msra.mxu0 0.0
    %3292 = vmatprep.subr.mxu0 0.0
    %3293 = vmatpush1.msra.mxu0 0.0
    %3294 = vmatprep.subr.mxu0 0.0
    %3295 = vmatpush1.msra.mxu0 0.0
    %3296 = vmatprep.subr.mxu0 0.0
    %3297 = vmatpush1.msra.mxu0 0.0
    %3298 = vmatprep.subr.mxu0 0.0
    %3299 = vmatpush1.msra.mxu0 0.0
    %3300 = vmatprep.subr.mxu0 0.0
    %3301 = vmatpush1.msra.mxu0 0.0
    %3302 = vmatprep.subr.mxu0 0.0
    %3303 = vmatpush1.msra.mxu0 0.0
    %3304 = vmatprep.subr.mxu0 0.0
    %3305 = vmatpush1.msra.mxu0 0.0
    %3306 = vmatprep.subr.mxu0 0.0
    %3307 = vmatpush1.msra.mxu0 0.0
    %3308 = vmatprep.subr.mxu0 0.0
    %3309 = vmatpush1.msra.mxu0 0.0
    %3310 = vmatprep.subr.mxu0 0.0
    %3311 = vmatpush1.msra.mxu0 0.0
    %3312 = vmatprep.subr.mxu0 0.0
    %3313 = vmatpush1.msra.mxu0 0.0
    %3314 = vmatprep.subr.mxu0 0.0
    %3315 = vmatpush1.msra.mxu0 0.0
    %3316 = vmatprep.subr.mxu0 0.0
    %3317 = vmatpush1.msra.mxu0 0.0
    %3318 = vmatprep.subr.mxu0 0.0
    %3319 = vmatpush1.msra.mxu0 0.0
    %3320 = vmatprep.subr.mxu0 0.0
    %3321 = vmatpush1.msra.mxu0 0.0
    %3322 = vmatprep.subr.mxu0 0.0
    %3323 = vmatpush1.msra.mxu0 0.0
    %3324 = vmatprep.subr.mxu0 0.0
    %3325 = vmatpush1.msra.mxu0 0.0
    %3326 = vmatprep.mubr.f32.mxu0 0.0
    %3327 = vmatmul.mubr.f32.gmra.mrb[0].mxu0 %v3260
    %v3328 = vpop.f32.mrb[0].mxu0
    %v3329 = vadd.f32 0.0, %v3328
    %v3330 = vpop.f32.mrb[0].mxu0
    %3331 = vdwg.mxu0
    %v3332 = vadd.f32 %v3253, %v3329
    %v3333 = vxor.u32 %v3332, 2147483648
    %v3334 = vmul.f32 %v3333, 1.442695
    %v3335 = vpow.pop %v3334
    %v3336 = vadd.f32 %v3335, 1.0
    %v3337 = vrcp.pop %v3336
    %v3338 = vmul.f32 1.0, %v3337
    %v3339 = vtanh.pop %v3332
    %v3340 = vld [vmem:[#allocation5] sm:$0xff]
    %3342 = vrot.lane.b32.xlu0 %v3340, 32
    %v3343 = vpop.permute.xlu0 %3342
    %v3345 = vmul.f32 %v3338, %v3343
    %3347 = vrot.lane.b32.xlu0 %v3339, 64
    %v3348 = vpop.permute.xlu0 %3347
    %v3350 = vmul.f32 %v3338, %v3348
    %3352 = vrot.lane.b32.xlu0 %v3350, 32
    %v3353 = vpop.permute.xlu0 %3352
    %v3355 = vadd.f32 %v3345, %v3353
    %v3356 = vtanh.pop %v3355
    %3358 = vrot.lane.b32.xlu0 %v3356, 64
    %v3359 = vpop.permute.xlu0 %3358
    %v3361 = vmul.f32 %v3338, %v3359
    %3363 = vrot.lane.b32.xlu0 %v3355, 96
    %v3364 = vpop.permute.xlu0 %3363
    %3366 = vst.msk [vmem:[#allocation5] sm:$0xff] %vm286, %v3364
    %3368 = vrot.lane.b32.xlu0 %v3361, 32
    %v3369 = vpop.permute.xlu0 %3368
    %3371 = vst.msk [vmem:[#allocation4] sm:$0xff] %vm286, %v3369
    %v3372 = vld [vmem:[%s1141] sm:$0xff]
    %v3373 = vld [vmem:[#allocation4] sm:$0xff]
    %v3374 = vld [vmem:[%s8] sm:$0xff]
    %v3375 = vld [vmem:[%s8 + $0x8] sm:$0xff]
    %v3376 = vld [vmem:[%s8 + $0x10] sm:$0xff]
    %v3377 = vld [vmem:[%s8 + $0x18] sm:$0xff]
    %v3379 = vsel %vm286, %v3373, 0
    %3381 = vmatprep.subr.mxu0 0.0
    %3382 = vmatpush1.msra.mxu0 %v3374
    %3383 = vmatprep.subr.mxu0 0.0
    %3384 = vmatpush1.msra.mxu0 %v3375
    %3385 = vmatprep.subr.mxu0 0.0
    %3386 = vmatpush1.msra.mxu0 %v3376
    %3387 = vmatprep.subr.mxu0 0.0
    %3388 = vmatpush1.msra.mxu0 %v3377
    %3389 = vmatprep.subr.mxu0 0.0
    %3390 = vmatpush1.msra.mxu0 0.0
    %3391 = vmatprep.subr.mxu0 0.0
    %3392 = vmatpush1.msra.mxu0 0.0
    %3393 = vmatprep.subr.mxu0 0.0
    %3394 = vmatpush1.msra.mxu0 0.0
    %3395 = vmatprep.subr.mxu0 0.0
    %3396 = vmatpush1.msra.mxu0 0.0
    %3397 = vmatprep.subr.mxu0 0.0
    %3398 = vmatpush1.msra.mxu0 0.0
    %3399 = vmatprep.subr.mxu0 0.0
    %3400 = vmatpush1.msra.mxu0 0.0
    %3401 = vmatprep.subr.mxu0 0.0
    %3402 = vmatpush1.msra.mxu0 0.0
    %3403 = vmatprep.subr.mxu0 0.0
    %3404 = vmatpush1.msra.mxu0 0.0
    %3405 = vmatprep.subr.mxu0 0.0
    %3406 = vmatpush1.msra.mxu0 0.0
    %3407 = vmatprep.subr.mxu0 0.0
    %3408 = vmatpush1.msra.mxu0 0.0
    %3409 = vmatprep.subr.mxu0 0.0
    %3410 = vmatpush1.msra.mxu0 0.0
    %3411 = vmatprep.subr.mxu0 0.0
    %3412 = vmatpush1.msra.mxu0 0.0
    %3413 = vmatprep.subr.mxu0 0.0
    %3414 = vmatpush1.msra.mxu0 0.0
    %3415 = vmatprep.subr.mxu0 0.0
    %3416 = vmatpush1.msra.mxu0 0.0
    %3417 = vmatprep.subr.mxu0 0.0
    %3418 = vmatpush1.msra.mxu0 0.0
    %3419 = vmatprep.subr.mxu0 0.0
    %3420 = vmatpush1.msra.mxu0 0.0
    %3421 = vmatprep.subr.mxu0 0.0
    %3422 = vmatpush1.msra.mxu0 0.0
    %3423 = vmatprep.subr.mxu0 0.0
    %3424 = vmatpush1.msra.mxu0 0.0
    %3425 = vmatprep.subr.mxu0 0.0
    %3426 = vmatpush1.msra.mxu0 0.0
    %3427 = vmatprep.subr.mxu0 0.0
    %3428 = vmatpush1.msra.mxu0 0.0
    %3429 = vmatprep.subr.mxu0 0.0
    %3430 = vmatpush1.msra.mxu0 0.0
    %3431 = vmatprep.subr.mxu0 0.0
    %3432 = vmatpush1.msra.mxu0 0.0
    %3433 = vmatprep.subr.mxu0 0.0
    %3434 = vmatpush1.msra.mxu0 0.0
    %3435 = vmatprep.subr.mxu0 0.0
    %3436 = vmatpush1.msra.mxu0 0.0
    %3437 = vmatprep.subr.mxu0 0.0
    %3438 = vmatpush1.msra.mxu0 0.0
    %3439 = vmatprep.subr.mxu0 0.0
    %3440 = vmatpush1.msra.mxu0 0.0
    %3441 = vmatprep.subr.mxu0 0.0
    %3442 = vmatpush1.msra.mxu0 0.0
    %3443 = vmatprep.subr.mxu0 0.0
    %3444 = vmatpush1.msra.mxu0 0.0
    %3445 = vmatprep.mubr.f32.mxu0 0.0
    %3446 = vmatmul.mubr.f32.gmra.mrb[0].mxu0 %v3379
    %v3447 = vpop.f32.mrb[0].mxu0
    %v3448 = vadd.f32 0.0, %v3447
    %v3449 = vpop.f32.mrb[0].mxu0
    %3450 = vdwg.mxu0
    %v3451 = vadd.f32 %v3372, %v3448
    %v3452 = vxor.u32 %v3451, 2147483648
    %v3453 = vmul.f32 %v3452, 1.442695
    %v3454 = vpow.pop %v3453
    %v3455 = vadd.f32 %v3454, 1.0
    %v3456 = vrcp.pop %v3455
    %v3457 = vmul.f32 1.0, %v3456
    %v3458 = vtanh.pop %v3451
    %v3459 = vld [vmem:[#allocation5] sm:$0xff]
    %3461 = vrot.lane.b32.xlu0 %v3459, 32
    %v3462 = vpop.permute.xlu0 %3461
    %v3464 = vmul.f32 %v3457, %v3462
    %3466 = vrot.lane.b32.xlu0 %v3458, 64
    %v3467 = vpop.permute.xlu0 %3466
    %v3469 = vmul.f32 %v3457, %v3467
    %3471 = vrot.lane.b32.xlu0 %v3469, 32
    %v3472 = vpop.permute.xlu0 %3471
    %v3474 = vadd.f32 %v3464, %v3472
    %v3475 = vtanh.pop %v3474
    %3477 = vrot.lane.b32.xlu0 %v3475, 64
    %v3478 = vpop.permute.xlu0 %3477
    %v3480 = vmul.f32 %v3457, %v3478
    %3482 = vrot.lane.b32.xlu0 %v3474, 96
    %v3483 = vpop.permute.xlu0 %3482
    %3485 = vst.msk [vmem:[#allocation5] sm:$0xff] %vm286, %v3483
    %3487 = vrot.lane.b32.xlu0 %v3480, 32
    %v3488 = vpop.permute.xlu0 %3487
    %3490 = vst.msk [vmem:[#allocation4] sm:$0xff] %vm286, %v3488
    %v3491 = vld [vmem:[#allocation4] sm:$0xff]
    %v3492 = vsel %vm286, %v3491, 0.0
    %3493 = vadd.xlane.f32.xlu0 %v3492
    %v3494 = vpop.xlane.xlu0 %3493
    %v3495 = vrcp.pop 32.0
    %v3496 = vmul.f32 %v3494, %v3495
    %v3497 = vsub.f32 %v3491, %v3496
    %v3498 = vmul.f32 %v3497, %v3497
    %v3499 = vsel %vm286, %v3498, 0.0
    %3500 = vadd.xlane.f32.xlu0 %v3499
    %v3501 = vpop.xlane.xlu0 %3500
    %v3502 = vmul.f32 %v3501, %v3495
    %v3503 = vadd.f32 %v3502, 1e-05
    %v3504 = vrsqrt.pop %v3503
    %v3505 = vmul.f32 %v3497, %v3504
    %v3506 = vld [vmem:[%s10] sm:$0x1]
    %v3508 = vlaneseq
    %v3509 = vshrl.u32 %v3508, 7
    %v3510 = vsub.s32 0, %v3509
    %v3511 = vrot.slane %v3506, %v3510
    %v3513 = vmul.f32 %v3505, %v3511
    %v3514 = vld [vmem:[%s11] sm:$0x1]
    %v3516 = vlaneseq
    %v3517 = vshrl.u32 %v3516, 7
    %v3518 = vsub.s32 0, %v3517
    %v3519 = vrot.slane %v3514, %v3518
    %v3521 = vadd.f32 %v3513, %v3519
    %v3522 = vld [vmem:[%s12] sm:$0x1]
    %v3524 = vlaneseq
    %v3525 = vshrl.u32 %v3524, 7
    %v3526 = vsub.s32 0, %v3525
    %v3527 = vrot.slane %v3522, %v3526
    %v3529 = vmul.f32 %v3521, %v3527
    %v3530 = vsel %vm286, %v3529, 0.0
    %3531 = vadd.xlane.f32.xlu0 %v3530
    %v3532 = vpop.xlane.xlu0 %3531
    %v3533 = vld [vmem:[#allocation6] sm:$0x1]
    %v3535 = vlaneseq
    %v3536 = vshrl.u32 %v3535, 7
    %v3537 = vsub.s32 0, %v3536
    %v3538 = vrot.slane %v3533, %v3537
    %v3540 = vadd.f32 %v3532, %v3538
    %vm3541 = vcmask 7168
    %3542 = vst.msk [vmem:[%s14] sm:$0xff] %vm3541, %v3540
    // Predicated region
    $region82: #{tpu_custom_call.1} parent=1 // pred_check
      _
    $region83: #{tpu_custom_call.1} parent=1 // pred_check_branch
      %3544 = sbr.rel (0) target = $region85
    $region84: #{tpu_custom_call.1} parent=1 // pred_region
      _
    $region85: #{tpu_custom_call.1} parent=1 // pred_fallthru
      _
    // Predicated region
    $region86: #{tpu_custom_call.1} parent=1 // pred_check
      _
    $region87: #{tpu_custom_call.1} parent=1 // pred_check_branch
      %3546 = sbr.rel (0) target = $region89
    $region88: #{tpu_custom_call.1} parent=1 // pred_region
      _
    $region89: #{tpu_custom_call.1} parent=1 // pred_fallthru
      _
    %3547 = vsyncpa [#allocation8], 1
    %3548 = vsyncpa [#allocation10], 1
    %3549 = vsyncpa [#allocation13], 1
    %3550 = vsyncpa [#allocation16], 1

</llo_original>
